<compile_context>
chip_gen: v6e
topology: v6e:2x2x1
jax: 0.10.0
libtpu: 0.0.40
codegen_flags: <defaults>
</compile_context>

<pallas_src>
import functools

import jax
import jax.numpy as jnp
from jax import lax
from jax.experimental import pallas as pl
from jax.experimental.pallas import tpu as pltpu


# ----------------------------------------------------------------------------
# Fused Pallas kernel
# ----------------------------------------------------------------------------
def _make_fused_kernel(T, Bp, H, num_layers):
    GP = 2 * H      # per-gate-group width: [fwd | rev]
    GW = 4 * GP     # total gate width, group order i | f | o | g

    def kernel(*refs):
        # refs = x, emb_w, emb_b, (wih, b, whh_blk) * L, cls_w, cls_b,
        #        out, hid_scratch
        x_ref, emb_w_ref, emb_b_ref = refs[0], refs[1], refs[2]
        layer_refs = refs[3:3 + 3 * num_layers]
        cls_w_ref = refs[3 + 3 * num_layers]
        cls_b_ref = refs[4 + 3 * num_layers]
        out_ref = refs[5 + 3 * num_layers]
        hid_ref = refs[6 + 3 * num_layers]          # (T*Bp, 2H) VMEM scratch

        # Lane mask: within each gate group, lanes [0:H) are fwd, [H:2H) rev.
        col = lax.broadcasted_iota(jnp.int32, (T * Bp, GW), 1)
        fwd_cols = (col % GP) < H

        # input_embedding: one lane-dense GEMM over all T*Bp rows.
        acts = (jnp.dot(x_ref[...], emb_w_ref[...],
                        preferred_element_type=jnp.float32) + emb_b_ref[...])

        h = None
        for l in range(num_layers):
            wih_ref = layer_refs[3 * l + 0]         # (D_in, GW)
            b_ref = layer_refs[3 * l + 1]           # (1,    GW)  b_ih + b_hh
            whh_ref = layer_refs[3 * l + 2]         # (2H,   GW)  block-diag

            src = acts if l == 0 else hid_ref[...]
            # Hoisted input projection (both directions, one GEMM per layer).
            xg = (jnp.dot(src, wih_ref[...],
                          preferred_element_type=jnp.float32) + b_ref[...])
            # Row-block-reversed copy, then one select builds the per-step
            # gate-input table: step s reads fwd gates of input time s and
            # rev gates of input time T-1-s.  All off the recurrent chain.
            xg_rev = jnp.concatenate(
                [xg[(T - 1 - t) * Bp:(T - t) * Bp, :] for t in range(T)],
                axis=0)
            xc_all = jnp.where(fwd_cols, xg, xg_rev)            # (T*Bp, GW)
            whh_blk = whh_ref[...]

            h = jnp.zeros((Bp, 2 * H), jnp.float32)             # [h_f | h_r]
            c = jnp.zeros((Bp, 2 * H), jnp.float32)
            last = (l == num_layers - 1)

            # Fully-unrolled recurrence: per step one (Bp,2H)x(2H,GW) MXU dot
            # plus one fused cell over the full (Bp, GW) gate block.
            for s in range(T):
                rec = jnp.dot(h, whh_blk, preferred_element_type=jnp.float32)
                gates = rec + xc_all[s * Bp:(s + 1) * Bp, :]
                sig = jax.nn.sigmoid(gates[:, 0:3 * GP])        # i | f | o
                g_g = jnp.tanh(gates[:, 3 * GP:4 * GP])         # g
                c = sig[:, GP:2 * GP] * c + sig[:, 0:GP] * g_g
                h = sig[:, 2 * GP:3 * GP] * jnp.tanh(c)
                if not last:
                    # Layer output, time-aligned for the next layer:
                    # fwd hidden of time s, rev hidden of time T-1-s.
                    hid_ref[s * Bp:(s + 1) * Bp, 0:H] = h[:, 0:H]
                    hid_ref[(T - 1 - s) * Bp:(T - s) * Bp, H:2 * H] = h[:, H:2 * H]

        # Final h == [output[:, -1, :H] | output[:, 0, H:]] (fwd/rev finals).
        logits = (jnp.dot(h, cls_w_ref[...],
                          preferred_element_type=jnp.float32) + cls_b_ref[...])
        m = jnp.max(logits, axis=-1, keepdims=True)
        e = jnp.exp(logits - m)
        out_ref[...] = (e / jnp.sum(e, axis=-1, keepdims=True)).astype(out_ref.dtype)

    return kernel


# ----------------------------------------------------------------------------
# RNNBaseline forward (single pallas_call, no grid)
# ----------------------------------------------------------------------------
def rnn_baseline_forward(x, params, config):
    B, T, S = x.shape
    H = config["value_size"]
    L = config["num_encoders"]
    C = config["num_classes"]
    GP = 2 * H
    GW = 4 * GP
    Bp = ((B + 7) // 8) * 8      # pad batch rows to whole sublane tiles

    # Repack a layer host-side: PyTorch gate order i|f|g|o per direction
    # -> gate groups [i | f | o | g] (sigmoid gates contiguous), each group
    # interleaved [fwd | rev].  whh becomes block-diagonal so one MXU dot
    # computes both directions' recurrent contributions.
    order = (0, 1, 3, 2)  # i, f, o, g

    def pack_layer(layer):
        pf, pr = layer["fwd"], layer["rev"]
        wih_cols, b_cols = [], []
        whh_blk = jnp.zeros((2 * H, GW), jnp.float32)
        for k, g in enumerate(order):
            sl = slice(g * H, (g + 1) * H)
            wih_cols += [pf["wih"][:, sl], pr["wih"][:, sl]]
            b_cols += [pf["b"][:, sl], pr["b"][:, sl]]
            whh_blk = whh_blk.at[0:H, k * GP:k * GP + H].set(pf["whh"][:, sl])
            whh_blk = whh_blk.at[H:2 * H, k * GP + H:(k + 1) * GP].set(pr["whh"][:, sl])
        return (jnp.concatenate(wih_cols, axis=-1),     # (D_in, GW)
                jnp.concatenate(b_cols, axis=-1),       # (1,    GW)
                whh_blk)                                 # (2H,   GW)

    layer_args = []
    for l in range(L):
        layer_args.extend(pack_layer(params["lstm"][l]))

    # Time-major rows padded to Bp sublanes (row = t*Bp + b, b < B real).
    x_tm = jnp.transpose(x, (1, 0, 2))                               # (T, B, S)
    x_tm = jnp.pad(x_tm, ((0, 0), (0, Bp - B), (0, 0))).reshape(T * Bp, S)

    operands = (x_tm, params["emb_w"], params["emb_b"], *layer_args,
                params["cls_w"], params["cls_b"])

    out_padded = pl.pallas_call(
        _make_fused_kernel(T, Bp, H, L),
        out_shape=jax.ShapeDtypeStruct((Bp, C), jnp.float32),
        in_specs=[pl.BlockSpec(memory_space=pltpu.MemorySpace.VMEM)
                  for _ in operands],
        out_specs=pl.BlockSpec(memory_space=pltpu.MemorySpace.VMEM),
        scratch_shapes=[pltpu.VMEM((T * Bp, 2 * H), jnp.float32)],
    )(*operands)
    return out_padded[:B]


# ----------------------------------------------------------------------------
# Pure-JAX reference (for correctness check)
# ----------------------------------------------------------------------------
def _lstm_dir_ref(x_tm, wih, whh, b):
    T, B, _ = x_tm.shape
    H = whh.shape[0]
    h = jnp.zeros((B, H), jnp.float32)
    c = jnp.zeros((B, H), jnp.float32)
    outs = []
    for t in range(T):
        g = x_tm[t] @ wih + h @ whh + b
        i_g = jax.nn.sigmoid(g[:, 0:H])
        f_g = jax.nn.sigmoid(g[:, H:2 * H])
        g_g = jnp.tanh(g[:, 2 * H:3 * H])
        o_g = jax.nn.sigmoid(g[:, 3 * H:4 * H])
        c = f_g * c + i_g * g_g
        h = o_g * jnp.tanh(c)
        outs.append(h)
    return jnp.stack(outs, axis=0)


def _forward_ref(x, params, config):
    B, T, S = x.shape
    H = config["value_size"]
    emb = (x.reshape(B * T, S) @ params["emb_w"] + params["emb_b"]).reshape(B, T, -1)
    layer_in = jnp.transpose(emb, (1, 0, 2))
    for l in range(config["num_encoders"]):
        pf = params["lstm"][l]["fwd"]
        pr = params["lstm"][l]["rev"]
        fwd = _lstm_dir_ref(layer_in, pf["wih"], pf["whh"], pf["b"])
        rev = jnp.flip(_lstm_dir_ref(jnp.flip(layer_in, 0),
                                     pr["wih"], pr["whh"], pr["b"]), 0)
        layer_in = jnp.concatenate([fwd, rev], axis=-1)
    feat = jnp.concatenate([layer_in[-1, :, :H], layer_in[0, :, H:]], axis=-1)
    logits = feat @ params["cls_w"] + params["cls_b"]
    return jax.nn.softmax(logits, axis=1)


# ----------------------------------------------------------------------------
# Deterministic parameter construction (PyTorch layout, gate order i|f|g|o)
# ----------------------------------------------------------------------------
def make_params(key, config):
    S = config["state_size"]
    M = config["model_size"]
    H = config["value_size"]
    C = config["num_classes"]
    L = config["num_encoders"]

    def uni(k, shape, fan):
        bound = 1.0 / jnp.sqrt(fan)
        return jax.random.uniform(k, shape, jnp.float32, -bound, bound)

    keys = jax.random.split(key, 4 + 8 * L)
    ki = iter(keys)

    params = {
        "emb_w": uni(next(ki), (S, M), S),
        "emb_b": uni(next(ki), (1, M), S),
        "cls_w": uni(next(ki), (2 * H, C), 2 * H),
        "cls_b": uni(next(ki), (1, C), 2 * H),
        "lstm": [],
    }
    for l in range(L):
        d_in = M if l == 0 else 2 * H
        layer = {}
        for direction in ("fwd", "rev"):
            wih = uni(next(ki), (d_in, 4 * H), H)
            whh = uni(next(ki), (H, 4 * H), H)
            # PyTorch has b_ih and b_hh; they only ever appear summed.
            b = uni(next(ki), (1, 4 * H), H) + uni(next(ki), (1, 4 * H), H)
            layer[direction] = {"wih": wih, "whh": whh, "b": b}
        params["lstm"].append(layer)
    return params


# ----------------------------------------------------------------------------
# main
# ----------------------------------------------------------------------------
if __name__ == "__main__":
    config = {
        "state_size": 16,
        "model_size": 32,
        "num_encoders": 2,
        "num_classes": 8,
        "value_size": 32,  # LSTM hidden size
    }
    B, T = 2, 8

    key = jax.random.PRNGKey(0)
    k_x, k_p = jax.random.split(key)
    x = jax.random.normal(k_x, (B, T, config["state_size"]), jnp.float32)
    params = make_params(k_p, config)

    fwd = functools.partial(rnn_baseline_forward, config=config)
    out = jax.block_until_ready(jax.jit(fwd)(x, params))

    ref = jax.block_until_ready(_forward_ref(x, params, config))
    assert out.shape == (B, config["num_classes"])
    assert jnp.allclose(jnp.sum(out, axis=1), 1.0, atol=1e-5)
    assert jnp.allclose(out, ref, atol=1e-4, rtol=1e-4)

    print("KERNEL_OK")
</pallas_src>

<mosaic_0001>
module attributes {stable_mosaic.version = 11 : i64} {
  func.func @kernel(%arg0: memref<64x16xf32, #tpu.memory_space<vmem>>, %arg1: memref<16x32xf32, #tpu.memory_space<vmem>>, %arg2: memref<1x32xf32, #tpu.memory_space<vmem>>, %arg3: memref<32x256xf32, #tpu.memory_space<vmem>>, %arg4: memref<1x256xf32, #tpu.memory_space<vmem>>, %arg5: memref<64x256xf32, #tpu.memory_space<vmem>>, %arg6: memref<64x256xf32, #tpu.memory_space<vmem>>, %arg7: memref<1x256xf32, #tpu.memory_space<vmem>>, %arg8: memref<64x256xf32, #tpu.memory_space<vmem>>, %arg9: memref<64x8xf32, #tpu.memory_space<vmem>>, %arg10: memref<1x8xf32, #tpu.memory_space<vmem>>, %arg11: memref<8x8xf32, #tpu.memory_space<vmem>>, %arg12: memref<64x64xf32, #tpu.memory_space<vmem>>) attributes {dimension_semantics = [], scalar_prefetch = 0 : i64, scratch_operands = 1 : i64, tpu.core_type = #tpu.core_type<tc>} {
    %0 = tpu.iota {dimensions = array<i32: 1>} : vector<64x256xi32>
    %c64_i32 = arith.constant 64 : i32
    %c0_i32 = arith.constant 0 : i32
    %1 = arith.cmpi eq, %c64_i32, %c0_i32 : i32
    %c1_i32 = arith.constant 1 : i32
    %2 = arith.select %1, %c1_i32, %c64_i32 : i32
    %3 = vector.broadcast %2 : i32 to vector<64x256xi32>
    %4 = arith.remsi %0, %3 : vector<64x256xi32>
    %c0_i32_0 = arith.constant 0 : i32
    %5 = vector.broadcast %c0_i32_0 : i32 to vector<64x256xi32>
    %6 = arith.cmpi ne, %4, %5 : vector<64x256xi32>
    %c0_i32_1 = arith.constant 0 : i32
    %7 = vector.broadcast %c0_i32_1 : i32 to vector<64x256xi32>
    %8 = arith.cmpi slt, %4, %7 : vector<64x256xi32>
    %c0_i32_2 = arith.constant 0 : i32
    %9 = arith.cmpi slt, %2, %c0_i32_2 : i32
    %10 = vector.broadcast %9 : i1 to vector<64x256xi1>
    %11 = vector.broadcast %10 : vector<64x256xi1> to vector<64x256xi1>
    %12 = arith.xori %8, %11 : vector<64x256xi1>
    %13 = arith.andi %12, %6 : vector<64x256xi1>
    %14 = vector.broadcast %2 : i32 to vector<64x256xi32>
    %15 = arith.addi %4, %14 : vector<64x256xi32>
    %16 = arith.select %13, %15, %4 : vector<64x256xi1>, vector<64x256xi32>
    %c32_i32 = arith.constant 32 : i32
    %17 = vector.broadcast %c32_i32 : i32 to vector<64x256xi32>
    %18 = arith.cmpi slt, %16, %17 : vector<64x256xi32>
    %c0 = arith.constant 0 : index
    %c0_3 = arith.constant 0 : index
    %19 = vector.load %arg0[%c0, %c0_3] : memref<64x16xf32, #tpu.memory_space<vmem>>, vector<64x16xf32>
    %c0_4 = arith.constant 0 : index
    %c0_5 = arith.constant 0 : index
    %20 = vector.load %arg1[%c0_4, %c0_5] : memref<16x32xf32, #tpu.memory_space<vmem>>, vector<16x32xf32>
    %cst = arith.constant dense<0.000000e+00> : vector<64x32xf32>
    %21 = tpu.matmul %19, %20, %cst {dimension_numbers = #tpu.dot_dimension_numbers<[1], [0], [0], [1], [0, 0, 1, 1], [], []>} : vector<64x16xf32>, vector<16x32xf32>, vector<64x32xf32> -> vector<64x32xf32>
    %c0_6 = arith.constant 0 : index
    %c0_7 = arith.constant 0 : index
    %22 = vector.load %arg2[%c0_6, %c0_7] : memref<1x32xf32, #tpu.memory_space<vmem>>, vector<1x32xf32>
    %23 = vector.broadcast %22 : vector<1x32xf32> to vector<64x32xf32>
    %24 = arith.addf %21, %23 : vector<64x32xf32>
    %c0_8 = arith.constant 0 : index
    %c0_9 = arith.constant 0 : index
    %25 = vector.load %arg3[%c0_8, %c0_9] : memref<32x256xf32, #tpu.memory_space<vmem>>, vector<32x256xf32>
    %cst_10 = arith.constant dense<0.000000e+00> : vector<64x256xf32>
    %26 = tpu.matmul %24, %25, %cst_10 {dimension_numbers = #tpu.dot_dimension_numbers<[1], [0], [0], [1], [0, 0, 1, 1], [], []>} : vector<64x32xf32>, vector<32x256xf32>, vector<64x256xf32> -> vector<64x256xf32>
    %c0_11 = arith.constant 0 : index
    %c0_12 = arith.constant 0 : index
    %27 = vector.load %arg4[%c0_11, %c0_12] : memref<1x256xf32, #tpu.memory_space<vmem>>, vector<1x256xf32>
    %28 = vector.broadcast %27 : vector<1x256xf32> to vector<64x256xf32>
    %29 = arith.addf %26, %28 : vector<64x256xf32>
    %30 = vector.extract_strided_slice %29 {offsets = [56, 0], sizes = [8, 256], strides = [1, 1]} : vector<64x256xf32> to vector<8x256xf32>
    %31 = vector.extract_strided_slice %29 {offsets = [48, 0], sizes = [8, 256], strides = [1, 1]} : vector<64x256xf32> to vector<8x256xf32>
    %32 = vector.extract_strided_slice %29 {offsets = [40, 0], sizes = [8, 256], strides = [1, 1]} : vector<64x256xf32> to vector<8x256xf32>
    %33 = vector.extract_strided_slice %29 {offsets = [32, 0], sizes = [8, 256], strides = [1, 1]} : vector<64x256xf32> to vector<8x256xf32>
    %34 = vector.extract_strided_slice %29 {offsets = [24, 0], sizes = [8, 256], strides = [1, 1]} : vector<64x256xf32> to vector<8x256xf32>
    %35 = vector.extract_strided_slice %29 {offsets = [16, 0], sizes = [8, 256], strides = [1, 1]} : vector<64x256xf32> to vector<8x256xf32>
    %36 = vector.extract_strided_slice %29 {offsets = [8, 0], sizes = [8, 256], strides = [1, 1]} : vector<64x256xf32> to vector<8x256xf32>
    %37 = vector.extract_strided_slice %29 {offsets = [0, 0], sizes = [8, 256], strides = [1, 1]} : vector<64x256xf32> to vector<8x256xf32>
    %38 = tpu.concatenate %30, %31, %32, %33, %34, %35, %36, %37 in 0 : vector<8x256xf32>, vector<8x256xf32>, vector<8x256xf32>, vector<8x256xf32>, vector<8x256xf32>, vector<8x256xf32>, vector<8x256xf32>, vector<8x256xf32> -> vector<64x256xf32>
    %39 = arith.select %18, %29, %38 : vector<64x256xi1>, vector<64x256xf32>
    %c0_13 = arith.constant 0 : index
    %c0_14 = arith.constant 0 : index
    %40 = vector.load %arg5[%c0_13, %c0_14] : memref<64x256xf32, #tpu.memory_space<vmem>>, vector<64x256xf32>
    %cst_15 = arith.constant 0.000000e+00 : f32
    %41 = vector.broadcast %cst_15 : f32 to vector<8x64xf32>
    %cst_16 = arith.constant 0.000000e+00 : f32
    %42 = vector.broadcast %cst_16 : f32 to vector<8x64xf32>
    %cst_17 = arith.constant dense<0.000000e+00> : vector<8x256xf32>
    %43 = tpu.matmul %41, %40, %cst_17 {dimension_numbers = #tpu.dot_dimension_numbers<[1], [0], [0], [1], [0, 0, 1, 1], [], []>} : vector<8x64xf32>, vector<64x256xf32>, vector<8x256xf32> -> vector<8x256xf32>
    %44 = vector.extract_strided_slice %39 {offsets = [0, 0], sizes = [8, 256], strides = [1, 1]} : vector<64x256xf32> to vector<8x256xf32>
    %45 = arith.addf %43, %44 : vector<8x256xf32>
    %46 = vector.extract_strided_slice %45 {offsets = [0, 0], sizes = [8, 192], strides = [1, 1]} : vector<8x256xf32> to vector<8x192xf32>
    %47 = arith.negf %46 : vector<8x192xf32>
    %48 = math.exp %47 : vector<8x192xf32>
    %cst_18 = arith.constant 1.000000e+00 : f32
    %49 = vector.broadcast %cst_18 : f32 to vector<8x192xf32>
    %50 = arith.addf %49, %48 : vector<8x192xf32>
    %51 = arith.divf %49, %50 : vector<8x192xf32>
    %52 = vector.extract_strided_slice %45 {offsets = [0, 192], sizes = [8, 64], strides = [1, 1]} : vector<8x256xf32> to vector<8x64xf32>
    %53 = math.tanh %52 : vector<8x64xf32>
    %54 = vector.extract_strided_slice %51 {offsets = [0, 64], sizes = [8, 64], strides = [1, 1]} : vector<8x192xf32> to vector<8x64xf32>
    %55 = arith.mulf %54, %42 : vector<8x64xf32>
    %56 = vector.extract_strided_slice %51 {offsets = [0, 0], sizes = [8, 64], strides = [1, 1]} : vector<8x192xf32> to vector<8x64xf32>
    %57 = arith.mulf %56, %53 : vector<8x64xf32>
    %58 = arith.addf %55, %57 : vector<8x64xf32>
    %59 = vector.extract_strided_slice %51 {offsets = [0, 128], sizes = [8, 64], strides = [1, 1]} : vector<8x192xf32> to vector<8x64xf32>
    %60 = math.tanh %58 : vector<8x64xf32>
    %61 = arith.mulf %59, %60 : vector<8x64xf32>
    %62 = vector.extract_strided_slice %61 {offsets = [0, 0], sizes = [8, 32], strides = [1, 1]} : vector<8x64xf32> to vector<8x32xf32>
    %c0_19 = arith.constant 0 : index
    %c0_20 = arith.constant 0 : index
    %63 = vector.load %arg12[%c0_19, %c0_20] : memref<64x64xf32, #tpu.memory_space<vmem>>, vector<8x32xf32>
    tpu.vector_store %arg12[%c0_19, %c0_20], %62 {strides = array<i32>} : memref<64x64xf32, #tpu.memory_space<vmem>>, vector<8x32xf32>,
    %64 = vector.extract_strided_slice %61 {offsets = [0, 32], sizes = [8, 32], strides = [1, 1]} : vector<8x64xf32> to vector<8x32xf32>
    %c56 = arith.constant 56 : index
    %c32 = arith.constant 32 : index
    %65 = vector.load %arg12[%c56, %c32] : memref<64x64xf32, #tpu.memory_space<vmem>>, vector<8x32xf32>
    tpu.vector_store %arg12[%c56, %c32], %64 {strides = array<i32>} : memref<64x64xf32, #tpu.memory_space<vmem>>, vector<8x32xf32>,
    %cst_21 = arith.constant dense<0.000000e+00> : vector<8x256xf32>
    %66 = tpu.matmul %61, %40, %cst_21 {dimension_numbers = #tpu.dot_dimension_numbers<[1], [0], [0], [1], [0, 0, 1, 1], [], []>} : vector<8x64xf32>, vector<64x256xf32>, vector<8x256xf32> -> vector<8x256xf32>
    %67 = vector.extract_strided_slice %39 {offsets = [8, 0], sizes = [8, 256], strides = [1, 1]} : vector<64x256xf32> to vector<8x256xf32>
    %68 = arith.addf %66, %67 : vector<8x256xf32>
    %69 = vector.extract_strided_slice %68 {offsets = [0, 0], sizes = [8, 192], strides = [1, 1]} : vector<8x256xf32> to vector<8x192xf32>
    %70 = arith.negf %69 : vector<8x192xf32>
    %71 = math.exp %70 : vector<8x192xf32>
    %cst_22 = arith.constant 1.000000e+00 : f32
    %72 = vector.broadcast %cst_22 : f32 to vector<8x192xf32>
    %73 = arith.addf %72, %71 : vector<8x192xf32>
    %74 = arith.divf %72, %73 : vector<8x192xf32>
    %75 = vector.extract_strided_slice %68 {offsets = [0, 192], sizes = [8, 64], strides = [1, 1]} : vector<8x256xf32> to vector<8x64xf32>
    %76 = math.tanh %75 : vector<8x64xf32>
    %77 = vector.extract_strided_slice %74 {offsets = [0, 64], sizes = [8, 64], strides = [1, 1]} : vector<8x192xf32> to vector<8x64xf32>
    %78 = arith.mulf %77, %58 : vector<8x64xf32>
    %79 = vector.extract_strided_slice %74 {offsets = [0, 0], sizes = [8, 64], strides = [1, 1]} : vector<8x192xf32> to vector<8x64xf32>
    %80 = arith.mulf %79, %76 : vector<8x64xf32>
    %81 = arith.addf %78, %80 : vector<8x64xf32>
    %82 = vector.extract_strided_slice %74 {offsets = [0, 128], sizes = [8, 64], strides = [1, 1]} : vector<8x192xf32> to vector<8x64xf32>
    %83 = math.tanh %81 : vector<8x64xf32>
    %84 = arith.mulf %82, %83 : vector<8x64xf32>
    %85 = vector.extract_strided_slice %84 {offsets = [0, 0], sizes = [8, 32], strides = [1, 1]} : vector<8x64xf32> to vector<8x32xf32>
    %c8 = arith.constant 8 : index
    %c0_23 = arith.constant 0 : index
    %86 = vector.load %arg12[%c8, %c0_23] : memref<64x64xf32, #tpu.memory_space<vmem>>, vector<8x32xf32>
    tpu.vector_store %arg12[%c8, %c0_23], %85 {strides = array<i32>} : memref<64x64xf32, #tpu.memory_space<vmem>>, vector<8x32xf32>,
    %87 = vector.extract_strided_slice %84 {offsets = [0, 32], sizes = [8, 32], strides = [1, 1]} : vector<8x64xf32> to vector<8x32xf32>
    %c48 = arith.constant 48 : index
    %c32_24 = arith.constant 32 : index
    %88 = vector.load %arg12[%c48, %c32_24] : memref<64x64xf32, #tpu.memory_space<vmem>>, vector<8x32xf32>
    tpu.vector_store %arg12[%c48, %c32_24], %87 {strides = array<i32>} : memref<64x64xf32, #tpu.memory_space<vmem>>, vector<8x32xf32>,
    %cst_25 = arith.constant dense<0.000000e+00> : vector<8x256xf32>
    %89 = tpu.matmul %84, %40, %cst_25 {dimension_numbers = #tpu.dot_dimension_numbers<[1], [0], [0], [1], [0, 0, 1, 1], [], []>} : vector<8x64xf32>, vector<64x256xf32>, vector<8x256xf32> -> vector<8x256xf32>
    %90 = vector.extract_strided_slice %39 {offsets = [16, 0], sizes = [8, 256], strides = [1, 1]} : vector<64x256xf32> to vector<8x256xf32>
    %91 = arith.addf %89, %90 : vector<8x256xf32>
    %92 = vector.extract_strided_slice %91 {offsets = [0, 0], sizes = [8, 192], strides = [1, 1]} : vector<8x256xf32> to vector<8x192xf32>
    %93 = arith.negf %92 : vector<8x192xf32>
    %94 = math.exp %93 : vector<8x192xf32>
    %cst_26 = arith.constant 1.000000e+00 : f32
    %95 = vector.broadcast %cst_26 : f32 to vector<8x192xf32>
    %96 = arith.addf %95, %94 : vector<8x192xf32>
    %97 = arith.divf %95, %96 : vector<8x192xf32>
    %98 = vector.extract_strided_slice %91 {offsets = [0, 192], sizes = [8, 64], strides = [1, 1]} : vector<8x256xf32> to vector<8x64xf32>
    %99 = math.tanh %98 : vector<8x64xf32>
    %100 = vector.extract_strided_slice %97 {offsets = [0, 64], sizes = [8, 64], strides = [1, 1]} : vector<8x192xf32> to vector<8x64xf32>
    %101 = arith.mulf %100, %81 : vector<8x64xf32>
    %102 = vector.extract_strided_slice %97 {offsets = [0, 0], sizes = [8, 64], strides = [1, 1]} : vector<8x192xf32> to vector<8x64xf32>
    %103 = arith.mulf %102, %99 : vector<8x64xf32>
    %104 = arith.addf %101, %103 : vector<8x64xf32>
    %105 = vector.extract_strided_slice %97 {offsets = [0, 128], sizes = [8, 64], strides = [1, 1]} : vector<8x192xf32> to vector<8x64xf32>
    %106 = math.tanh %104 : vector<8x64xf32>
    %107 = arith.mulf %105, %106 : vector<8x64xf32>
    %108 = vector.extract_strided_slice %107 {offsets = [0, 0], sizes = [8, 32], strides = [1, 1]} : vector<8x64xf32> to vector<8x32xf32>
    %c16 = arith.constant 16 : index
    %c0_27 = arith.constant 0 : index
    %109 = vector.load %arg12[%c16, %c0_27] : memref<64x64xf32, #tpu.memory_space<vmem>>, vector<8x32xf32>
    tpu.vector_store %arg12[%c16, %c0_27], %108 {strides = array<i32>} : memref<64x64xf32, #tpu.memory_space<vmem>>, vector<8x32xf32>,
    %110 = vector.extract_strided_slice %107 {offsets = [0, 32], sizes = [8, 32], strides = [1, 1]} : vector<8x64xf32> to vector<8x32xf32>
    %c40 = arith.constant 40 : index
    %c32_28 = arith.constant 32 : index
    %111 = vector.load %arg12[%c40, %c32_28] : memref<64x64xf32, #tpu.memory_space<vmem>>, vector<8x32xf32>
    tpu.vector_store %arg12[%c40, %c32_28], %110 {strides = array<i32>} : memref<64x64xf32, #tpu.memory_space<vmem>>, vector<8x32xf32>,
    %cst_29 = arith.constant dense<0.000000e+00> : vector<8x256xf32>
    %112 = tpu.matmul %107, %40, %cst_29 {dimension_numbers = #tpu.dot_dimension_numbers<[1], [0], [0], [1], [0, 0, 1, 1], [], []>} : vector<8x64xf32>, vector<64x256xf32>, vector<8x256xf32> -> vector<8x256xf32>
    %113 = vector.extract_strided_slice %39 {offsets = [24, 0], sizes = [8, 256], strides = [1, 1]} : vector<64x256xf32> to vector<8x256xf32>
    %114 = arith.addf %112, %113 : vector<8x256xf32>
    %115 = vector.extract_strided_slice %114 {offsets = [0, 0], sizes = [8, 192], strides = [1, 1]} : vector<8x256xf32> to vector<8x192xf32>
    %116 = arith.negf %115 : vector<8x192xf32>
    %117 = math.exp %116 : vector<8x192xf32>
    %cst_30 = arith.constant 1.000000e+00 : f32
    %118 = vector.broadcast %cst_30 : f32 to vector<8x192xf32>
    %119 = arith.addf %118, %117 : vector<8x192xf32>
    %120 = arith.divf %118, %119 : vector<8x192xf32>
    %121 = vector.extract_strided_slice %114 {offsets = [0, 192], sizes = [8, 64], strides = [1, 1]} : vector<8x256xf32> to vector<8x64xf32>
    %122 = math.tanh %121 : vector<8x64xf32>
    %123 = vector.extract_strided_slice %120 {offsets = [0, 64], sizes = [8, 64], strides = [1, 1]} : vector<8x192xf32> to vector<8x64xf32>
    %124 = arith.mulf %123, %104 : vector<8x64xf32>
    %125 = vector.extract_strided_slice %120 {offsets = [0, 0], sizes = [8, 64], strides = [1, 1]} : vector<8x192xf32> to vector<8x64xf32>
    %126 = arith.mulf %125, %122 : vector<8x64xf32>
    %127 = arith.addf %124, %126 : vector<8x64xf32>
    %128 = vector.extract_strided_slice %120 {offsets = [0, 128], sizes = [8, 64], strides = [1, 1]} : vector<8x192xf32> to vector<8x64xf32>
    %129 = math.tanh %127 : vector<8x64xf32>
    %130 = arith.mulf %128, %129 : vector<8x64xf32>
    %131 = vector.extract_strided_slice %130 {offsets = [0, 0], sizes = [8, 32], strides = [1, 1]} : vector<8x64xf32> to vector<8x32xf32>
    %c24 = arith.constant 24 : index
    %c0_31 = arith.constant 0 : index
    %132 = vector.load %arg12[%c24, %c0_31] : memref<64x64xf32, #tpu.memory_space<vmem>>, vector<8x32xf32>
    tpu.vector_store %arg12[%c24, %c0_31], %131 {strides = array<i32>} : memref<64x64xf32, #tpu.memory_space<vmem>>, vector<8x32xf32>,
    %133 = vector.extract_strided_slice %130 {offsets = [0, 32], sizes = [8, 32], strides = [1, 1]} : vector<8x64xf32> to vector<8x32xf32>
    %c32_32 = arith.constant 32 : index
    %c32_33 = arith.constant 32 : index
    %134 = vector.load %arg12[%c32_32, %c32_33] : memref<64x64xf32, #tpu.memory_space<vmem>>, vector<8x32xf32>
    tpu.vector_store %arg12[%c32_32, %c32_33], %133 {strides = array<i32>} : memref<64x64xf32, #tpu.memory_space<vmem>>, vector<8x32xf32>,
    %cst_34 = arith.constant dense<0.000000e+00> : vector<8x256xf32>
    %135 = tpu.matmul %130, %40, %cst_34 {dimension_numbers = #tpu.dot_dimension_numbers<[1], [0], [0], [1], [0, 0, 1, 1], [], []>} : vector<8x64xf32>, vector<64x256xf32>, vector<8x256xf32> -> vector<8x256xf32>
    %136 = vector.extract_strided_slice %39 {offsets = [32, 0], sizes = [8, 256], strides = [1, 1]} : vector<64x256xf32> to vector<8x256xf32>
    %137 = arith.addf %135, %136 : vector<8x256xf32>
    %138 = vector.extract_strided_slice %137 {offsets = [0, 0], sizes = [8, 192], strides = [1, 1]} : vector<8x256xf32> to vector<8x192xf32>
    %139 = arith.negf %138 : vector<8x192xf32>
    %140 = math.exp %139 : vector<8x192xf32>
    %cst_35 = arith.constant 1.000000e+00 : f32
    %141 = vector.broadcast %cst_35 : f32 to vector<8x192xf32>
    %142 = arith.addf %141, %140 : vector<8x192xf32>
    %143 = arith.divf %141, %142 : vector<8x192xf32>
    %144 = vector.extract_strided_slice %137 {offsets = [0, 192], sizes = [8, 64], strides = [1, 1]} : vector<8x256xf32> to vector<8x64xf32>
    %145 = math.tanh %144 : vector<8x64xf32>
    %146 = vector.extract_strided_slice %143 {offsets = [0, 64], sizes = [8, 64], strides = [1, 1]} : vector<8x192xf32> to vector<8x64xf32>
    %147 = arith.mulf %146, %127 : vector<8x64xf32>
    %148 = vector.extract_strided_slice %143 {offsets = [0, 0], sizes = [8, 64], strides = [1, 1]} : vector<8x192xf32> to vector<8x64xf32>
    %149 = arith.mulf %148, %145 : vector<8x64xf32>
    %150 = arith.addf %147, %149 : vector<8x64xf32>
    %151 = vector.extract_strided_slice %143 {offsets = [0, 128], sizes = [8, 64], strides = [1, 1]} : vector<8x192xf32> to vector<8x64xf32>
    %152 = math.tanh %150 : vector<8x64xf32>
    %153 = arith.mulf %151, %152 : vector<8x64xf32>
    %154 = vector.extract_strided_slice %153 {offsets = [0, 0], sizes = [8, 32], strides = [1, 1]} : vector<8x64xf32> to vector<8x32xf32>
    %c32_36 = arith.constant 32 : index
    %c0_37 = arith.constant 0 : index
    %155 = vector.load %arg12[%c32_36, %c0_37] : memref<64x64xf32, #tpu.memory_space<vmem>>, vector<8x32xf32>
    tpu.vector_store %arg12[%c32_36, %c0_37], %154 {strides = array<i32>} : memref<64x64xf32, #tpu.memory_space<vmem>>, vector<8x32xf32>,
    %156 = vector.extract_strided_slice %153 {offsets = [0, 32], sizes = [8, 32], strides = [1, 1]} : vector<8x64xf32> to vector<8x32xf32>
    %c24_38 = arith.constant 24 : index
    %c32_39 = arith.constant 32 : index
    %157 = vector.load %arg12[%c24_38, %c32_39] : memref<64x64xf32, #tpu.memory_space<vmem>>, vector<8x32xf32>
    tpu.vector_store %arg12[%c24_38, %c32_39], %156 {strides = array<i32>} : memref<64x64xf32, #tpu.memory_space<vmem>>, vector<8x32xf32>,
    %cst_40 = arith.constant dense<0.000000e+00> : vector<8x256xf32>
    %158 = tpu.matmul %153, %40, %cst_40 {dimension_numbers = #tpu.dot_dimension_numbers<[1], [0], [0], [1], [0, 0, 1, 1], [], []>} : vector<8x64xf32>, vector<64x256xf32>, vector<8x256xf32> -> vector<8x256xf32>
    %159 = vector.extract_strided_slice %39 {offsets = [40, 0], sizes = [8, 256], strides = [1, 1]} : vector<64x256xf32> to vector<8x256xf32>
    %160 = arith.addf %158, %159 : vector<8x256xf32>
    %161 = vector.extract_strided_slice %160 {offsets = [0, 0], sizes = [8, 192], strides = [1, 1]} : vector<8x256xf32> to vector<8x192xf32>
    %162 = arith.negf %161 : vector<8x192xf32>
    %163 = math.exp %162 : vector<8x192xf32>
    %cst_41 = arith.constant 1.000000e+00 : f32
    %164 = vector.broadcast %cst_41 : f32 to vector<8x192xf32>
    %165 = arith.addf %164, %163 : vector<8x192xf32>
    %166 = arith.divf %164, %165 : vector<8x192xf32>
    %167 = vector.extract_strided_slice %160 {offsets = [0, 192], sizes = [8, 64], strides = [1, 1]} : vector<8x256xf32> to vector<8x64xf32>
    %168 = math.tanh %167 : vector<8x64xf32>
    %169 = vector.extract_strided_slice %166 {offsets = [0, 64], sizes = [8, 64], strides = [1, 1]} : vector<8x192xf32> to vector<8x64xf32>
    %170 = arith.mulf %169, %150 : vector<8x64xf32>
    %171 = vector.extract_strided_slice %166 {offsets = [0, 0], sizes = [8, 64], strides = [1, 1]} : vector<8x192xf32> to vector<8x64xf32>
    %172 = arith.mulf %171, %168 : vector<8x64xf32>
    %173 = arith.addf %170, %172 : vector<8x64xf32>
    %174 = vector.extract_strided_slice %166 {offsets = [0, 128], sizes = [8, 64], strides = [1, 1]} : vector<8x192xf32> to vector<8x64xf32>
    %175 = math.tanh %173 : vector<8x64xf32>
    %176 = arith.mulf %174, %175 : vector<8x64xf32>
    %177 = vector.extract_strided_slice %176 {offsets = [0, 0], sizes = [8, 32], strides = [1, 1]} : vector<8x64xf32> to vector<8x32xf32>
    %c40_42 = arith.constant 40 : index
    %c0_43 = arith.constant 0 : index
    %178 = vector.load %arg12[%c40_42, %c0_43] : memref<64x64xf32, #tpu.memory_space<vmem>>, vector<8x32xf32>
    tpu.vector_store %arg12[%c40_42, %c0_43], %177 {strides = array<i32>} : memref<64x64xf32, #tpu.memory_space<vmem>>, vector<8x32xf32>,
    %179 = vector.extract_strided_slice %176 {offsets = [0, 32], sizes = [8, 32], strides = [1, 1]} : vector<8x64xf32> to vector<8x32xf32>
    %c16_44 = arith.constant 16 : index
    %c32_45 = arith.constant 32 : index
    %180 = vector.load %arg12[%c16_44, %c32_45] : memref<64x64xf32, #tpu.memory_space<vmem>>, vector<8x32xf32>
    tpu.vector_store %arg12[%c16_44, %c32_45], %179 {strides = array<i32>} : memref<64x64xf32, #tpu.memory_space<vmem>>, vector<8x32xf32>,
    %cst_46 = arith.constant dense<0.000000e+00> : vector<8x256xf32>
    %181 = tpu.matmul %176, %40, %cst_46 {dimension_numbers = #tpu.dot_dimension_numbers<[1], [0], [0], [1], [0, 0, 1, 1], [], []>} : vector<8x64xf32>, vector<64x256xf32>, vector<8x256xf32> -> vector<8x256xf32>
    %182 = vector.extract_strided_slice %39 {offsets = [48, 0], sizes = [8, 256], strides = [1, 1]} : vector<64x256xf32> to vector<8x256xf32>
    %183 = arith.addf %181, %182 : vector<8x256xf32>
    %184 = vector.extract_strided_slice %183 {offsets = [0, 0], sizes = [8, 192], strides = [1, 1]} : vector<8x256xf32> to vector<8x192xf32>
    %185 = arith.negf %184 : vector<8x192xf32>
    %186 = math.exp %185 : vector<8x192xf32>
    %cst_47 = arith.constant 1.000000e+00 : f32
    %187 = vector.broadcast %cst_47 : f32 to vector<8x192xf32>
    %188 = arith.addf %187, %186 : vector<8x192xf32>
    %189 = arith.divf %187, %188 : vector<8x192xf32>
    %190 = vector.extract_strided_slice %183 {offsets = [0, 192], sizes = [8, 64], strides = [1, 1]} : vector<8x256xf32> to vector<8x64xf32>
    %191 = math.tanh %190 : vector<8x64xf32>
    %192 = vector.extract_strided_slice %189 {offsets = [0, 64], sizes = [8, 64], strides = [1, 1]} : vector<8x192xf32> to vector<8x64xf32>
    %193 = arith.mulf %192, %173 : vector<8x64xf32>
    %194 = vector.extract_strided_slice %189 {offsets = [0, 0], sizes = [8, 64], strides = [1, 1]} : vector<8x192xf32> to vector<8x64xf32>
    %195 = arith.mulf %194, %191 : vector<8x64xf32>
    %196 = arith.addf %193, %195 : vector<8x64xf32>
    %197 = vector.extract_strided_slice %189 {offsets = [0, 128], sizes = [8, 64], strides = [1, 1]} : vector<8x192xf32> to vector<8x64xf32>
    %198 = math.tanh %196 : vector<8x64xf32>
    %199 = arith.mulf %197, %198 : vector<8x64xf32>
    %200 = vector.extract_strided_slice %199 {offsets = [0, 0], sizes = [8, 32], strides = [1, 1]} : vector<8x64xf32> to vector<8x32xf32>
    %c48_48 = arith.constant 48 : index
    %c0_49 = arith.constant 0 : index
    %201 = vector.load %arg12[%c48_48, %c0_49] : memref<64x64xf32, #tpu.memory_space<vmem>>, vector<8x32xf32>
    tpu.vector_store %arg12[%c48_48, %c0_49], %200 {strides = array<i32>} : memref<64x64xf32, #tpu.memory_space<vmem>>, vector<8x32xf32>,
    %202 = vector.extract_strided_slice %199 {offsets = [0, 32], sizes = [8, 32], strides = [1, 1]} : vector<8x64xf32> to vector<8x32xf32>
    %c8_50 = arith.constant 8 : index
    %c32_51 = arith.constant 32 : index
    %203 = vector.load %arg12[%c8_50, %c32_51] : memref<64x64xf32, #tpu.memory_space<vmem>>, vector<8x32xf32>
    tpu.vector_store %arg12[%c8_50, %c32_51], %202 {strides = array<i32>} : memref<64x64xf32, #tpu.memory_space<vmem>>, vector<8x32xf32>,
    %cst_52 = arith.constant dense<0.000000e+00> : vector<8x256xf32>
    %204 = tpu.matmul %199, %40, %cst_52 {dimension_numbers = #tpu.dot_dimension_numbers<[1], [0], [0], [1], [0, 0, 1, 1], [], []>} : vector<8x64xf32>, vector<64x256xf32>, vector<8x256xf32> -> vector<8x256xf32>
    %205 = vector.extract_strided_slice %39 {offsets = [56, 0], sizes = [8, 256], strides = [1, 1]} : vector<64x256xf32> to vector<8x256xf32>
    %206 = arith.addf %204, %205 : vector<8x256xf32>
    %207 = vector.extract_strided_slice %206 {offsets = [0, 0], sizes = [8, 192], strides = [1, 1]} : vector<8x256xf32> to vector<8x192xf32>
    %208 = arith.negf %207 : vector<8x192xf32>
    %209 = math.exp %208 : vector<8x192xf32>
    %cst_53 = arith.constant 1.000000e+00 : f32
    %210 = vector.broadcast %cst_53 : f32 to vector<8x192xf32>
    %211 = arith.addf %210, %209 : vector<8x192xf32>
    %212 = arith.divf %210, %211 : vector<8x192xf32>
    %213 = vector.extract_strided_slice %206 {offsets = [0, 192], sizes = [8, 64], strides = [1, 1]} : vector<8x256xf32> to vector<8x64xf32>
    %214 = math.tanh %213 : vector<8x64xf32>
    %215 = vector.extract_strided_slice %212 {offsets = [0, 64], sizes = [8, 64], strides = [1, 1]} : vector<8x192xf32> to vector<8x64xf32>
    %216 = arith.mulf %215, %196 : vector<8x64xf32>
    %217 = vector.extract_strided_slice %212 {offsets = [0, 0], sizes = [8, 64], strides = [1, 1]} : vector<8x192xf32> to vector<8x64xf32>
    %218 = arith.mulf %217, %214 : vector<8x64xf32>
    %219 = arith.addf %216, %218 : vector<8x64xf32>
    %220 = vector.extract_strided_slice %212 {offsets = [0, 128], sizes = [8, 64], strides = [1, 1]} : vector<8x192xf32> to vector<8x64xf32>
    %221 = math.tanh %219 : vector<8x64xf32>
    %222 = arith.mulf %220, %221 : vector<8x64xf32>
    %223 = vector.extract_strided_slice %222 {offsets = [0, 0], sizes = [8, 32], strides = [1, 1]} : vector<8x64xf32> to vector<8x32xf32>
    %c56_54 = arith.constant 56 : index
    %c0_55 = arith.constant 0 : index
    %224 = vector.load %arg12[%c56_54, %c0_55] : memref<64x64xf32, #tpu.memory_space<vmem>>, vector<8x32xf32>
    tpu.vector_store %arg12[%c56_54, %c0_55], %223 {strides = array<i32>} : memref<64x64xf32, #tpu.memory_space<vmem>>, vector<8x32xf32>,
    %225 = vector.extract_strided_slice %222 {offsets = [0, 32], sizes = [8, 32], strides = [1, 1]} : vector<8x64xf32> to vector<8x32xf32>
    %c0_56 = arith.constant 0 : index
    %c32_57 = arith.constant 32 : index
    %226 = vector.load %arg12[%c0_56, %c32_57] : memref<64x64xf32, #tpu.memory_space<vmem>>, vector<8x32xf32>
    tpu.vector_store %arg12[%c0_56, %c32_57], %225 {strides = array<i32>} : memref<64x64xf32, #tpu.memory_space<vmem>>, vector<8x32xf32>,
    %c0_58 = arith.constant 0 : index
    %c0_59 = arith.constant 0 : index
    %227 = vector.load %arg12[%c0_58, %c0_59] : memref<64x64xf32, #tpu.memory_space<vmem>>, vector<64x64xf32>
    %c0_60 = arith.constant 0 : index
    %c0_61 = arith.constant 0 : index
    %228 = vector.load %arg6[%c0_60, %c0_61] : memref<64x256xf32, #tpu.memory_space<vmem>>, vector<64x256xf32>
    %cst_62 = arith.constant dense<0.000000e+00> : vector<64x256xf32>
    %229 = tpu.matmul %227, %228, %cst_62 {dimension_numbers = #tpu.dot_dimension_numbers<[1], [0], [0], [1], [0, 0, 1, 1], [], []>} : vector<64x64xf32>, vector<64x256xf32>, vector<64x256xf32> -> vector<64x256xf32>
    %c0_63 = arith.constant 0 : index
    %c0_64 = arith.constant 0 : index
    %230 = vector.load %arg7[%c0_63, %c0_64] : memref<1x256xf32, #tpu.memory_space<vmem>>, vector<1x256xf32>
    %231 = vector.broadcast %230 : vector<1x256xf32> to vector<64x256xf32>
    %232 = arith.addf %229, %231 : vector<64x256xf32>
    %233 = vector.extract_strided_slice %232 {offsets = [56, 0], sizes = [8, 256], strides = [1, 1]} : vector<64x256xf32> to vector<8x256xf32>
    %234 = vector.extract_strided_slice %232 {offsets = [48, 0], sizes = [8, 256], strides = [1, 1]} : vector<64x256xf32> to vector<8x256xf32>
    %235 = vector.extract_strided_slice %232 {offsets = [40, 0], sizes = [8, 256], strides = [1, 1]} : vector<64x256xf32> to vector<8x256xf32>
    %236 = vector.extract_strided_slice %232 {offsets = [32, 0], sizes = [8, 256], strides = [1, 1]} : vector<64x256xf32> to vector<8x256xf32>
    %237 = vector.extract_strided_slice %232 {offsets = [24, 0], sizes = [8, 256], strides = [1, 1]} : vector<64x256xf32> to vector<8x256xf32>
    %238 = vector.extract_strided_slice %232 {offsets = [16, 0], sizes = [8, 256], strides = [1, 1]} : vector<64x256xf32> to vector<8x256xf32>
    %239 = vector.extract_strided_slice %232 {offsets = [8, 0], sizes = [8, 256], strides = [1, 1]} : vector<64x256xf32> to vector<8x256xf32>
    %240 = vector.extract_strided_slice %232 {offsets = [0, 0], sizes = [8, 256], strides = [1, 1]} : vector<64x256xf32> to vector<8x256xf32>
    %241 = tpu.concatenate %233, %234, %235, %236, %237, %238, %239, %240 in 0 : vector<8x256xf32>, vector<8x256xf32>, vector<8x256xf32>, vector<8x256xf32>, vector<8x256xf32>, vector<8x256xf32>, vector<8x256xf32>, vector<8x256xf32> -> vector<64x256xf32>
    %242 = arith.select %18, %232, %241 : vector<64x256xi1>, vector<64x256xf32>
    %c0_65 = arith.constant 0 : index
    %c0_66 = arith.constant 0 : index
    %243 = vector.load %arg8[%c0_65, %c0_66] : memref<64x256xf32, #tpu.memory_space<vmem>>, vector<64x256xf32>
    %cst_67 = arith.constant 0.000000e+00 : f32
    %244 = vector.broadcast %cst_67 : f32 to vector<8x64xf32>
    %cst_68 = arith.constant 0.000000e+00 : f32
    %245 = vector.broadcast %cst_68 : f32 to vector<8x64xf32>
    %cst_69 = arith.constant dense<0.000000e+00> : vector<8x256xf32>
    %246 = tpu.matmul %244, %243, %cst_69 {dimension_numbers = #tpu.dot_dimension_numbers<[1], [0], [0], [1], [0, 0, 1, 1], [], []>} : vector<8x64xf32>, vector<64x256xf32>, vector<8x256xf32> -> vector<8x256xf32>
    %247 = vector.extract_strided_slice %242 {offsets = [0, 0], sizes = [8, 256], strides = [1, 1]} : vector<64x256xf32> to vector<8x256xf32>
    %248 = arith.addf %246, %247 : vector<8x256xf32>
    %249 = vector.extract_strided_slice %248 {offsets = [0, 0], sizes = [8, 192], strides = [1, 1]} : vector<8x256xf32> to vector<8x192xf32>
    %250 = arith.negf %249 : vector<8x192xf32>
    %251 = math.exp %250 : vector<8x192xf32>
    %cst_70 = arith.constant 1.000000e+00 : f32
    %252 = vector.broadcast %cst_70 : f32 to vector<8x192xf32>
    %253 = arith.addf %252, %251 : vector<8x192xf32>
    %254 = arith.divf %252, %253 : vector<8x192xf32>
    %255 = vector.extract_strided_slice %248 {offsets = [0, 192], sizes = [8, 64], strides = [1, 1]} : vector<8x256xf32> to vector<8x64xf32>
    %256 = math.tanh %255 : vector<8x64xf32>
    %257 = vector.extract_strided_slice %254 {offsets = [0, 64], sizes = [8, 64], strides = [1, 1]} : vector<8x192xf32> to vector<8x64xf32>
    %258 = arith.mulf %257, %245 : vector<8x64xf32>
    %259 = vector.extract_strided_slice %254 {offsets = [0, 0], sizes = [8, 64], strides = [1, 1]} : vector<8x192xf32> to vector<8x64xf32>
    %260 = arith.mulf %259, %256 : vector<8x64xf32>
    %261 = arith.addf %258, %260 : vector<8x64xf32>
    %262 = vector.extract_strided_slice %254 {offsets = [0, 128], sizes = [8, 64], strides = [1, 1]} : vector<8x192xf32> to vector<8x64xf32>
    %263 = math.tanh %261 : vector<8x64xf32>
    %264 = arith.mulf %262, %263 : vector<8x64xf32>
    %cst_71 = arith.constant dense<0.000000e+00> : vector<8x256xf32>
    %265 = tpu.matmul %264, %243, %cst_71 {dimension_numbers = #tpu.dot_dimension_numbers<[1], [0], [0], [1], [0, 0, 1, 1], [], []>} : vector<8x64xf32>, vector<64x256xf32>, vector<8x256xf32> -> vector<8x256xf32>
    %266 = vector.extract_strided_slice %242 {offsets = [8, 0], sizes = [8, 256], strides = [1, 1]} : vector<64x256xf32> to vector<8x256xf32>
    %267 = arith.addf %265, %266 : vector<8x256xf32>
    %268 = vector.extract_strided_slice %267 {offsets = [0, 0], sizes = [8, 192], strides = [1, 1]} : vector<8x256xf32> to vector<8x192xf32>
    %269 = arith.negf %268 : vector<8x192xf32>
    %270 = math.exp %269 : vector<8x192xf32>
    %cst_72 = arith.constant 1.000000e+00 : f32
    %271 = vector.broadcast %cst_72 : f32 to vector<8x192xf32>
    %272 = arith.addf %271, %270 : vector<8x192xf32>
    %273 = arith.divf %271, %272 : vector<8x192xf32>
    %274 = vector.extract_strided_slice %267 {offsets = [0, 192], sizes = [8, 64], strides = [1, 1]} : vector<8x256xf32> to vector<8x64xf32>
    %275 = math.tanh %274 : vector<8x64xf32>
    %276 = vector.extract_strided_slice %273 {offsets = [0, 64], sizes = [8, 64], strides = [1, 1]} : vector<8x192xf32> to vector<8x64xf32>
    %277 = arith.mulf %276, %261 : vector<8x64xf32>
    %278 = vector.extract_strided_slice %273 {offsets = [0, 0], sizes = [8, 64], strides = [1, 1]} : vector<8x192xf32> to vector<8x64xf32>
    %279 = arith.mulf %278, %275 : vector<8x64xf32>
    %280 = arith.addf %277, %279 : vector<8x64xf32>
    %281 = vector.extract_strided_slice %273 {offsets = [0, 128], sizes = [8, 64], strides = [1, 1]} : vector<8x192xf32> to vector<8x64xf32>
    %282 = math.tanh %280 : vector<8x64xf32>
    %283 = arith.mulf %281, %282 : vector<8x64xf32>
    %cst_73 = arith.constant dense<0.000000e+00> : vector<8x256xf32>
    %284 = tpu.matmul %283, %243, %cst_73 {dimension_numbers = #tpu.dot_dimension_numbers<[1], [0], [0], [1], [0, 0, 1, 1], [], []>} : vector<8x64xf32>, vector<64x256xf32>, vector<8x256xf32> -> vector<8x256xf32>
    %285 = vector.extract_strided_slice %242 {offsets = [16, 0], sizes = [8, 256], strides = [1, 1]} : vector<64x256xf32> to vector<8x256xf32>
    %286 = arith.addf %284, %285 : vector<8x256xf32>
    %287 = vector.extract_strided_slice %286 {offsets = [0, 0], sizes = [8, 192], strides = [1, 1]} : vector<8x256xf32> to vector<8x192xf32>
    %288 = arith.negf %287 : vector<8x192xf32>
    %289 = math.exp %288 : vector<8x192xf32>
    %cst_74 = arith.constant 1.000000e+00 : f32
    %290 = vector.broadcast %cst_74 : f32 to vector<8x192xf32>
    %291 = arith.addf %290, %289 : vector<8x192xf32>
    %292 = arith.divf %290, %291 : vector<8x192xf32>
    %293 = vector.extract_strided_slice %286 {offsets = [0, 192], sizes = [8, 64], strides = [1, 1]} : vector<8x256xf32> to vector<8x64xf32>
    %294 = math.tanh %293 : vector<8x64xf32>
    %295 = vector.extract_strided_slice %292 {offsets = [0, 64], sizes = [8, 64], strides = [1, 1]} : vector<8x192xf32> to vector<8x64xf32>
    %296 = arith.mulf %295, %280 : vector<8x64xf32>
    %297 = vector.extract_strided_slice %292 {offsets = [0, 0], sizes = [8, 64], strides = [1, 1]} : vector<8x192xf32> to vector<8x64xf32>
    %298 = arith.mulf %297, %294 : vector<8x64xf32>
    %299 = arith.addf %296, %298 : vector<8x64xf32>
    %300 = vector.extract_strided_slice %292 {offsets = [0, 128], sizes = [8, 64], strides = [1, 1]} : vector<8x192xf32> to vector<8x64xf32>
    %301 = math.tanh %299 : vector<8x64xf32>
    %302 = arith.mulf %300, %301 : vector<8x64xf32>
    %cst_75 = arith.constant dense<0.000000e+00> : vector<8x256xf32>
    %303 = tpu.matmul %302, %243, %cst_75 {dimension_numbers = #tpu.dot_dimension_numbers<[1], [0], [0], [1], [0, 0, 1, 1], [], []>} : vector<8x64xf32>, vector<64x256xf32>, vector<8x256xf32> -> vector<8x256xf32>
    %304 = vector.extract_strided_slice %242 {offsets = [24, 0], sizes = [8, 256], strides = [1, 1]} : vector<64x256xf32> to vector<8x256xf32>
    %305 = arith.addf %303, %304 : vector<8x256xf32>
    %306 = vector.extract_strided_slice %305 {offsets = [0, 0], sizes = [8, 192], strides = [1, 1]} : vector<8x256xf32> to vector<8x192xf32>
    %307 = arith.negf %306 : vector<8x192xf32>
    %308 = math.exp %307 : vector<8x192xf32>
    %cst_76 = arith.constant 1.000000e+00 : f32
    %309 = vector.broadcast %cst_76 : f32 to vector<8x192xf32>
    %310 = arith.addf %309, %308 : vector<8x192xf32>
    %311 = arith.divf %309, %310 : vector<8x192xf32>
    %312 = vector.extract_strided_slice %305 {offsets = [0, 192], sizes = [8, 64], strides = [1, 1]} : vector<8x256xf32> to vector<8x64xf32>
    %313 = math.tanh %312 : vector<8x64xf32>
    %314 = vector.extract_strided_slice %311 {offsets = [0, 64], sizes = [8, 64], strides = [1, 1]} : vector<8x192xf32> to vector<8x64xf32>
    %315 = arith.mulf %314, %299 : vector<8x64xf32>
    %316 = vector.extract_strided_slice %311 {offsets = [0, 0], sizes = [8, 64], strides = [1, 1]} : vector<8x192xf32> to vector<8x64xf32>
    %317 = arith.mulf %316, %313 : vector<8x64xf32>
    %318 = arith.addf %315, %317 : vector<8x64xf32>
    %319 = vector.extract_strided_slice %311 {offsets = [0, 128], sizes = [8, 64], strides = [1, 1]} : vector<8x192xf32> to vector<8x64xf32>
    %320 = math.tanh %318 : vector<8x64xf32>
    %321 = arith.mulf %319, %320 : vector<8x64xf32>
    %cst_77 = arith.constant dense<0.000000e+00> : vector<8x256xf32>
    %322 = tpu.matmul %321, %243, %cst_77 {dimension_numbers = #tpu.dot_dimension_numbers<[1], [0], [0], [1], [0, 0, 1, 1], [], []>} : vector<8x64xf32>, vector<64x256xf32>, vector<8x256xf32> -> vector<8x256xf32>
    %323 = vector.extract_strided_slice %242 {offsets = [32, 0], sizes = [8, 256], strides = [1, 1]} : vector<64x256xf32> to vector<8x256xf32>
    %324 = arith.addf %322, %323 : vector<8x256xf32>
    %325 = vector.extract_strided_slice %324 {offsets = [0, 0], sizes = [8, 192], strides = [1, 1]} : vector<8x256xf32> to vector<8x192xf32>
    %326 = arith.negf %325 : vector<8x192xf32>
    %327 = math.exp %326 : vector<8x192xf32>
    %cst_78 = arith.constant 1.000000e+00 : f32
    %328 = vector.broadcast %cst_78 : f32 to vector<8x192xf32>
    %329 = arith.addf %328, %327 : vector<8x192xf32>
    %330 = arith.divf %328, %329 : vector<8x192xf32>
    %331 = vector.extract_strided_slice %324 {offsets = [0, 192], sizes = [8, 64], strides = [1, 1]} : vector<8x256xf32> to vector<8x64xf32>
    %332 = math.tanh %331 : vector<8x64xf32>
    %333 = vector.extract_strided_slice %330 {offsets = [0, 64], sizes = [8, 64], strides = [1, 1]} : vector<8x192xf32> to vector<8x64xf32>
    %334 = arith.mulf %333, %318 : vector<8x64xf32>
    %335 = vector.extract_strided_slice %330 {offsets = [0, 0], sizes = [8, 64], strides = [1, 1]} : vector<8x192xf32> to vector<8x64xf32>
    %336 = arith.mulf %335, %332 : vector<8x64xf32>
    %337 = arith.addf %334, %336 : vector<8x64xf32>
    %338 = vector.extract_strided_slice %330 {offsets = [0, 128], sizes = [8, 64], strides = [1, 1]} : vector<8x192xf32> to vector<8x64xf32>
    %339 = math.tanh %337 : vector<8x64xf32>
    %340 = arith.mulf %338, %339 : vector<8x64xf32>
    %cst_79 = arith.constant dense<0.000000e+00> : vector<8x256xf32>
    %341 = tpu.matmul %340, %243, %cst_79 {dimension_numbers = #tpu.dot_dimension_numbers<[1], [0], [0], [1], [0, 0, 1, 1], [], []>} : vector<8x64xf32>, vector<64x256xf32>, vector<8x256xf32> -> vector<8x256xf32>
    %342 = vector.extract_strided_slice %242 {offsets = [40, 0], sizes = [8, 256], strides = [1, 1]} : vector<64x256xf32> to vector<8x256xf32>
    %343 = arith.addf %341, %342 : vector<8x256xf32>
    %344 = vector.extract_strided_slice %343 {offsets = [0, 0], sizes = [8, 192], strides = [1, 1]} : vector<8x256xf32> to vector<8x192xf32>
    %345 = arith.negf %344 : vector<8x192xf32>
    %346 = math.exp %345 : vector<8x192xf32>
    %cst_80 = arith.constant 1.000000e+00 : f32
    %347 = vector.broadcast %cst_80 : f32 to vector<8x192xf32>
    %348 = arith.addf %347, %346 : vector<8x192xf32>
    %349 = arith.divf %347, %348 : vector<8x192xf32>
    %350 = vector.extract_strided_slice %343 {offsets = [0, 192], sizes = [8, 64], strides = [1, 1]} : vector<8x256xf32> to vector<8x64xf32>
    %351 = math.tanh %350 : vector<8x64xf32>
    %352 = vector.extract_strided_slice %349 {offsets = [0, 64], sizes = [8, 64], strides = [1, 1]} : vector<8x192xf32> to vector<8x64xf32>
    %353 = arith.mulf %352, %337 : vector<8x64xf32>
    %354 = vector.extract_strided_slice %349 {offsets = [0, 0], sizes = [8, 64], strides = [1, 1]} : vector<8x192xf32> to vector<8x64xf32>
    %355 = arith.mulf %354, %351 : vector<8x64xf32>
    %356 = arith.addf %353, %355 : vector<8x64xf32>
    %357 = vector.extract_strided_slice %349 {offsets = [0, 128], sizes = [8, 64], strides = [1, 1]} : vector<8x192xf32> to vector<8x64xf32>
    %358 = math.tanh %356 : vector<8x64xf32>
    %359 = arith.mulf %357, %358 : vector<8x64xf32>
    %cst_81 = arith.constant dense<0.000000e+00> : vector<8x256xf32>
    %360 = tpu.matmul %359, %243, %cst_81 {dimension_numbers = #tpu.dot_dimension_numbers<[1], [0], [0], [1], [0, 0, 1, 1], [], []>} : vector<8x64xf32>, vector<64x256xf32>, vector<8x256xf32> -> vector<8x256xf32>
    %361 = vector.extract_strided_slice %242 {offsets = [48, 0], sizes = [8, 256], strides = [1, 1]} : vector<64x256xf32> to vector<8x256xf32>
    %362 = arith.addf %360, %361 : vector<8x256xf32>
    %363 = vector.extract_strided_slice %362 {offsets = [0, 0], sizes = [8, 192], strides = [1, 1]} : vector<8x256xf32> to vector<8x192xf32>
    %364 = arith.negf %363 : vector<8x192xf32>
    %365 = math.exp %364 : vector<8x192xf32>
    %cst_82 = arith.constant 1.000000e+00 : f32
    %366 = vector.broadcast %cst_82 : f32 to vector<8x192xf32>
    %367 = arith.addf %366, %365 : vector<8x192xf32>
    %368 = arith.divf %366, %367 : vector<8x192xf32>
    %369 = vector.extract_strided_slice %362 {offsets = [0, 192], sizes = [8, 64], strides = [1, 1]} : vector<8x256xf32> to vector<8x64xf32>
    %370 = math.tanh %369 : vector<8x64xf32>
    %371 = vector.extract_strided_slice %368 {offsets = [0, 64], sizes = [8, 64], strides = [1, 1]} : vector<8x192xf32> to vector<8x64xf32>
    %372 = arith.mulf %371, %356 : vector<8x64xf32>
    %373 = vector.extract_strided_slice %368 {offsets = [0, 0], sizes = [8, 64], strides = [1, 1]} : vector<8x192xf32> to vector<8x64xf32>
    %374 = arith.mulf %373, %370 : vector<8x64xf32>
    %375 = arith.addf %372, %374 : vector<8x64xf32>
    %376 = vector.extract_strided_slice %368 {offsets = [0, 128], sizes = [8, 64], strides = [1, 1]} : vector<8x192xf32> to vector<8x64xf32>
    %377 = math.tanh %375 : vector<8x64xf32>
    %378 = arith.mulf %376, %377 : vector<8x64xf32>
    %cst_83 = arith.constant dense<0.000000e+00> : vector<8x256xf32>
    %379 = tpu.matmul %378, %243, %cst_83 {dimension_numbers = #tpu.dot_dimension_numbers<[1], [0], [0], [1], [0, 0, 1, 1], [], []>} : vector<8x64xf32>, vector<64x256xf32>, vector<8x256xf32> -> vector<8x256xf32>
    %380 = vector.extract_strided_slice %242 {offsets = [56, 0], sizes = [8, 256], strides = [1, 1]} : vector<64x256xf32> to vector<8x256xf32>
    %381 = arith.addf %379, %380 : vector<8x256xf32>
    %382 = vector.extract_strided_slice %381 {offsets = [0, 0], sizes = [8, 192], strides = [1, 1]} : vector<8x256xf32> to vector<8x192xf32>
    %383 = arith.negf %382 : vector<8x192xf32>
    %384 = math.exp %383 : vector<8x192xf32>
    %cst_84 = arith.constant 1.000000e+00 : f32
    %385 = vector.broadcast %cst_84 : f32 to vector<8x192xf32>
    %386 = arith.addf %385, %384 : vector<8x192xf32>
    %387 = arith.divf %385, %386 : vector<8x192xf32>
    %388 = vector.extract_strided_slice %381 {offsets = [0, 192], sizes = [8, 64], strides = [1, 1]} : vector<8x256xf32> to vector<8x64xf32>
    %389 = math.tanh %388 : vector<8x64xf32>
    %390 = vector.extract_strided_slice %387 {offsets = [0, 64], sizes = [8, 64], strides = [1, 1]} : vector<8x192xf32> to vector<8x64xf32>
    %391 = arith.mulf %390, %375 : vector<8x64xf32>
    %392 = vector.extract_strided_slice %387 {offsets = [0, 0], sizes = [8, 64], strides = [1, 1]} : vector<8x192xf32> to vector<8x64xf32>
    %393 = arith.mulf %392, %389 : vector<8x64xf32>
    %394 = arith.addf %391, %393 : vector<8x64xf32>
    %395 = vector.extract_strided_slice %387 {offsets = [0, 128], sizes = [8, 64], strides = [1, 1]} : vector<8x192xf32> to vector<8x64xf32>
    %396 = math.tanh %394 : vector<8x64xf32>
    %397 = arith.mulf %395, %396 : vector<8x64xf32>
    %c0_85 = arith.constant 0 : index
    %c0_86 = arith.constant 0 : index
    %398 = vector.load %arg9[%c0_85, %c0_86] : memref<64x8xf32, #tpu.memory_space<vmem>>, vector<64x8xf32>
    %cst_87 = arith.constant dense<0.000000e+00> : vector<8x8xf32>
    %399 = tpu.matmul %397, %398, %cst_87 {dimension_numbers = #tpu.dot_dimension_numbers<[1], [0], [0], [1], [0, 0, 1, 1], [], []>} : vector<8x64xf32>, vector<64x8xf32>, vector<8x8xf32> -> vector<8x8xf32>
    %c0_88 = arith.constant 0 : index
    %c0_89 = arith.constant 0 : index
    %400 = vector.load %arg10[%c0_88, %c0_89] : memref<1x8xf32, #tpu.memory_space<vmem>>, vector<1x8xf32>
    %401 = vector.broadcast %400 : vector<1x8xf32> to vector<8x8xf32>
    %402 = arith.addf %399, %401 : vector<8x8xf32>
    %cst_90 = arith.constant dense<0xFF800000> : vector<8xf32>
    %403 = vector.multi_reduction <maximumf>, %402, %cst_90 [1] : vector<8x8xf32> to vector<8xf32>
    %404 = vector.shape_cast %403 : vector<8xf32> to vector<8x1xf32>
    %405 = vector.broadcast %404 : vector<8x1xf32> to vector<8x8xf32>
    %406 = arith.subf %402, %405 : vector<8x8xf32>
    %407 = math.exp %406 : vector<8x8xf32>
    %cst_91 = arith.constant dense<0.000000e+00> : vector<8xf32>
    %408 = vector.multi_reduction <add>, %407, %cst_91 [1] : vector<8x8xf32> to vector<8xf32>
    %409 = vector.shape_cast %408 : vector<8xf32> to vector<8x1xf32>
    %410 = vector.broadcast %409 : vector<8x1xf32> to vector<8x8xf32>
    %411 = arith.divf %407, %410 : vector<8x8xf32>
    %c0_92 = arith.constant 0 : index
    %c0_93 = arith.constant 0 : index
    %412 = vector.load %arg11[%c0_92, %c0_93] : memref<8x8xf32, #tpu.memory_space<vmem>>, vector<8x8xf32>
    tpu.vector_store %arg11[%c0_92, %c0_93], %411 {strides = array<i32>} : memref<8x8xf32, #tpu.memory_space<vmem>>, vector<8x8xf32>,
    return
  }
}

</mosaic_0001>

<llo_original>
// kernel: rnn_baseline_forward.1
$region0: #{rnn_baseline_forward.1}
  #allocation0 [shape = 'u32[]', space=smem, size = 0x4, offset = 0x4, fixed_abs, tag = 'smem constant byte address 0x4 - core index']
  #allocation1 [shape = 'u32[144,128]{1,0:T(1,128)}', space=vmem, size = 0x12000, scoped, tag = 'internal scratch']
  #allocation2 [shape = 'f32[64,64]{1,0:T(8,128)}', space=vmem, size = 0x8000, scoped, tag = 'scratch operand']
  %s0 = inlined_call_operand.vmem [shape: f32[64,16], index: 0, kind: input, shape index: {}]
  %s1 = inlined_call_operand.vmem [shape: f32[16,32], index: 1, kind: input, shape index: {}]
  %s2 = inlined_call_operand.vmem [shape: f32[1,32], index: 2, kind: input, shape index: {}]
  %s3 = inlined_call_operand.vmem [shape: f32[32,256], index: 3, kind: input, shape index: {}]
  %s4 = inlined_call_operand.vmem [shape: f32[1,256], index: 4, kind: input, shape index: {}]
  %s5 = inlined_call_operand.vmem [shape: f32[64,256], index: 5, kind: input, shape index: {}]
  %s6 = inlined_call_operand.vmem [shape: f32[64,256], index: 6, kind: input, shape index: {}]
  %s7 = inlined_call_operand.vmem [shape: f32[1,256], index: 7, kind: input, shape index: {}]
  %s8 = inlined_call_operand.vmem [shape: f32[64,256], index: 8, kind: input, shape index: {}]
  %s9 = inlined_call_operand.vmem [shape: f32[64,8], index: 9, kind: input, shape index: {}]
  %s10 = inlined_call_operand.vmem [shape: f32[1,8], index: 10, kind: input, shape index: {}]
  %s11 = inlined_call_operand.vmem [shape: f32[8,8], index: 11, kind: output, shape index: {}]
  %s12 = sld [smem:[#allocation0]]
  $region54: #{rnn_baseline_forward.1} parent=0
    _
  %s14 = ssub.s32 1, %s12
  %s15 = scalar_select 0, %s14, %s12
  // Predicated region
  $region2: #{rnn_baseline_forward.1} parent=0 // pred_check
    _
  $region3: #{rnn_baseline_forward.1} parent=0 // pred_check_branch
    %17 = sbr.rel (0) target = $region5
  $region4: #{rnn_baseline_forward.1} parent=0 // pred_region
    _
  $region5: #{rnn_baseline_forward.1} parent=0 // pred_fallthru
    _
  // Predicated region
  $region6: #{rnn_baseline_forward.1} parent=0 // pred_check
    _
  $region7: #{rnn_baseline_forward.1} parent=0 // pred_check_branch
    %19 = sbr.rel (0) target = $region9
  $region8: #{rnn_baseline_forward.1} parent=0 // pred_region
    _
  $region9: #{rnn_baseline_forward.1} parent=0 // pred_fallthru
    _
  // Predicated region
  $region10: #{rnn_baseline_forward.1} parent=0 // pred_check
    _
  $region11: #{rnn_baseline_forward.1} parent=0 // pred_check_branch
    %21 = sbr.rel (0) target = $region13
  $region12: #{rnn_baseline_forward.1} parent=0 // pred_region
    _
  $region13: #{rnn_baseline_forward.1} parent=0 // pred_fallthru
    _
  // Predicated region
  $region14: #{rnn_baseline_forward.1} parent=0 // pred_check
    _
  $region15: #{rnn_baseline_forward.1} parent=0 // pred_check_branch
    %23 = sbr.rel (0) target = $region17
  $region16: #{rnn_baseline_forward.1} parent=0 // pred_region
    _
  $region17: #{rnn_baseline_forward.1} parent=0 // pred_fallthru
    _
  // Predicated region
  $region18: #{rnn_baseline_forward.1} parent=0 // pred_check
    _
  $region19: #{rnn_baseline_forward.1} parent=0 // pred_check_branch
    %25 = sbr.rel (0) target = $region21
  $region20: #{rnn_baseline_forward.1} parent=0 // pred_region
    _
  $region21: #{rnn_baseline_forward.1} parent=0 // pred_fallthru
    _
  // Predicated region
  $region22: #{rnn_baseline_forward.1} parent=0 // pred_check
    _
  $region23: #{rnn_baseline_forward.1} parent=0 // pred_check_branch
    %27 = sbr.rel (0) target = $region25
  $region24: #{rnn_baseline_forward.1} parent=0 // pred_region
    _
  $region25: #{rnn_baseline_forward.1} parent=0 // pred_fallthru
    _
  // Predicated region
  $region26: #{rnn_baseline_forward.1} parent=0 // pred_check
    _
  $region27: #{rnn_baseline_forward.1} parent=0 // pred_check_branch
    %29 = sbr.rel (0) target = $region29
  $region28: #{rnn_baseline_forward.1} parent=0 // pred_region
    _
  $region29: #{rnn_baseline_forward.1} parent=0 // pred_fallthru
    _
  // Predicated region
  $region30: #{rnn_baseline_forward.1} parent=0 // pred_check
    _
  $region31: #{rnn_baseline_forward.1} parent=0 // pred_check_branch
    %31 = sbr.rel (0) target = $region33
  $region32: #{rnn_baseline_forward.1} parent=0 // pred_region
    _
  $region33: #{rnn_baseline_forward.1} parent=0 // pred_fallthru
    _
  // Predicated region
  $region34: #{rnn_baseline_forward.1} parent=0 // pred_check
    _
  $region35: #{rnn_baseline_forward.1} parent=0 // pred_check_branch
    %33 = sbr.rel (0) target = $region37
  $region36: #{rnn_baseline_forward.1} parent=0 // pred_region
    _
  $region37: #{rnn_baseline_forward.1} parent=0 // pred_fallthru
    _
  // Predicated region
  $region38: #{rnn_baseline_forward.1} parent=0 // pred_check
    _
  $region39: #{rnn_baseline_forward.1} parent=0 // pred_check_branch
    %35 = sbr.rel (0) target = $region41
  $region40: #{rnn_baseline_forward.1} parent=0 // pred_region
    _
  $region41: #{rnn_baseline_forward.1} parent=0 // pred_fallthru
    _
  // Predicated region
  $region42: #{rnn_baseline_forward.1} parent=0 // pred_check
    _
  $region43: #{rnn_baseline_forward.1} parent=0 // pred_check_branch
    %37 = sbr.rel (0) target = $region45
  $region44: #{rnn_baseline_forward.1} parent=0 // pred_region
    _
  $region45: #{rnn_baseline_forward.1} parent=0 // pred_fallthru
    _
  %v38 = vlaneseq
  %v39 = vand.u32 %v38, 127
  %v40 = vadd.s32 %v39, 128
  %vm41 = vcmp.lt.s32.totalorder %v39, 0
  %v42 = vsub.s32 0, %v39
  %v43 = vsel %vm41, %v42, %v39
  %v44 = vshrl.u32 %v43, 6
  %v45 = vand.u32 %v43, 63
  %v46 = vsub.s32 0, %v45
  %v47 = vsel %vm41, %v46, %v45
  %vm48 = vcmp.lt.s32.totalorder %v40, 0
  %v49 = vsub.s32 0, %v40
  %v50 = vsel %vm48, %v49, %v40
  %v51 = vshrl.u32 %v50, 6
  %v52 = vand.u32 %v50, 63
  %v53 = vsub.s32 0, %v52
  %v54 = vsel %vm48, %v53, %v52
  %vm55 = vcmp.ne.s32.totalorder %v47, 0
  %vm56 = vcmp.ne.s32.totalorder %v54, 0
  %vm57 = vcmp.lt.s32.totalorder %v47, 0
  %vm58 = vcmp.lt.s32.totalorder %v54, 0
  %vm59 = vmand %vm57, %vm55
  %vm60 = vmand %vm58, %vm56
  %v61 = vadd.s32 %v47, 64
  %v62 = vadd.s32 %v54, 64
  %v63 = vsel %vm59, %v61, %v47
  %v64 = vsel %vm60, %v62, %v54
  %vm65 = vcmp.lt.s32.totalorder %v63, 32
  %vm66 = vcmp.lt.s32.totalorder %v64, 32
  %v67 = vld [vmem:[%s0] sm:$0xff]
  %v68 = vld [vmem:[%s0 + $0x8] sm:$0xff]
  %v69 = vld [vmem:[%s0 + $0x10] sm:$0xff]
  %v70 = vld [vmem:[%s0 + $0x18] sm:$0xff]
  %v71 = vld [vmem:[%s0 + $0x20] sm:$0xff]
  %v72 = vld [vmem:[%s0 + $0x28] sm:$0xff]
  %v73 = vld [vmem:[%s0 + $0x30] sm:$0xff]
  %v74 = vld [vmem:[%s0 + $0x38] sm:$0xff]
  %v75 = vld [vmem:[%s1] sm:$0xff]
  %v76 = vld [vmem:[%s1 + $0x8] sm:$0xff]
  %v77 = vld [vmem:[%s2] sm:$0x1]
  %v79 = vlaneseq
  %v80 = vshrl.u32 %v79, 7
  %v81 = vsub.s32 0, %v80
  %v82 = vrot.slane %v77, %v81
  %vm84 = vcmask 130048
  %v86 = vsel %vm84, %v67, 0
  %v89 = vsel %vm84, %v68, 0
  %v92 = vsel %vm84, %v69, 0
  %v95 = vsel %vm84, %v70, 0
  %v98 = vsel %vm84, %v71, 0
  %v101 = vsel %vm84, %v72, 0
  %v104 = vsel %vm84, %v73, 0
  %v107 = vsel %vm84, %v74, 0
  %109 = vmatprep.subr.mxu0 0.0
  %110 = vmatpush1.msra.mxu0 0.0
  %111 = vmatprep.subr.mxu0 0.0
  %112 = vmatpush1.msra.mxu0 0.0
  %113 = vmatprep.subr.mxu0 0.0
  %114 = vmatpush1.msra.mxu0 0.0
  %115 = vmatprep.subr.mxu0 0.0
  %116 = vmatpush1.msra.mxu0 0.0
  %117 = vmatprep.subr.mxu0 0.0
  %118 = vmatpush1.msra.mxu0 0.0
  %119 = vmatprep.subr.mxu0 0.0
  %120 = vmatpush1.msra.mxu0 0.0
  %121 = vmatprep.subr.mxu0 0.0
  %122 = vmatpush1.msra.mxu0 0.0
  %123 = vmatprep.subr.mxu0 0.0
  %124 = vmatpush1.msra.mxu0 0.0
  %125 = vmatprep.subr.mxu0 0.0
  %126 = vmatpush1.msra.mxu0 0.0
  %127 = vmatprep.subr.mxu0 0.0
  %128 = vmatpush1.msra.mxu0 0.0
  %129 = vmatprep.subr.mxu0 0.0
  %130 = vmatpush1.msra.mxu0 0.0
  %131 = vmatprep.subr.mxu0 0.0
  %132 = vmatpush1.msra.mxu0 0.0
  %133 = vmatprep.subr.mxu0 0.0
  %134 = vmatpush1.msra.mxu0 0.0
  %135 = vmatprep.subr.mxu0 0.0
  %136 = vmatpush1.msra.mxu0 0.0
  %137 = vmatprep.subr.mxu0 0.0
  %138 = vmatpush1.msra.mxu0 %v76
  %139 = vmatprep.subr.mxu0 0.0
  %140 = vmatpush1.msra.mxu0 %v75
  %141 = vmatprep.subr.mxu0 0.0
  %142 = vmatpush2.msra.mxu0 0.0
  %143 = vmatprep.subr.mxu0 0.0
  %144 = vmatpush2.msra.mxu0 0.0
  %145 = vmatprep.subr.mxu0 0.0
  %146 = vmatpush2.msra.mxu0 0.0
  %147 = vmatprep.subr.mxu0 0.0
  %148 = vmatpush2.msra.mxu0 0.0
  %149 = vmatprep.subr.mxu0 0.0
  %150 = vmatpush2.msra.mxu0 0.0
  %151 = vmatprep.subr.mxu0 0.0
  %152 = vmatpush2.msra.mxu0 0.0
  %153 = vmatprep.subr.mxu0 0.0
  %154 = vmatpush2.msra.mxu0 0.0
  %155 = vmatprep.subr.mxu0 0.0
  %156 = vmatpush2.msra.mxu0 0.0
  %157 = vmatprep.subr.mxu0 0.0
  %158 = vmatpush2.msra.mxu0 0.0
  %159 = vmatprep.subr.mxu0 0.0
  %160 = vmatpush2.msra.mxu0 0.0
  %161 = vmatprep.subr.mxu0 0.0
  %162 = vmatpush2.msra.mxu0 0.0
  %163 = vmatprep.subr.mxu0 0.0
  %164 = vmatpush2.msra.mxu0 0.0
  %165 = vmatprep.subr.mxu0 0.0
  %166 = vmatpush2.msra.mxu0 0.0
  %167 = vmatprep.subr.mxu0 0.0
  %168 = vmatpush2.msra.mxu0 0.0
  %169 = vmatprep.subr.mxu0 0.0
  %170 = vmatpush2.msra.mxu0 0.0
  %171 = vmatprep.subr.mxu0 0.0
  %172 = vmatpush2.msra.mxu0 0.0
  %173 = vmatprep.mubr.f32.mxu0 0.0
  %174 = vmatmul.mubr.f32.gmra.mxu0 %v86
  %v175 = vpop.f32.mrf.mxu0
  %v176 = vadd.f32 %v82, %v175
  %v177 = vpop.f32.mrf.mxu0
  %178 = vmatprep.mubr.f32.mxu0 0.0
  %179 = vmatmul.mubr.f32.gmra.mxu0 %v89
  %v180 = vpop.f32.mrf.mxu0
  %v181 = vadd.f32 %v82, %v180
  %v182 = vpop.f32.mrf.mxu0
  %183 = vmatprep.mubr.f32.mxu0 0.0
  %184 = vmatmul.mubr.f32.gmra.mxu0 %v92
  %v185 = vpop.f32.mrf.mxu0
  %v186 = vadd.f32 %v82, %v185
  %v187 = vpop.f32.mrf.mxu0
  %188 = vmatprep.mubr.f32.mxu0 0.0
  %189 = vmatmul.mubr.f32.gmra.mxu0 %v95
  %v190 = vpop.f32.mrf.mxu0
  %v191 = vadd.f32 %v82, %v190
  %v192 = vpop.f32.mrf.mxu0
  %193 = vmatprep.mubr.f32.mxu0 0.0
  %194 = vmatmul.mubr.f32.gmra.mxu0 %v98
  %v195 = vpop.f32.mrf.mxu0
  %v196 = vadd.f32 %v82, %v195
  %v197 = vpop.f32.mrf.mxu0
  %198 = vmatprep.mubr.f32.mxu0 0.0
  %199 = vmatmul.mubr.f32.gmra.mxu0 %v101
  %v200 = vpop.f32.mrf.mxu0
  %v201 = vadd.f32 %v82, %v200
  %v202 = vpop.f32.mrf.mxu0
  %203 = vmatprep.mubr.f32.mxu0 0.0
  %204 = vmatmul.mubr.f32.gmra.mxu0 %v104
  %v205 = vpop.f32.mrf.mxu0
  %v206 = vadd.f32 %v82, %v205
  %v207 = vpop.f32.mrf.mxu0
  %208 = vmatprep.mubr.f32.mxu0 0.0
  %209 = vmatmul.mubr.f32.gmra.mxu0 %v107
  %v210 = vpop.f32.mrf.mxu0
  %v211 = vadd.f32 %v82, %v210
  %v212 = vpop.f32.mrf.mxu0
  %213 = vdwg.mxu0
  %v214 = vld [vmem:[%s3] sm:$0xff]
  %v215 = vld [vmem:[%s3 + $0x8] sm:$0xff]
  %v216 = vld [vmem:[%s3 + $0x10] sm:$0xff]
  %v217 = vld [vmem:[%s3 + $0x18] sm:$0xff]
  %v218 = vld [vmem:[%s3 + $0x20] sm:$0xff]
  %v219 = vld [vmem:[%s3 + $0x28] sm:$0xff]
  %v220 = vld [vmem:[%s3 + $0x30] sm:$0xff]
  %v221 = vld [vmem:[%s3 + $0x38] sm:$0xff]
  %v222 = vld [vmem:[%s4] sm:$0x3]
  %v224 = vlaneseq
  %v225 = vshrl.u32 %v224, 7
  %v226 = vsub.s32 0, %v225
  %v227 = vrot.slane %v222, %v226
  %v228 = vlaneseq
  %v229 = vshrl.u32 %v228, 7
  %v230 = vsub.s32 1, %v229
  %v231 = vrot.slane %v222, %v230
  %vm234 = vcmask 261120
  %v236 = vsel %vm234, %v176, 0
  %v239 = vsel %vm234, %v181, 0
  %v242 = vsel %vm234, %v186, 0
  %v245 = vsel %vm234, %v191, 0
  %v248 = vsel %vm234, %v196, 0
  %v251 = vsel %vm234, %v201, 0
  %v254 = vsel %vm234, %v206, 0
  %v257 = vsel %vm234, %v211, 0
  %259 = vmatprep.subr.mxu0 0.0
  %260 = vmatpush1.msra.mxu0 0.0
  %261 = vmatprep.subr.mxu0 0.0
  %262 = vmatpush1.msra.mxu0 0.0
  %263 = vmatprep.subr.mxu0 0.0
  %264 = vmatpush1.msra.mxu0 0.0
  %265 = vmatprep.subr.mxu0 0.0
  %266 = vmatpush1.msra.mxu0 0.0
  %267 = vmatprep.subr.mxu0 0.0
  %268 = vmatpush1.msra.mxu0 0.0
  %269 = vmatprep.subr.mxu0 0.0
  %270 = vmatpush1.msra.mxu0 0.0
  %271 = vmatprep.subr.mxu0 0.0
  %272 = vmatpush1.msra.mxu0 0.0
  %273 = vmatprep.subr.mxu0 0.0
  %274 = vmatpush1.msra.mxu0 0.0
  %275 = vmatprep.subr.mxu0 0.0
  %276 = vmatpush1.msra.mxu0 0.0
  %277 = vmatprep.subr.mxu0 0.0
  %278 = vmatpush1.msra.mxu0 0.0
  %279 = vmatprep.subr.mxu0 0.0
  %280 = vmatpush1.msra.mxu0 0.0
  %281 = vmatprep.subr.mxu0 0.0
  %282 = vmatpush1.msra.mxu0 0.0
  %283 = vmatprep.subr.mxu0 %v221
  %284 = vmatpush1.msra.mxu0 %v220
  %285 = vmatprep.subr.mxu0 %v219
  %286 = vmatpush1.msra.mxu0 %v218
  %287 = vmatprep.subr.mxu0 %v217
  %288 = vmatpush1.msra.mxu0 %v216
  %289 = vmatprep.subr.mxu0 %v215
  %290 = vmatpush1.msra.mxu0 %v214
  %291 = vmatprep.subr.mxu0 0.0
  %292 = vmatpush2.msra.mxu0 0.0
  %293 = vmatprep.subr.mxu0 0.0
  %294 = vmatpush2.msra.mxu0 0.0
  %295 = vmatprep.subr.mxu0 0.0
  %296 = vmatpush2.msra.mxu0 0.0
  %297 = vmatprep.subr.mxu0 0.0
  %298 = vmatpush2.msra.mxu0 0.0
  %299 = vmatprep.subr.mxu0 0.0
  %300 = vmatpush2.msra.mxu0 0.0
  %301 = vmatprep.subr.mxu0 0.0
  %302 = vmatpush2.msra.mxu0 0.0
  %303 = vmatprep.subr.mxu0 0.0
  %304 = vmatpush2.msra.mxu0 0.0
  %305 = vmatprep.subr.mxu0 0.0
  %306 = vmatpush2.msra.mxu0 0.0
  %307 = vmatprep.subr.mxu0 0.0
  %308 = vmatpush2.msra.mxu0 0.0
  %309 = vmatprep.subr.mxu0 0.0
  %310 = vmatpush2.msra.mxu0 0.0
  %311 = vmatprep.subr.mxu0 0.0
  %312 = vmatpush2.msra.mxu0 0.0
  %313 = vmatprep.subr.mxu0 0.0
  %314 = vmatpush2.msra.mxu0 0.0
  %315 = vmatprep.subr.mxu0 0.0
  %316 = vmatpush2.msra.mxu0 0.0
  %317 = vmatprep.subr.mxu0 0.0
  %318 = vmatpush2.msra.mxu0 0.0
  %319 = vmatprep.subr.mxu0 0.0
  %320 = vmatpush2.msra.mxu0 0.0
  %321 = vmatprep.subr.mxu0 0.0
  %322 = vmatpush2.msra.mxu0 0.0
  %323 = vmatprep.mubr.f32.mxu0 0.0
  %324 = vmatmul.mubr.f32.gmra.mxu0 %v236
  %v325 = vpop.f32.mrf.mxu0
  %v326 = vadd.f32 %v227, %v325
  %v327 = vpop.f32.mrf.mxu0
  %v328 = vadd.f32 %v231, %v327
  %329 = vmatprep.mubr.f32.mxu0 0.0
  %330 = vmatmul.mubr.f32.gmra.mxu0 %v239
  %v331 = vpop.f32.mrf.mxu0
  %v332 = vadd.f32 %v227, %v331
  %v333 = vpop.f32.mrf.mxu0
  %v334 = vadd.f32 %v231, %v333
  %335 = vmatprep.mubr.f32.mxu0 0.0
  %336 = vmatmul.mubr.f32.gmra.mxu0 %v242
  %v337 = vpop.f32.mrf.mxu0
  %v338 = vadd.f32 %v227, %v337
  %v339 = vpop.f32.mrf.mxu0
  %v340 = vadd.f32 %v231, %v339
  %341 = vmatprep.mubr.f32.mxu0 0.0
  %342 = vmatmul.mubr.f32.gmra.mxu0 %v245
  %v343 = vpop.f32.mrf.mxu0
  %v344 = vadd.f32 %v227, %v343
  %v345 = vpop.f32.mrf.mxu0
  %v346 = vadd.f32 %v231, %v345
  %347 = vmatprep.mubr.f32.mxu0 0.0
  %348 = vmatmul.mubr.f32.gmra.mxu0 %v248
  %v349 = vpop.f32.mrf.mxu0
  %v350 = vadd.f32 %v227, %v349
  %v351 = vpop.f32.mrf.mxu0
  %v352 = vadd.f32 %v231, %v351
  %353 = vmatprep.mubr.f32.mxu0 0.0
  %354 = vmatmul.mubr.f32.gmra.mxu0 %v251
  %v355 = vpop.f32.mrf.mxu0
  %v356 = vadd.f32 %v227, %v355
  %v357 = vpop.f32.mrf.mxu0
  %v358 = vadd.f32 %v231, %v357
  %359 = vmatprep.mubr.f32.mxu0 0.0
  %360 = vmatmul.mubr.f32.gmra.mxu0 %v254
  %v361 = vpop.f32.mrf.mxu0
  %v362 = vadd.f32 %v227, %v361
  %v363 = vpop.f32.mrf.mxu0
  %v364 = vadd.f32 %v231, %v363
  %365 = vmatprep.mubr.f32.mxu0 0.0
  %366 = vmatmul.mubr.f32.gmra.mxu0 %v257
  %v367 = vpop.f32.mrf.mxu0
  %v368 = vadd.f32 %v227, %v367
  %v369 = vpop.f32.mrf.mxu0
  %v370 = vadd.f32 %v231, %v369
  %371 = vdwg.mxu0
  %v372 = vsel %vm65, %v326, %v368
  %v373 = vsel %vm66, %v328, %v370
  %v374 = vsel %vm65, %v332, %v362
  %v375 = vsel %vm66, %v334, %v364
  %v376 = vsel %vm65, %v338, %v356
  %v377 = vsel %vm66, %v340, %v358
  %v378 = vsel %vm65, %v344, %v350
  %v379 = vsel %vm66, %v346, %v352
  %v380 = vsel %vm65, %v350, %v344
  %v381 = vsel %vm66, %v352, %v346
  %v382 = vsel %vm65, %v356, %v338
  %v383 = vsel %vm66, %v358, %v340
  %v384 = vsel %vm65, %v362, %v332
  %v385 = vsel %vm66, %v364, %v334
  %v386 = vsel %vm65, %v368, %v326
  %v387 = vsel %vm66, %v370, %v328
  %v388 = vld [vmem:[%s5] sm:$0xff]
  %v389 = vld [vmem:[%s5 + $0x8] sm:$0xff]
  %v390 = vld [vmem:[%s5 + $0x10] sm:$0xff]
  %v391 = vld [vmem:[%s5 + $0x18] sm:$0xff]
  %v392 = vld [vmem:[%s5 + $0x20] sm:$0xff]
  %v393 = vld [vmem:[%s5 + $0x28] sm:$0xff]
  %v394 = vld [vmem:[%s5 + $0x30] sm:$0xff]
  %v395 = vld [vmem:[%s5 + $0x38] sm:$0xff]
  %v396 = vld [vmem:[%s5 + $0x40] sm:$0xff]
  %v397 = vld [vmem:[%s5 + $0x48] sm:$0xff]
  %v398 = vld [vmem:[%s5 + $0x50] sm:$0xff]
  %v399 = vld [vmem:[%s5 + $0x58] sm:$0xff]
  %v400 = vld [vmem:[%s5 + $0x60] sm:$0xff]
  %v401 = vld [vmem:[%s5 + $0x68] sm:$0xff]
  %v402 = vld [vmem:[%s5 + $0x70] sm:$0xff]
  %v403 = vld [vmem:[%s5 + $0x78] sm:$0xff]
  %vm404 = vcmask 523264
  %v406 = vsel %vm404, 0.0, 0
  %408 = vmatprep.subr.mxu0 0.0
  %409 = vmatpush1.msra.mxu0 0.0
  %410 = vmatprep.subr.mxu0 0.0
  %411 = vmatpush1.msra.mxu0 0.0
  %412 = vmatprep.subr.mxu0 0.0
  %413 = vmatpush1.msra.mxu0 0.0
  %414 = vmatprep.subr.mxu0 0.0
  %415 = vmatpush1.msra.mxu0 0.0
  %416 = vmatprep.subr.mxu0 0.0
  %417 = vmatpush1.msra.mxu0 0.0
  %418 = vmatprep.subr.mxu0 0.0
  %419 = vmatpush1.msra.mxu0 0.0
  %420 = vmatprep.subr.mxu0 0.0
  %421 = vmatpush1.msra.mxu0 0.0
  %422 = vmatprep.subr.mxu0 0.0
  %423 = vmatpush1.msra.mxu0 0.0
  %424 = vmatprep.subr.mxu0 %v403
  %425 = vmatpush1.msra.mxu0 %v402
  %426 = vmatprep.subr.mxu0 %v401
  %427 = vmatpush1.msra.mxu0 %v400
  %428 = vmatprep.subr.mxu0 %v399
  %429 = vmatpush1.msra.mxu0 %v398
  %430 = vmatprep.subr.mxu0 %v397
  %431 = vmatpush1.msra.mxu0 %v396
  %432 = vmatprep.subr.mxu0 %v395
  %433 = vmatpush1.msra.mxu0 %v394
  %434 = vmatprep.subr.mxu0 %v393
  %435 = vmatpush1.msra.mxu0 %v392
  %436 = vmatprep.subr.mxu0 %v391
  %437 = vmatpush1.msra.mxu0 %v390
  %438 = vmatprep.subr.mxu0 %v389
  %439 = vmatpush1.msra.mxu0 %v388
  %440 = vmatprep.subr.mxu0 0.0
  %441 = vmatpush2.msra.mxu0 0.0
  %442 = vmatprep.subr.mxu0 0.0
  %443 = vmatpush2.msra.mxu0 0.0
  %444 = vmatprep.subr.mxu0 0.0
  %445 = vmatpush2.msra.mxu0 0.0
  %446 = vmatprep.subr.mxu0 0.0
  %447 = vmatpush2.msra.mxu0 0.0
  %448 = vmatprep.subr.mxu0 0.0
  %449 = vmatpush2.msra.mxu0 0.0
  %450 = vmatprep.subr.mxu0 0.0
  %451 = vmatpush2.msra.mxu0 0.0
  %452 = vmatprep.subr.mxu0 0.0
  %453 = vmatpush2.msra.mxu0 0.0
  %454 = vmatprep.subr.mxu0 0.0
  %455 = vmatpush2.msra.mxu0 0.0
  %456 = vmatprep.subr.mxu0 0.0
  %457 = vmatpush2.msra.mxu0 0.0
  %458 = vmatprep.subr.mxu0 0.0
  %459 = vmatpush2.msra.mxu0 0.0
  %460 = vmatprep.subr.mxu0 0.0
  %461 = vmatpush2.msra.mxu0 0.0
  %462 = vmatprep.subr.mxu0 0.0
  %463 = vmatpush2.msra.mxu0 0.0
  %464 = vmatprep.subr.mxu0 0.0
  %465 = vmatpush2.msra.mxu0 0.0
  %466 = vmatprep.subr.mxu0 0.0
  %467 = vmatpush2.msra.mxu0 0.0
  %468 = vmatprep.subr.mxu0 0.0
  %469 = vmatpush2.msra.mxu0 0.0
  %470 = vmatprep.subr.mxu0 0.0
  %471 = vmatpush2.msra.mxu0 0.0
  %472 = vmatprep.mubr.f32.mxu0 0.0
  %473 = vmatmul.mubr.f32.gmra.mxu0 %v406
  %v474 = vpop.f32.mrf.mxu0
  %v475 = vadd.f32 %v372, %v474
  %v476 = vpop.f32.mrf.mxu0
  %v477 = vadd.f32 %v373, %v476
  %478 = vdwg.mxu0
  %v479 = vxor.u32 %v475, 2147483648
  %v480 = vxor.u32 %v477, 2147483648
  %v481 = vmul.f32 %v479, 1.442695
  %v482 = vpow.pop %v481
  %v483 = vmul.f32 %v480, 1.442695
  %v484 = vpow.pop %v483
  %v485 = vadd.f32 %v482, 1.0
  %v486 = vadd.f32 %v484, 1.0
  %v487 = vrcp.pop %v485
  %v488 = vmul.f32 1.0, %v487
  %v489 = vrcp.pop %v486
  %v490 = vmul.f32 1.0, %v489
  %v491 = vtanh.pop %v477
  %v492 = vmul.f32 %v488, 0.0
  %494 = vrot.lane.b32.xlu0 %v491, 64
  %v495 = vpop.permute.xlu0 %494
  %v497 = vmul.f32 %v488, %v495
  %499 = vrot.lane.b32.xlu0 %v497, 64
  %v500 = vpop.permute.xlu0 %499
  %v502 = vadd.f32 %v492, %v500
  %v503 = vtanh.pop %v502
  %505 = vrot.lane.b32.xlu0 %v503, 64
  %v506 = vpop.permute.xlu0 %505
  %v508 = vmul.f32 %v490, %v506
  %509 = vst.msk [vmem:[#allocation2] sm:$0xff] %vm234, %v508
  %vm510 = vcmask 523520
  %511 = vst.msk [vmem:[#allocation2 + $0x38] sm:$0xff] %vm510, %v508
  %v513 = vsel %vm404, %v508, 0
  %515 = vmatprep.subr.mxu0 0.0
  %516 = vmatpush1.msra.mxu0 0.0
  %517 = vmatprep.subr.mxu0 0.0
  %518 = vmatpush1.msra.mxu0 0.0
  %519 = vmatprep.subr.mxu0 0.0
  %520 = vmatpush1.msra.mxu0 0.0
  %521 = vmatprep.subr.mxu0 0.0
  %522 = vmatpush1.msra.mxu0 0.0
  %523 = vmatprep.subr.mxu0 0.0
  %524 = vmatpush1.msra.mxu0 0.0
  %525 = vmatprep.subr.mxu0 0.0
  %526 = vmatpush1.msra.mxu0 0.0
  %527 = vmatprep.subr.mxu0 0.0
  %528 = vmatpush1.msra.mxu0 0.0
  %529 = vmatprep.subr.mxu0 0.0
  %530 = vmatpush1.msra.mxu0 0.0
  %531 = vmatprep.subr.mxu0 %v403
  %532 = vmatpush1.msra.mxu0 %v402
  %533 = vmatprep.subr.mxu0 %v401
  %534 = vmatpush1.msra.mxu0 %v400
  %535 = vmatprep.subr.mxu0 %v399
  %536 = vmatpush1.msra.mxu0 %v398
  %537 = vmatprep.subr.mxu0 %v397
  %538 = vmatpush1.msra.mxu0 %v396
  %539 = vmatprep.subr.mxu0 %v395
  %540 = vmatpush1.msra.mxu0 %v394
  %541 = vmatprep.subr.mxu0 %v393
  %542 = vmatpush1.msra.mxu0 %v392
  %543 = vmatprep.subr.mxu0 %v391
  %544 = vmatpush1.msra.mxu0 %v390
  %545 = vmatprep.subr.mxu0 %v389
  %546 = vmatpush1.msra.mxu0 %v388
  %547 = vmatprep.subr.mxu0 0.0
  %548 = vmatpush2.msra.mxu0 0.0
  %549 = vmatprep.subr.mxu0 0.0
  %550 = vmatpush2.msra.mxu0 0.0
  %551 = vmatprep.subr.mxu0 0.0
  %552 = vmatpush2.msra.mxu0 0.0
  %553 = vmatprep.subr.mxu0 0.0
  %554 = vmatpush2.msra.mxu0 0.0
  %555 = vmatprep.subr.mxu0 0.0
  %556 = vmatpush2.msra.mxu0 0.0
  %557 = vmatprep.subr.mxu0 0.0
  %558 = vmatpush2.msra.mxu0 0.0
  %559 = vmatprep.subr.mxu0 0.0
  %560 = vmatpush2.msra.mxu0 0.0
  %561 = vmatprep.subr.mxu0 0.0
  %562 = vmatpush2.msra.mxu0 0.0
  %563 = vmatprep.subr.mxu0 0.0
  %564 = vmatpush2.msra.mxu0 0.0
  %565 = vmatprep.subr.mxu0 0.0
  %566 = vmatpush2.msra.mxu0 0.0
  %567 = vmatprep.subr.mxu0 0.0
  %568 = vmatpush2.msra.mxu0 0.0
  %569 = vmatprep.subr.mxu0 0.0
  %570 = vmatpush2.msra.mxu0 0.0
  %571 = vmatprep.subr.mxu0 0.0
  %572 = vmatpush2.msra.mxu0 0.0
  %573 = vmatprep.subr.mxu0 0.0
  %574 = vmatpush2.msra.mxu0 0.0
  %575 = vmatprep.subr.mxu0 0.0
  %576 = vmatpush2.msra.mxu0 0.0
  %577 = vmatprep.subr.mxu0 0.0
  %578 = vmatpush2.msra.mxu0 0.0
  %579 = vmatprep.mubr.f32.mxu0 0.0
  %580 = vmatmul.mubr.f32.gmra.mxu0 %v513
  %v581 = vpop.f32.mrf.mxu0
  %v582 = vadd.f32 %v374, %v581
  %v583 = vpop.f32.mrf.mxu0
  %v584 = vadd.f32 %v375, %v583
  %585 = vdwg.mxu0
  %v586 = vxor.u32 %v582, 2147483648
  %v587 = vxor.u32 %v584, 2147483648
  %v588 = vmul.f32 %v586, 1.442695
  %v589 = vpow.pop %v588
  %v590 = vmul.f32 %v587, 1.442695
  %v591 = vpow.pop %v590
  %v592 = vadd.f32 %v589, 1.0
  %v593 = vadd.f32 %v591, 1.0
  %v594 = vrcp.pop %v592
  %v595 = vmul.f32 1.0, %v594
  %v596 = vrcp.pop %v593
  %v597 = vmul.f32 1.0, %v596
  %v598 = vtanh.pop %v584
  %v599 = vmul.f32 %v595, %v502
  %601 = vrot.lane.b32.xlu0 %v598, 64
  %v602 = vpop.permute.xlu0 %601
  %v604 = vmul.f32 %v595, %v602
  %606 = vrot.lane.b32.xlu0 %v604, 64
  %v607 = vpop.permute.xlu0 %606
  %v609 = vadd.f32 %v599, %v607
  %v610 = vtanh.pop %v609
  %612 = vrot.lane.b32.xlu0 %v610, 64
  %v613 = vpop.permute.xlu0 %612
  %v615 = vmul.f32 %v597, %v613
  %616 = vst.msk [vmem:[#allocation2 + $0x8] sm:$0xff] %vm234, %v615
  %617 = vst.msk [vmem:[#allocation2 + $0x30] sm:$0xff] %vm510, %v615
  %v619 = vsel %vm404, %v615, 0
  %621 = vmatprep.subr.mxu0 0.0
  %622 = vmatpush1.msra.mxu0 0.0
  %623 = vmatprep.subr.mxu0 0.0
  %624 = vmatpush1.msra.mxu0 0.0
  %625 = vmatprep.subr.mxu0 0.0
  %626 = vmatpush1.msra.mxu0 0.0
  %627 = vmatprep.subr.mxu0 0.0
  %628 = vmatpush1.msra.mxu0 0.0
  %629 = vmatprep.subr.mxu0 0.0
  %630 = vmatpush1.msra.mxu0 0.0
  %631 = vmatprep.subr.mxu0 0.0
  %632 = vmatpush1.msra.mxu0 0.0
  %633 = vmatprep.subr.mxu0 0.0
  %634 = vmatpush1.msra.mxu0 0.0
  %635 = vmatprep.subr.mxu0 0.0
  %636 = vmatpush1.msra.mxu0 0.0
  %637 = vmatprep.subr.mxu0 %v403
  %638 = vmatpush1.msra.mxu0 %v402
  %639 = vmatprep.subr.mxu0 %v401
  %640 = vmatpush1.msra.mxu0 %v400
  %641 = vmatprep.subr.mxu0 %v399
  %642 = vmatpush1.msra.mxu0 %v398
  %643 = vmatprep.subr.mxu0 %v397
  %644 = vmatpush1.msra.mxu0 %v396
  %645 = vmatprep.subr.mxu0 %v395
  %646 = vmatpush1.msra.mxu0 %v394
  %647 = vmatprep.subr.mxu0 %v393
  %648 = vmatpush1.msra.mxu0 %v392
  %649 = vmatprep.subr.mxu0 %v391
  %650 = vmatpush1.msra.mxu0 %v390
  %651 = vmatprep.subr.mxu0 %v389
  %652 = vmatpush1.msra.mxu0 %v388
  %653 = vmatprep.subr.mxu0 0.0
  %654 = vmatpush2.msra.mxu0 0.0
  %655 = vmatprep.subr.mxu0 0.0
  %656 = vmatpush2.msra.mxu0 0.0
  %657 = vmatprep.subr.mxu0 0.0
  %658 = vmatpush2.msra.mxu0 0.0
  %659 = vmatprep.subr.mxu0 0.0
  %660 = vmatpush2.msra.mxu0 0.0
  %661 = vmatprep.subr.mxu0 0.0
  %662 = vmatpush2.msra.mxu0 0.0
  %663 = vmatprep.subr.mxu0 0.0
  %664 = vmatpush2.msra.mxu0 0.0
  %665 = vmatprep.subr.mxu0 0.0
  %666 = vmatpush2.msra.mxu0 0.0
  %667 = vmatprep.subr.mxu0 0.0
  %668 = vmatpush2.msra.mxu0 0.0
  %669 = vmatprep.subr.mxu0 0.0
  %670 = vmatpush2.msra.mxu0 0.0
  %671 = vmatprep.subr.mxu0 0.0
  %672 = vmatpush2.msra.mxu0 0.0
  %673 = vmatprep.subr.mxu0 0.0
  %674 = vmatpush2.msra.mxu0 0.0
  %675 = vmatprep.subr.mxu0 0.0
  %676 = vmatpush2.msra.mxu0 0.0
  %677 = vmatprep.subr.mxu0 0.0
  %678 = vmatpush2.msra.mxu0 0.0
  %679 = vmatprep.subr.mxu0 0.0
  %680 = vmatpush2.msra.mxu0 0.0
  %681 = vmatprep.subr.mxu0 0.0
  %682 = vmatpush2.msra.mxu0 0.0
  %683 = vmatprep.subr.mxu0 0.0
  %684 = vmatpush2.msra.mxu0 0.0
  %685 = vmatprep.mubr.f32.mxu0 0.0
  %686 = vmatmul.mubr.f32.gmra.mxu0 %v619
  %v687 = vpop.f32.mrf.mxu0
  %v688 = vadd.f32 %v376, %v687
  %v689 = vpop.f32.mrf.mxu0
  %v690 = vadd.f32 %v377, %v689
  %691 = vdwg.mxu0
  %v692 = vxor.u32 %v688, 2147483648
  %v693 = vxor.u32 %v690, 2147483648
  %v694 = vmul.f32 %v692, 1.442695
  %v695 = vpow.pop %v694
  %v696 = vmul.f32 %v693, 1.442695
  %v697 = vpow.pop %v696
  %v698 = vadd.f32 %v695, 1.0
  %v699 = vadd.f32 %v697, 1.0
  %v700 = vrcp.pop %v698
  %v701 = vmul.f32 1.0, %v700
  %v702 = vrcp.pop %v699
  %v703 = vmul.f32 1.0, %v702
  %v704 = vtanh.pop %v690
  %v705 = vmul.f32 %v701, %v609
  %707 = vrot.lane.b32.xlu0 %v704, 64
  %v708 = vpop.permute.xlu0 %707
  %v710 = vmul.f32 %v701, %v708
  %712 = vrot.lane.b32.xlu0 %v710, 64
  %v713 = vpop.permute.xlu0 %712
  %v715 = vadd.f32 %v705, %v713
  %v716 = vtanh.pop %v715
  %718 = vrot.lane.b32.xlu0 %v716, 64
  %v719 = vpop.permute.xlu0 %718
  %v721 = vmul.f32 %v703, %v719
  %722 = vst.msk [vmem:[#allocation2 + $0x10] sm:$0xff] %vm234, %v721
  %723 = vst.msk [vmem:[#allocation2 + $0x28] sm:$0xff] %vm510, %v721
  %v725 = vsel %vm404, %v721, 0
  %727 = vmatprep.subr.mxu0 0.0
  %728 = vmatpush1.msra.mxu0 0.0
  %729 = vmatprep.subr.mxu0 0.0
  %730 = vmatpush1.msra.mxu0 0.0
  %731 = vmatprep.subr.mxu0 0.0
  %732 = vmatpush1.msra.mxu0 0.0
  %733 = vmatprep.subr.mxu0 0.0
  %734 = vmatpush1.msra.mxu0 0.0
  %735 = vmatprep.subr.mxu0 0.0
  %736 = vmatpush1.msra.mxu0 0.0
  %737 = vmatprep.subr.mxu0 0.0
  %738 = vmatpush1.msra.mxu0 0.0
  %739 = vmatprep.subr.mxu0 0.0
  %740 = vmatpush1.msra.mxu0 0.0
  %741 = vmatprep.subr.mxu0 0.0
  %742 = vmatpush1.msra.mxu0 0.0
  %743 = vmatprep.subr.mxu0 %v403
  %744 = vmatpush1.msra.mxu0 %v402
  %745 = vmatprep.subr.mxu0 %v401
  %746 = vmatpush1.msra.mxu0 %v400
  %747 = vmatprep.subr.mxu0 %v399
  %748 = vmatpush1.msra.mxu0 %v398
  %749 = vmatprep.subr.mxu0 %v397
  %750 = vmatpush1.msra.mxu0 %v396
  %751 = vmatprep.subr.mxu0 %v395
  %752 = vmatpush1.msra.mxu0 %v394
  %753 = vmatprep.subr.mxu0 %v393
  %754 = vmatpush1.msra.mxu0 %v392
  %755 = vmatprep.subr.mxu0 %v391
  %756 = vmatpush1.msra.mxu0 %v390
  %757 = vmatprep.subr.mxu0 %v389
  %758 = vmatpush1.msra.mxu0 %v388
  %759 = vmatprep.subr.mxu0 0.0
  %760 = vmatpush2.msra.mxu0 0.0
  %761 = vmatprep.subr.mxu0 0.0
  %762 = vmatpush2.msra.mxu0 0.0
  %763 = vmatprep.subr.mxu0 0.0
  %764 = vmatpush2.msra.mxu0 0.0
  %765 = vmatprep.subr.mxu0 0.0
  %766 = vmatpush2.msra.mxu0 0.0
  %767 = vmatprep.subr.mxu0 0.0
  %768 = vmatpush2.msra.mxu0 0.0
  %769 = vmatprep.subr.mxu0 0.0
  %770 = vmatpush2.msra.mxu0 0.0
  %771 = vmatprep.subr.mxu0 0.0
  %772 = vmatpush2.msra.mxu0 0.0
  %773 = vmatprep.subr.mxu0 0.0
  %774 = vmatpush2.msra.mxu0 0.0
  %775 = vmatprep.subr.mxu0 0.0
  %776 = vmatpush2.msra.mxu0 0.0
  %777 = vmatprep.subr.mxu0 0.0
  %778 = vmatpush2.msra.mxu0 0.0
  %779 = vmatprep.subr.mxu0 0.0
  %780 = vmatpush2.msra.mxu0 0.0
  %781 = vmatprep.subr.mxu0 0.0
  %782 = vmatpush2.msra.mxu0 0.0
  %783 = vmatprep.subr.mxu0 0.0
  %784 = vmatpush2.msra.mxu0 0.0
  %785 = vmatprep.subr.mxu0 0.0
  %786 = vmatpush2.msra.mxu0 0.0
  %787 = vmatprep.subr.mxu0 0.0
  %788 = vmatpush2.msra.mxu0 0.0
  %789 = vmatprep.subr.mxu0 0.0
  %790 = vmatpush2.msra.mxu0 0.0
  %791 = vmatprep.mubr.f32.mxu0 0.0
  %792 = vmatmul.mubr.f32.gmra.mxu0 %v725
  %v793 = vpop.f32.mrf.mxu0
  %v794 = vadd.f32 %v378, %v793
  %v795 = vpop.f32.mrf.mxu0
  %v796 = vadd.f32 %v379, %v795
  %797 = vdwg.mxu0
  %v798 = vxor.u32 %v794, 2147483648
  %v799 = vxor.u32 %v796, 2147483648
  %v800 = vmul.f32 %v798, 1.442695
  %v801 = vpow.pop %v800
  %v802 = vmul.f32 %v799, 1.442695
  %v803 = vpow.pop %v802
  %v804 = vadd.f32 %v801, 1.0
  %v805 = vadd.f32 %v803, 1.0
  %v806 = vrcp.pop %v804
  %v807 = vmul.f32 1.0, %v806
  %v808 = vrcp.pop %v805
  %v809 = vmul.f32 1.0, %v808
  %v810 = vtanh.pop %v796
  %v811 = vmul.f32 %v807, %v715
  %813 = vrot.lane.b32.xlu0 %v810, 64
  %v814 = vpop.permute.xlu0 %813
  %v816 = vmul.f32 %v807, %v814
  %818 = vrot.lane.b32.xlu0 %v816, 64
  %v819 = vpop.permute.xlu0 %818
  %v821 = vadd.f32 %v811, %v819
  %v822 = vtanh.pop %v821
  %824 = vrot.lane.b32.xlu0 %v822, 64
  %v825 = vpop.permute.xlu0 %824
  %v827 = vmul.f32 %v809, %v825
  %828 = vst.msk [vmem:[#allocation2 + $0x18] sm:$0xff] %vm234, %v827
  %829 = vst.msk [vmem:[#allocation2 + $0x20] sm:$0xff] %vm510, %v827
  %v831 = vsel %vm404, %v827, 0
  %833 = vmatprep.subr.mxu0 0.0
  %834 = vmatpush1.msra.mxu0 0.0
  %835 = vmatprep.subr.mxu0 0.0
  %836 = vmatpush1.msra.mxu0 0.0
  %837 = vmatprep.subr.mxu0 0.0
  %838 = vmatpush1.msra.mxu0 0.0
  %839 = vmatprep.subr.mxu0 0.0
  %840 = vmatpush1.msra.mxu0 0.0
  %841 = vmatprep.subr.mxu0 0.0
  %842 = vmatpush1.msra.mxu0 0.0
  %843 = vmatprep.subr.mxu0 0.0
  %844 = vmatpush1.msra.mxu0 0.0
  %845 = vmatprep.subr.mxu0 0.0
  %846 = vmatpush1.msra.mxu0 0.0
  %847 = vmatprep.subr.mxu0 0.0
  %848 = vmatpush1.msra.mxu0 0.0
  %849 = vmatprep.subr.mxu0 %v403
  %850 = vmatpush1.msra.mxu0 %v402
  %851 = vmatprep.subr.mxu0 %v401
  %852 = vmatpush1.msra.mxu0 %v400
  %853 = vmatprep.subr.mxu0 %v399
  %854 = vmatpush1.msra.mxu0 %v398
  %855 = vmatprep.subr.mxu0 %v397
  %856 = vmatpush1.msra.mxu0 %v396
  %857 = vmatprep.subr.mxu0 %v395
  %858 = vmatpush1.msra.mxu0 %v394
  %859 = vmatprep.subr.mxu0 %v393
  %860 = vmatpush1.msra.mxu0 %v392
  %861 = vmatprep.subr.mxu0 %v391
  %862 = vmatpush1.msra.mxu0 %v390
  %863 = vmatprep.subr.mxu0 %v389
  %864 = vmatpush1.msra.mxu0 %v388
  %865 = vmatprep.subr.mxu0 0.0
  %866 = vmatpush2.msra.mxu0 0.0
  %867 = vmatprep.subr.mxu0 0.0
  %868 = vmatpush2.msra.mxu0 0.0
  %869 = vmatprep.subr.mxu0 0.0
  %870 = vmatpush2.msra.mxu0 0.0
  %871 = vmatprep.subr.mxu0 0.0
  %872 = vmatpush2.msra.mxu0 0.0
  %873 = vmatprep.subr.mxu0 0.0
  %874 = vmatpush2.msra.mxu0 0.0
  %875 = vmatprep.subr.mxu0 0.0
  %876 = vmatpush2.msra.mxu0 0.0
  %877 = vmatprep.subr.mxu0 0.0
  %878 = vmatpush2.msra.mxu0 0.0
  %879 = vmatprep.subr.mxu0 0.0
  %880 = vmatpush2.msra.mxu0 0.0
  %881 = vmatprep.subr.mxu0 0.0
  %882 = vmatpush2.msra.mxu0 0.0
  %883 = vmatprep.subr.mxu0 0.0
  %884 = vmatpush2.msra.mxu0 0.0
  %885 = vmatprep.subr.mxu0 0.0
  %886 = vmatpush2.msra.mxu0 0.0
  %887 = vmatprep.subr.mxu0 0.0
  %888 = vmatpush2.msra.mxu0 0.0
  %889 = vmatprep.subr.mxu0 0.0
  %890 = vmatpush2.msra.mxu0 0.0
  %891 = vmatprep.subr.mxu0 0.0
  %892 = vmatpush2.msra.mxu0 0.0
  %893 = vmatprep.subr.mxu0 0.0
  %894 = vmatpush2.msra.mxu0 0.0
  %895 = vmatprep.subr.mxu0 0.0
  %896 = vmatpush2.msra.mxu0 0.0
  %897 = vmatprep.mubr.f32.mxu0 0.0
  %898 = vmatmul.mubr.f32.gmra.mxu0 %v831
  %v899 = vpop.f32.mrf.mxu0
  %v900 = vadd.f32 %v380, %v899
  %v901 = vpop.f32.mrf.mxu0
  %v902 = vadd.f32 %v381, %v901
  %903 = vdwg.mxu0
  %v904 = vxor.u32 %v900, 2147483648
  %v905 = vxor.u32 %v902, 2147483648
  %v906 = vmul.f32 %v904, 1.442695
  %v907 = vpow.pop %v906
  %v908 = vmul.f32 %v905, 1.442695
  %v909 = vpow.pop %v908
  %v910 = vadd.f32 %v907, 1.0
  %v911 = vadd.f32 %v909, 1.0
  %v912 = vrcp.pop %v910
  %v913 = vmul.f32 1.0, %v912
  %v914 = vrcp.pop %v911
  %v915 = vmul.f32 1.0, %v914
  %v916 = vtanh.pop %v902
  %v917 = vmul.f32 %v913, %v821
  %919 = vrot.lane.b32.xlu0 %v916, 64
  %v920 = vpop.permute.xlu0 %919
  %v922 = vmul.f32 %v913, %v920
  %924 = vrot.lane.b32.xlu0 %v922, 64
  %v925 = vpop.permute.xlu0 %924
  %v927 = vadd.f32 %v917, %v925
  %v928 = vtanh.pop %v927
  %930 = vrot.lane.b32.xlu0 %v928, 64
  %v931 = vpop.permute.xlu0 %930
  %v933 = vmul.f32 %v915, %v931
  %934 = vst.msk [vmem:[#allocation2 + $0x20] sm:$0xff] %vm234, %v933
  %935 = vst.msk [vmem:[#allocation2 + $0x18] sm:$0xff] %vm510, %v933
  %v937 = vsel %vm404, %v933, 0
  %939 = vmatprep.subr.mxu0 0.0
  %940 = vmatpush1.msra.mxu0 0.0
  %941 = vmatprep.subr.mxu0 0.0
  %942 = vmatpush1.msra.mxu0 0.0
  %943 = vmatprep.subr.mxu0 0.0
  %944 = vmatpush1.msra.mxu0 0.0
  %945 = vmatprep.subr.mxu0 0.0
  %946 = vmatpush1.msra.mxu0 0.0
  %947 = vmatprep.subr.mxu0 0.0
  %948 = vmatpush1.msra.mxu0 0.0
  %949 = vmatprep.subr.mxu0 0.0
  %950 = vmatpush1.msra.mxu0 0.0
  %951 = vmatprep.subr.mxu0 0.0
  %952 = vmatpush1.msra.mxu0 0.0
  %953 = vmatprep.subr.mxu0 0.0
  %954 = vmatpush1.msra.mxu0 0.0
  %955 = vmatprep.subr.mxu0 %v403
  %956 = vmatpush1.msra.mxu0 %v402
  %957 = vmatprep.subr.mxu0 %v401
  %958 = vmatpush1.msra.mxu0 %v400
  %959 = vmatprep.subr.mxu0 %v399
  %960 = vmatpush1.msra.mxu0 %v398
  %961 = vmatprep.subr.mxu0 %v397
  %962 = vmatpush1.msra.mxu0 %v396
  %963 = vmatprep.subr.mxu0 %v395
  %964 = vmatpush1.msra.mxu0 %v394
  %965 = vmatprep.subr.mxu0 %v393
  %966 = vmatpush1.msra.mxu0 %v392
  %967 = vmatprep.subr.mxu0 %v391
  %968 = vmatpush1.msra.mxu0 %v390
  %969 = vmatprep.subr.mxu0 %v389
  %970 = vmatpush1.msra.mxu0 %v388
  %971 = vmatprep.subr.mxu0 0.0
  %972 = vmatpush2.msra.mxu0 0.0
  %973 = vmatprep.subr.mxu0 0.0
  %974 = vmatpush2.msra.mxu0 0.0
  %975 = vmatprep.subr.mxu0 0.0
  %976 = vmatpush2.msra.mxu0 0.0
  %977 = vmatprep.subr.mxu0 0.0
  %978 = vmatpush2.msra.mxu0 0.0
  %979 = vmatprep.subr.mxu0 0.0
  %980 = vmatpush2.msra.mxu0 0.0
  %981 = vmatprep.subr.mxu0 0.0
  %982 = vmatpush2.msra.mxu0 0.0
  %983 = vmatprep.subr.mxu0 0.0
  %984 = vmatpush2.msra.mxu0 0.0
  %985 = vmatprep.subr.mxu0 0.0
  %986 = vmatpush2.msra.mxu0 0.0
  %987 = vmatprep.subr.mxu0 0.0
  %988 = vmatpush2.msra.mxu0 0.0
  %989 = vmatprep.subr.mxu0 0.0
  %990 = vmatpush2.msra.mxu0 0.0
  %991 = vmatprep.subr.mxu0 0.0
  %992 = vmatpush2.msra.mxu0 0.0
  %993 = vmatprep.subr.mxu0 0.0
  %994 = vmatpush2.msra.mxu0 0.0
  %995 = vmatprep.subr.mxu0 0.0
  %996 = vmatpush2.msra.mxu0 0.0
  %997 = vmatprep.subr.mxu0 0.0
  %998 = vmatpush2.msra.mxu0 0.0
  %999 = vmatprep.subr.mxu0 0.0
  %1000 = vmatpush2.msra.mxu0 0.0
  %1001 = vmatprep.subr.mxu0 0.0
  %1002 = vmatpush2.msra.mxu0 0.0
  %1003 = vmatprep.mubr.f32.mxu0 0.0
  %1004 = vmatmul.mubr.f32.gmra.mxu0 %v937
  %v1005 = vpop.f32.mrf.mxu0
  %v1006 = vadd.f32 %v382, %v1005
  %v1007 = vpop.f32.mrf.mxu0
  %v1008 = vadd.f32 %v383, %v1007
  %1009 = vdwg.mxu0
  %v1010 = vxor.u32 %v1006, 2147483648
  %v1011 = vxor.u32 %v1008, 2147483648
  %v1012 = vmul.f32 %v1010, 1.442695
  %v1013 = vpow.pop %v1012
  %v1014 = vmul.f32 %v1011, 1.442695
  %v1015 = vpow.pop %v1014
  %v1016 = vadd.f32 %v1013, 1.0
  %v1017 = vadd.f32 %v1015, 1.0
  %v1018 = vrcp.pop %v1016
  %v1019 = vmul.f32 1.0, %v1018
  %v1020 = vrcp.pop %v1017
  %v1021 = vmul.f32 1.0, %v1020
  %v1022 = vtanh.pop %v1008
  %v1023 = vmul.f32 %v1019, %v927
  %1025 = vrot.lane.b32.xlu0 %v1022, 64
  %v1026 = vpop.permute.xlu0 %1025
  %v1028 = vmul.f32 %v1019, %v1026
  %1030 = vrot.lane.b32.xlu0 %v1028, 64
  %v1031 = vpop.permute.xlu0 %1030
  %v1033 = vadd.f32 %v1023, %v1031
  %v1034 = vtanh.pop %v1033
  %1036 = vrot.lane.b32.xlu0 %v1034, 64
  %v1037 = vpop.permute.xlu0 %1036
  %v1039 = vmul.f32 %v1021, %v1037
  %1040 = vst.msk [vmem:[#allocation2 + $0x28] sm:$0xff] %vm234, %v1039
  %1041 = vst.msk [vmem:[#allocation2 + $0x10] sm:$0xff] %vm510, %v1039
  %v1043 = vsel %vm404, %v1039, 0
  %1045 = vmatprep.subr.mxu0 0.0
  %1046 = vmatpush1.msra.mxu0 0.0
  %1047 = vmatprep.subr.mxu0 0.0
  %1048 = vmatpush1.msra.mxu0 0.0
  %1049 = vmatprep.subr.mxu0 0.0
  %1050 = vmatpush1.msra.mxu0 0.0
  %1051 = vmatprep.subr.mxu0 0.0
  %1052 = vmatpush1.msra.mxu0 0.0
  %1053 = vmatprep.subr.mxu0 0.0
  %1054 = vmatpush1.msra.mxu0 0.0
  %1055 = vmatprep.subr.mxu0 0.0
  %1056 = vmatpush1.msra.mxu0 0.0
  %1057 = vmatprep.subr.mxu0 0.0
  %1058 = vmatpush1.msra.mxu0 0.0
  %1059 = vmatprep.subr.mxu0 0.0
  %1060 = vmatpush1.msra.mxu0 0.0
  %1061 = vmatprep.subr.mxu0 %v403
  %1062 = vmatpush1.msra.mxu0 %v402
  %1063 = vmatprep.subr.mxu0 %v401
  %1064 = vmatpush1.msra.mxu0 %v400
  %1065 = vmatprep.subr.mxu0 %v399
  %1066 = vmatpush1.msra.mxu0 %v398
  %1067 = vmatprep.subr.mxu0 %v397
  %1068 = vmatpush1.msra.mxu0 %v396
  %1069 = vmatprep.subr.mxu0 %v395
  %1070 = vmatpush1.msra.mxu0 %v394
  %1071 = vmatprep.subr.mxu0 %v393
  %1072 = vmatpush1.msra.mxu0 %v392
  %1073 = vmatprep.subr.mxu0 %v391
  %1074 = vmatpush1.msra.mxu0 %v390
  %1075 = vmatprep.subr.mxu0 %v389
  %1076 = vmatpush1.msra.mxu0 %v388
  %1077 = vmatprep.subr.mxu0 0.0
  %1078 = vmatpush2.msra.mxu0 0.0
  %1079 = vmatprep.subr.mxu0 0.0
  %1080 = vmatpush2.msra.mxu0 0.0
  %1081 = vmatprep.subr.mxu0 0.0
  %1082 = vmatpush2.msra.mxu0 0.0
  %1083 = vmatprep.subr.mxu0 0.0
  %1084 = vmatpush2.msra.mxu0 0.0
  %1085 = vmatprep.subr.mxu0 0.0
  %1086 = vmatpush2.msra.mxu0 0.0
  %1087 = vmatprep.subr.mxu0 0.0
  %1088 = vmatpush2.msra.mxu0 0.0
  %1089 = vmatprep.subr.mxu0 0.0
  %1090 = vmatpush2.msra.mxu0 0.0
  %1091 = vmatprep.subr.mxu0 0.0
  %1092 = vmatpush2.msra.mxu0 0.0
  %1093 = vmatprep.subr.mxu0 0.0
  %1094 = vmatpush2.msra.mxu0 0.0
  %1095 = vmatprep.subr.mxu0 0.0
  %1096 = vmatpush2.msra.mxu0 0.0
  %1097 = vmatprep.subr.mxu0 0.0
  %1098 = vmatpush2.msra.mxu0 0.0
  %1099 = vmatprep.subr.mxu0 0.0
  %1100 = vmatpush2.msra.mxu0 0.0
  %1101 = vmatprep.subr.mxu0 0.0
  %1102 = vmatpush2.msra.mxu0 0.0
  %1103 = vmatprep.subr.mxu0 0.0
  %1104 = vmatpush2.msra.mxu0 0.0
  %1105 = vmatprep.subr.mxu0 0.0
  %1106 = vmatpush2.msra.mxu0 0.0
  %1107 = vmatprep.subr.mxu0 0.0
  %1108 = vmatpush2.msra.mxu0 0.0
  %1109 = vmatprep.mubr.f32.mxu0 0.0
  %1110 = vmatmul.mubr.f32.gmra.mxu0 %v1043
  %v1111 = vpop.f32.mrf.mxu0
  %v1112 = vadd.f32 %v384, %v1111
  %v1113 = vpop.f32.mrf.mxu0
  %v1114 = vadd.f32 %v385, %v1113
  %1115 = vdwg.mxu0
  %v1116 = vxor.u32 %v1112, 2147483648
  %v1117 = vxor.u32 %v1114, 2147483648
  %v1118 = vmul.f32 %v1116, 1.442695
  %v1119 = vpow.pop %v1118
  %v1120 = vmul.f32 %v1117, 1.442695
  %v1121 = vpow.pop %v1120
  %v1122 = vadd.f32 %v1119, 1.0
  %v1123 = vadd.f32 %v1121, 1.0
  %v1124 = vrcp.pop %v1122
  %v1125 = vmul.f32 1.0, %v1124
  %v1126 = vrcp.pop %v1123
  %v1127 = vmul.f32 1.0, %v1126
  %v1128 = vtanh.pop %v1114
  %v1129 = vmul.f32 %v1125, %v1033
  %1131 = vrot.lane.b32.xlu0 %v1128, 64
  %v1132 = vpop.permute.xlu0 %1131
  %v1134 = vmul.f32 %v1125, %v1132
  %1136 = vrot.lane.b32.xlu0 %v1134, 64
  %v1137 = vpop.permute.xlu0 %1136
  %v1139 = vadd.f32 %v1129, %v1137
  %v1140 = vtanh.pop %v1139
  %1142 = vrot.lane.b32.xlu0 %v1140, 64
  %v1143 = vpop.permute.xlu0 %1142
  %v1145 = vmul.f32 %v1127, %v1143
  %1146 = vst.msk [vmem:[#allocation2 + $0x30] sm:$0xff] %vm234, %v1145
  %1147 = vst.msk [vmem:[#allocation2 + $0x8] sm:$0xff] %vm510, %v1145
  %v1149 = vsel %vm404, %v1145, 0
  %1151 = vmatprep.subr.mxu0 0.0
  %1152 = vmatpush1.msra.mxu0 0.0
  %1153 = vmatprep.subr.mxu0 0.0
  %1154 = vmatpush1.msra.mxu0 0.0
  %1155 = vmatprep.subr.mxu0 0.0
  %1156 = vmatpush1.msra.mxu0 0.0
  %1157 = vmatprep.subr.mxu0 0.0
  %1158 = vmatpush1.msra.mxu0 0.0
  %1159 = vmatprep.subr.mxu0 0.0
  %1160 = vmatpush1.msra.mxu0 0.0
  %1161 = vmatprep.subr.mxu0 0.0
  %1162 = vmatpush1.msra.mxu0 0.0
  %1163 = vmatprep.subr.mxu0 0.0
  %1164 = vmatpush1.msra.mxu0 0.0
  %1165 = vmatprep.subr.mxu0 0.0
  %1166 = vmatpush1.msra.mxu0 0.0
  %1167 = vmatprep.subr.mxu0 %v403
  %1168 = vmatpush1.msra.mxu0 %v402
  %1169 = vmatprep.subr.mxu0 %v401
  %1170 = vmatpush1.msra.mxu0 %v400
  %1171 = vmatprep.subr.mxu0 %v399
  %1172 = vmatpush1.msra.mxu0 %v398
  %1173 = vmatprep.subr.mxu0 %v397
  %1174 = vmatpush1.msra.mxu0 %v396
  %1175 = vmatprep.subr.mxu0 %v395
  %1176 = vmatpush1.msra.mxu0 %v394
  %1177 = vmatprep.subr.mxu0 %v393
  %1178 = vmatpush1.msra.mxu0 %v392
  %1179 = vmatprep.subr.mxu0 %v391
  %1180 = vmatpush1.msra.mxu0 %v390
  %1181 = vmatprep.subr.mxu0 %v389
  %1182 = vmatpush1.msra.mxu0 %v388
  %1183 = vmatprep.subr.mxu0 0.0
  %1184 = vmatpush2.msra.mxu0 0.0
  %1185 = vmatprep.subr.mxu0 0.0
  %1186 = vmatpush2.msra.mxu0 0.0
  %1187 = vmatprep.subr.mxu0 0.0
  %1188 = vmatpush2.msra.mxu0 0.0
  %1189 = vmatprep.subr.mxu0 0.0
  %1190 = vmatpush2.msra.mxu0 0.0
  %1191 = vmatprep.subr.mxu0 0.0
  %1192 = vmatpush2.msra.mxu0 0.0
  %1193 = vmatprep.subr.mxu0 0.0
  %1194 = vmatpush2.msra.mxu0 0.0
  %1195 = vmatprep.subr.mxu0 0.0
  %1196 = vmatpush2.msra.mxu0 0.0
  %1197 = vmatprep.subr.mxu0 0.0
  %1198 = vmatpush2.msra.mxu0 0.0
  %1199 = vmatprep.subr.mxu0 0.0
  %1200 = vmatpush2.msra.mxu0 0.0
  %1201 = vmatprep.subr.mxu0 0.0
  %1202 = vmatpush2.msra.mxu0 0.0
  %1203 = vmatprep.subr.mxu0 0.0
  %1204 = vmatpush2.msra.mxu0 0.0
  %1205 = vmatprep.subr.mxu0 0.0
  %1206 = vmatpush2.msra.mxu0 0.0
  %1207 = vmatprep.subr.mxu0 0.0
  %1208 = vmatpush2.msra.mxu0 0.0
  %1209 = vmatprep.subr.mxu0 0.0
  %1210 = vmatpush2.msra.mxu0 0.0
  %1211 = vmatprep.subr.mxu0 0.0
  %1212 = vmatpush2.msra.mxu0 0.0
  %1213 = vmatprep.subr.mxu0 0.0
  %1214 = vmatpush2.msra.mxu0 0.0
  %1215 = vmatprep.mubr.f32.mxu0 0.0
  %1216 = vmatmul.mubr.f32.gmra.mxu0 %v1149
  %v1217 = vpop.f32.mrf.mxu0
  %v1218 = vadd.f32 %v386, %v1217
  %v1219 = vpop.f32.mrf.mxu0
  %v1220 = vadd.f32 %v387, %v1219
  %1221 = vdwg.mxu0
  %v1222 = vxor.u32 %v1218, 2147483648
  %v1223 = vxor.u32 %v1220, 2147483648
  %v1224 = vmul.f32 %v1222, 1.442695
  %v1225 = vpow.pop %v1224
  %v1226 = vmul.f32 %v1223, 1.442695
  %v1227 = vpow.pop %v1226
  %v1228 = vadd.f32 %v1225, 1.0
  %v1229 = vadd.f32 %v1227, 1.0
  %v1230 = vrcp.pop %v1228
  %v1231 = vmul.f32 1.0, %v1230
  %v1232 = vrcp.pop %v1229
  %v1233 = vmul.f32 1.0, %v1232
  %v1234 = vtanh.pop %v1220
  %v1235 = vmul.f32 %v1231, %v1139
  %1237 = vrot.lane.b32.xlu0 %v1234, 64
  %v1238 = vpop.permute.xlu0 %1237
  %v1240 = vmul.f32 %v1231, %v1238
  %1242 = vrot.lane.b32.xlu0 %v1240, 64
  %v1243 = vpop.permute.xlu0 %1242
  %v1245 = vadd.f32 %v1235, %v1243
  %v1246 = vtanh.pop %v1245
  %1248 = vrot.lane.b32.xlu0 %v1246, 64
  %v1249 = vpop.permute.xlu0 %1248
  %v1251 = vmul.f32 %v1233, %v1249
  %1252 = vst.msk [vmem:[#allocation2 + $0x38] sm:$0xff] %vm234, %v1251
  %1253 = vst.msk [vmem:[#allocation2] sm:$0xff] %vm510, %v1251
  %v1254 = vld [vmem:[#allocation2] sm:$0xff]
  %v1255 = vld [vmem:[#allocation2 + $0x8] sm:$0xff]
  %v1256 = vld [vmem:[#allocation2 + $0x10] sm:$0xff]
  %v1257 = vld [vmem:[#allocation2 + $0x18] sm:$0xff]
  %v1258 = vld [vmem:[#allocation2 + $0x20] sm:$0xff]
  %v1259 = vld [vmem:[#allocation2 + $0x28] sm:$0xff]
  %v1260 = vld [vmem:[#allocation2 + $0x30] sm:$0xff]
  %v1261 = vld [vmem:[#allocation2 + $0x38] sm:$0xff]
  %v1262 = vld [vmem:[%s6] sm:$0xff]
  %v1263 = vld [vmem:[%s6 + $0x8] sm:$0xff]
  %v1264 = vld [vmem:[%s6 + $0x10] sm:$0xff]
  %v1265 = vld [vmem:[%s6 + $0x18] sm:$0xff]
  %v1266 = vld [vmem:[%s6 + $0x20] sm:$0xff]
  %v1267 = vld [vmem:[%s6 + $0x28] sm:$0xff]
  %v1268 = vld [vmem:[%s6 + $0x30] sm:$0xff]
  %v1269 = vld [vmem:[%s6 + $0x38] sm:$0xff]
  %v1270 = vld [vmem:[%s6 + $0x40] sm:$0xff]
  %v1271 = vld [vmem:[%s6 + $0x48] sm:$0xff]
  %v1272 = vld [vmem:[%s6 + $0x50] sm:$0xff]
  %v1273 = vld [vmem:[%s6 + $0x58] sm:$0xff]
  %v1274 = vld [vmem:[%s6 + $0x60] sm:$0xff]
  %v1275 = vld [vmem:[%s6 + $0x68] sm:$0xff]
  %v1276 = vld [vmem:[%s6 + $0x70] sm:$0xff]
  %v1277 = vld [vmem:[%s6 + $0x78] sm:$0xff]
  %v1278 = vld [vmem:[%s7] sm:$0x3]
  %v1280 = vlaneseq
  %v1281 = vshrl.u32 %v1280, 7
  %v1282 = vsub.s32 0, %v1281
  %v1283 = vrot.slane %v1278, %v1282
  %v1284 = vlaneseq
  %v1285 = vshrl.u32 %v1284, 7
  %v1286 = vsub.s32 1, %v1285
  %v1287 = vrot.slane %v1278, %v1286
  %v1291 = vsel %vm404, %v1254, 0
  %v1294 = vsel %vm404, %v1255, 0
  %v1297 = vsel %vm404, %v1256, 0
  %v1300 = vsel %vm404, %v1257, 0
  %v1303 = vsel %vm404, %v1258, 0
  %v1306 = vsel %vm404, %v1259, 0
  %v1309 = vsel %vm404, %v1260, 0
  %v1312 = vsel %vm404, %v1261, 0
  %1314 = vmatprep.subr.mxu0 0.0
  %1315 = vmatpush1.msra.mxu0 0.0
  %1316 = vmatprep.subr.mxu0 0.0
  %1317 = vmatpush1.msra.mxu0 0.0
  %1318 = vmatprep.subr.mxu0 0.0
  %1319 = vmatpush1.msra.mxu0 0.0
  %1320 = vmatprep.subr.mxu0 0.0
  %1321 = vmatpush1.msra.mxu0 0.0
  %1322 = vmatprep.subr.mxu0 0.0
  %1323 = vmatpush1.msra.mxu0 0.0
  %1324 = vmatprep.subr.mxu0 0.0
  %1325 = vmatpush1.msra.mxu0 0.0
  %1326 = vmatprep.subr.mxu0 0.0
  %1327 = vmatpush1.msra.mxu0 0.0
  %1328 = vmatprep.subr.mxu0 0.0
  %1329 = vmatpush1.msra.mxu0 0.0
  %1330 = vmatprep.subr.mxu0 %v1277
  %1331 = vmatpush1.msra.mxu0 %v1276
  %1332 = vmatprep.subr.mxu0 %v1275
  %1333 = vmatpush1.msra.mxu0 %v1274
  %1334 = vmatprep.subr.mxu0 %v1273
  %1335 = vmatpush1.msra.mxu0 %v1272
  %1336 = vmatprep.subr.mxu0 %v1271
  %1337 = vmatpush1.msra.mxu0 %v1270
  %1338 = vmatprep.subr.mxu0 %v1269
  %1339 = vmatpush1.msra.mxu0 %v1268
  %1340 = vmatprep.subr.mxu0 %v1267
  %1341 = vmatpush1.msra.mxu0 %v1266
  %1342 = vmatprep.subr.mxu0 %v1265
  %1343 = vmatpush1.msra.mxu0 %v1264
  %1344 = vmatprep.subr.mxu0 %v1263
  %1345 = vmatpush1.msra.mxu0 %v1262
  %1346 = vmatprep.subr.mxu0 0.0
  %1347 = vmatpush2.msra.mxu0 0.0
  %1348 = vmatprep.subr.mxu0 0.0
  %1349 = vmatpush2.msra.mxu0 0.0
  %1350 = vmatprep.subr.mxu0 0.0
  %1351 = vmatpush2.msra.mxu0 0.0
  %1352 = vmatprep.subr.mxu0 0.0
  %1353 = vmatpush2.msra.mxu0 0.0
  %1354 = vmatprep.subr.mxu0 0.0
  %1355 = vmatpush2.msra.mxu0 0.0
  %1356 = vmatprep.subr.mxu0 0.0
  %1357 = vmatpush2.msra.mxu0 0.0
  %1358 = vmatprep.subr.mxu0 0.0
  %1359 = vmatpush2.msra.mxu0 0.0
  %1360 = vmatprep.subr.mxu0 0.0
  %1361 = vmatpush2.msra.mxu0 0.0
  %1362 = vmatprep.subr.mxu0 0.0
  %1363 = vmatpush2.msra.mxu0 0.0
  %1364 = vmatprep.subr.mxu0 0.0
  %1365 = vmatpush2.msra.mxu0 0.0
  %1366 = vmatprep.subr.mxu0 0.0
  %1367 = vmatpush2.msra.mxu0 0.0
  %1368 = vmatprep.subr.mxu0 0.0
  %1369 = vmatpush2.msra.mxu0 0.0
  %1370 = vmatprep.subr.mxu0 0.0
  %1371 = vmatpush2.msra.mxu0 0.0
  %1372 = vmatprep.subr.mxu0 0.0
  %1373 = vmatpush2.msra.mxu0 0.0
  %1374 = vmatprep.subr.mxu0 0.0
  %1375 = vmatpush2.msra.mxu0 0.0
  %1376 = vmatprep.subr.mxu0 0.0
  %1377 = vmatpush2.msra.mxu0 0.0
  %1378 = vmatprep.mubr.f32.mxu0 0.0
  %1379 = vmatmul.mubr.f32.gmra.mxu0 %v1291
  %v1380 = vpop.f32.mrf.mxu0
  %v1381 = vadd.f32 %v1283, %v1380
  %v1382 = vpop.f32.mrf.mxu0
  %v1383 = vadd.f32 %v1287, %v1382
  %1384 = vmatprep.mubr.f32.mxu0 0.0
  %1385 = vmatmul.mubr.f32.gmra.mxu0 %v1294
  %v1386 = vpop.f32.mrf.mxu0
  %v1387 = vadd.f32 %v1283, %v1386
  %v1388 = vpop.f32.mrf.mxu0
  %v1389 = vadd.f32 %v1287, %v1388
  %1390 = vmatprep.mubr.f32.mxu0 0.0
  %1391 = vmatmul.mubr.f32.gmra.mxu0 %v1297
  %v1392 = vpop.f32.mrf.mxu0
  %v1393 = vadd.f32 %v1283, %v1392
  %v1394 = vpop.f32.mrf.mxu0
  %v1395 = vadd.f32 %v1287, %v1394
  %1396 = vmatprep.mubr.f32.mxu0 0.0
  %1397 = vmatmul.mubr.f32.gmra.mxu0 %v1300
  %v1398 = vpop.f32.mrf.mxu0
  %v1399 = vadd.f32 %v1283, %v1398
  %v1400 = vpop.f32.mrf.mxu0
  %v1401 = vadd.f32 %v1287, %v1400
  %1402 = vmatprep.mubr.f32.mxu0 0.0
  %1403 = vmatmul.mubr.f32.gmra.mxu0 %v1303
  %v1404 = vpop.f32.mrf.mxu0
  %v1405 = vadd.f32 %v1283, %v1404
  %v1406 = vpop.f32.mrf.mxu0
  %v1407 = vadd.f32 %v1287, %v1406
  %1408 = vmatprep.mubr.f32.mxu0 0.0
  %1409 = vmatmul.mubr.f32.gmra.mxu0 %v1306
  %v1410 = vpop.f32.mrf.mxu0
  %v1411 = vadd.f32 %v1283, %v1410
  %v1412 = vpop.f32.mrf.mxu0
  %v1413 = vadd.f32 %v1287, %v1412
  %1414 = vmatprep.mubr.f32.mxu0 0.0
  %1415 = vmatmul.mubr.f32.gmra.mxu0 %v1309
  %v1416 = vpop.f32.mrf.mxu0
  %v1417 = vadd.f32 %v1283, %v1416
  %v1418 = vpop.f32.mrf.mxu0
  %v1419 = vadd.f32 %v1287, %v1418
  %1420 = vmatprep.mubr.f32.mxu0 0.0
  %1421 = vmatmul.mubr.f32.gmra.mxu0 %v1312
  %v1422 = vpop.f32.mrf.mxu0
  %v1423 = vadd.f32 %v1283, %v1422
  %v1424 = vpop.f32.mrf.mxu0
  %v1425 = vadd.f32 %v1287, %v1424
  %1426 = vdwg.mxu0
  %v1427 = vsel %vm65, %v1381, %v1423
  %v1428 = vsel %vm66, %v1383, %v1425
  %v1429 = vsel %vm65, %v1387, %v1417
  %v1430 = vsel %vm66, %v1389, %v1419
  %v1431 = vsel %vm65, %v1393, %v1411
  %v1432 = vsel %vm66, %v1395, %v1413
  %v1433 = vsel %vm65, %v1399, %v1405
  %v1434 = vsel %vm66, %v1401, %v1407
  %v1435 = vsel %vm65, %v1405, %v1399
  %v1436 = vsel %vm66, %v1407, %v1401
  %v1437 = vsel %vm65, %v1411, %v1393
  %v1438 = vsel %vm66, %v1413, %v1395
  %v1439 = vsel %vm65, %v1417, %v1387
  %v1440 = vsel %vm66, %v1419, %v1389
  %v1441 = vsel %vm65, %v1423, %v1381
  %v1442 = vsel %vm66, %v1425, %v1383
  %v1443 = vld [vmem:[%s8] sm:$0xff]
  %v1444 = vld [vmem:[%s8 + $0x8] sm:$0xff]
  %v1445 = vld [vmem:[%s8 + $0x10] sm:$0xff]
  %v1446 = vld [vmem:[%s8 + $0x18] sm:$0xff]
  %v1447 = vld [vmem:[%s8 + $0x20] sm:$0xff]
  %v1448 = vld [vmem:[%s8 + $0x28] sm:$0xff]
  %v1449 = vld [vmem:[%s8 + $0x30] sm:$0xff]
  %v1450 = vld [vmem:[%s8 + $0x38] sm:$0xff]
  %v1451 = vld [vmem:[%s8 + $0x40] sm:$0xff]
  %v1452 = vld [vmem:[%s8 + $0x48] sm:$0xff]
  %v1453 = vld [vmem:[%s8 + $0x50] sm:$0xff]
  %v1454 = vld [vmem:[%s8 + $0x58] sm:$0xff]
  %v1455 = vld [vmem:[%s8 + $0x60] sm:$0xff]
  %v1456 = vld [vmem:[%s8 + $0x68] sm:$0xff]
  %v1457 = vld [vmem:[%s8 + $0x70] sm:$0xff]
  %v1458 = vld [vmem:[%s8 + $0x78] sm:$0xff]
  %1459 = vmatprep.subr.mxu0 0.0
  %1460 = vmatpush1.msra.mxu0 0.0
  %1461 = vmatprep.subr.mxu0 0.0
  %1462 = vmatpush1.msra.mxu0 0.0
  %1463 = vmatprep.subr.mxu0 0.0
  %1464 = vmatpush1.msra.mxu0 0.0
  %1465 = vmatprep.subr.mxu0 0.0
  %1466 = vmatpush1.msra.mxu0 0.0
  %1467 = vmatprep.subr.mxu0 0.0
  %1468 = vmatpush1.msra.mxu0 0.0
  %1469 = vmatprep.subr.mxu0 0.0
  %1470 = vmatpush1.msra.mxu0 0.0
  %1471 = vmatprep.subr.mxu0 0.0
  %1472 = vmatpush1.msra.mxu0 0.0
  %1473 = vmatprep.subr.mxu0 0.0
  %1474 = vmatpush1.msra.mxu0 0.0
  %1475 = vmatprep.subr.mxu0 %v1458
  %1476 = vmatpush1.msra.mxu0 %v1457
  %1477 = vmatprep.subr.mxu0 %v1456
  %1478 = vmatpush1.msra.mxu0 %v1455
  %1479 = vmatprep.subr.mxu0 %v1454
  %1480 = vmatpush1.msra.mxu0 %v1453
  %1481 = vmatprep.subr.mxu0 %v1452
  %1482 = vmatpush1.msra.mxu0 %v1451
  %1483 = vmatprep.subr.mxu0 %v1450
  %1484 = vmatpush1.msra.mxu0 %v1449
  %1485 = vmatprep.subr.mxu0 %v1448
  %1486 = vmatpush1.msra.mxu0 %v1447
  %1487 = vmatprep.subr.mxu0 %v1446
  %1488 = vmatpush1.msra.mxu0 %v1445
  %1489 = vmatprep.subr.mxu0 %v1444
  %1490 = vmatpush1.msra.mxu0 %v1443
  %1491 = vmatprep.subr.mxu0 0.0
  %1492 = vmatpush2.msra.mxu0 0.0
  %1493 = vmatprep.subr.mxu0 0.0
  %1494 = vmatpush2.msra.mxu0 0.0
  %1495 = vmatprep.subr.mxu0 0.0
  %1496 = vmatpush2.msra.mxu0 0.0
  %1497 = vmatprep.subr.mxu0 0.0
  %1498 = vmatpush2.msra.mxu0 0.0
  %1499 = vmatprep.subr.mxu0 0.0
  %1500 = vmatpush2.msra.mxu0 0.0
  %1501 = vmatprep.subr.mxu0 0.0
  %1502 = vmatpush2.msra.mxu0 0.0
  %1503 = vmatprep.subr.mxu0 0.0
  %1504 = vmatpush2.msra.mxu0 0.0
  %1505 = vmatprep.subr.mxu0 0.0
  %1506 = vmatpush2.msra.mxu0 0.0
  %1507 = vmatprep.subr.mxu0 0.0
  %1508 = vmatpush2.msra.mxu0 0.0
  %1509 = vmatprep.subr.mxu0 0.0
  %1510 = vmatpush2.msra.mxu0 0.0
  %1511 = vmatprep.subr.mxu0 0.0
  %1512 = vmatpush2.msra.mxu0 0.0
  %1513 = vmatprep.subr.mxu0 0.0
  %1514 = vmatpush2.msra.mxu0 0.0
  %1515 = vmatprep.subr.mxu0 0.0
  %1516 = vmatpush2.msra.mxu0 0.0
  %1517 = vmatprep.subr.mxu0 0.0
  %1518 = vmatpush2.msra.mxu0 0.0
  %1519 = vmatprep.subr.mxu0 0.0
  %1520 = vmatpush2.msra.mxu0 0.0
  %1521 = vmatprep.subr.mxu0 0.0
  %1522 = vmatpush2.msra.mxu0 0.0
  %1523 = vmatprep.mubr.f32.mxu0 0.0
  %1524 = vmatmul.mubr.f32.gmra.mxu0 %v406
  %v1525 = vpop.f32.mrf.mxu0
  %v1526 = vadd.f32 %v1427, %v1525
  %v1527 = vpop.f32.mrf.mxu0
  %v1528 = vadd.f32 %v1428, %v1527
  %1529 = vdwg.mxu0
  %v1530 = vxor.u32 %v1526, 2147483648
  %v1531 = vxor.u32 %v1528, 2147483648
  %v1532 = vmul.f32 %v1530, 1.442695
  %v1533 = vpow.pop %v1532
  %v1534 = vmul.f32 %v1531, 1.442695
  %v1535 = vpow.pop %v1534
  %v1536 = vadd.f32 %v1533, 1.0
  %v1537 = vadd.f32 %v1535, 1.0
  %v1538 = vrcp.pop %v1536
  %v1539 = vmul.f32 1.0, %v1538
  %v1540 = vrcp.pop %v1537
  %v1541 = vmul.f32 1.0, %v1540
  %v1542 = vtanh.pop %v1528
  %v1543 = vmul.f32 %v1539, 0.0
  %1545 = vrot.lane.b32.xlu0 %v1542, 64
  %v1546 = vpop.permute.xlu0 %1545
  %v1548 = vmul.f32 %v1539, %v1546
  %1550 = vrot.lane.b32.xlu0 %v1548, 64
  %v1551 = vpop.permute.xlu0 %1550
  %v1553 = vadd.f32 %v1543, %v1551
  %v1554 = vtanh.pop %v1553
  %1556 = vrot.lane.b32.xlu0 %v1554, 64
  %v1557 = vpop.permute.xlu0 %1556
  %v1559 = vmul.f32 %v1541, %v1557
  %v1561 = vsel %vm404, %v1559, 0
  %1563 = vmatprep.subr.mxu0 0.0
  %1564 = vmatpush1.msra.mxu0 0.0
  %1565 = vmatprep.subr.mxu0 0.0
  %1566 = vmatpush1.msra.mxu0 0.0
  %1567 = vmatprep.subr.mxu0 0.0
  %1568 = vmatpush1.msra.mxu0 0.0
  %1569 = vmatprep.subr.mxu0 0.0
  %1570 = vmatpush1.msra.mxu0 0.0
  %1571 = vmatprep.subr.mxu0 0.0
  %1572 = vmatpush1.msra.mxu0 0.0
  %1573 = vmatprep.subr.mxu0 0.0
  %1574 = vmatpush1.msra.mxu0 0.0
  %1575 = vmatprep.subr.mxu0 0.0
  %1576 = vmatpush1.msra.mxu0 0.0
  %1577 = vmatprep.subr.mxu0 0.0
  %1578 = vmatpush1.msra.mxu0 0.0
  %1579 = vmatprep.subr.mxu0 %v1458
  %1580 = vmatpush1.msra.mxu0 %v1457
  %1581 = vmatprep.subr.mxu0 %v1456
  %1582 = vmatpush1.msra.mxu0 %v1455
  %1583 = vmatprep.subr.mxu0 %v1454
  %1584 = vmatpush1.msra.mxu0 %v1453
  %1585 = vmatprep.subr.mxu0 %v1452
  %1586 = vmatpush1.msra.mxu0 %v1451
  %1587 = vmatprep.subr.mxu0 %v1450
  %1588 = vmatpush1.msra.mxu0 %v1449
  %1589 = vmatprep.subr.mxu0 %v1448
  %1590 = vmatpush1.msra.mxu0 %v1447
  %1591 = vmatprep.subr.mxu0 %v1446
  %1592 = vmatpush1.msra.mxu0 %v1445
  %1593 = vmatprep.subr.mxu0 %v1444
  %1594 = vmatpush1.msra.mxu0 %v1443
  %1595 = vmatprep.subr.mxu0 0.0
  %1596 = vmatpush2.msra.mxu0 0.0
  %1597 = vmatprep.subr.mxu0 0.0
  %1598 = vmatpush2.msra.mxu0 0.0
  %1599 = vmatprep.subr.mxu0 0.0
  %1600 = vmatpush2.msra.mxu0 0.0
  %1601 = vmatprep.subr.mxu0 0.0
  %1602 = vmatpush2.msra.mxu0 0.0
  %1603 = vmatprep.subr.mxu0 0.0
  %1604 = vmatpush2.msra.mxu0 0.0
  %1605 = vmatprep.subr.mxu0 0.0
  %1606 = vmatpush2.msra.mxu0 0.0
  %1607 = vmatprep.subr.mxu0 0.0
  %1608 = vmatpush2.msra.mxu0 0.0
  %1609 = vmatprep.subr.mxu0 0.0
  %1610 = vmatpush2.msra.mxu0 0.0
  %1611 = vmatprep.subr.mxu0 0.0
  %1612 = vmatpush2.msra.mxu0 0.0
  %1613 = vmatprep.subr.mxu0 0.0
  %1614 = vmatpush2.msra.mxu0 0.0
  %1615 = vmatprep.subr.mxu0 0.0
  %1616 = vmatpush2.msra.mxu0 0.0
  %1617 = vmatprep.subr.mxu0 0.0
  %1618 = vmatpush2.msra.mxu0 0.0
  %1619 = vmatprep.subr.mxu0 0.0
  %1620 = vmatpush2.msra.mxu0 0.0
  %1621 = vmatprep.subr.mxu0 0.0
  %1622 = vmatpush2.msra.mxu0 0.0
  %1623 = vmatprep.subr.mxu0 0.0
  %1624 = vmatpush2.msra.mxu0 0.0
  %1625 = vmatprep.subr.mxu0 0.0
  %1626 = vmatpush2.msra.mxu0 0.0
  %1627 = vmatprep.mubr.f32.mxu0 0.0
  %1628 = vmatmul.mubr.f32.gmra.mxu0 %v1561
  %v1629 = vpop.f32.mrf.mxu0
  %v1630 = vadd.f32 %v1429, %v1629
  %v1631 = vpop.f32.mrf.mxu0
  %v1632 = vadd.f32 %v1430, %v1631
  %1633 = vdwg.mxu0
  %v1634 = vxor.u32 %v1630, 2147483648
  %v1635 = vxor.u32 %v1632, 2147483648
  %v1636 = vmul.f32 %v1634, 1.442695
  %v1637 = vpow.pop %v1636
  %v1638 = vmul.f32 %v1635, 1.442695
  %v1639 = vpow.pop %v1638
  %v1640 = vadd.f32 %v1637, 1.0
  %v1641 = vadd.f32 %v1639, 1.0
  %v1642 = vrcp.pop %v1640
  %v1643 = vmul.f32 1.0, %v1642
  %v1644 = vrcp.pop %v1641
  %v1645 = vmul.f32 1.0, %v1644
  %v1646 = vtanh.pop %v1632
  %v1647 = vmul.f32 %v1643, %v1553
  %1649 = vrot.lane.b32.xlu0 %v1646, 64
  %v1650 = vpop.permute.xlu0 %1649
  %v1652 = vmul.f32 %v1643, %v1650
  %1654 = vrot.lane.b32.xlu0 %v1652, 64
  %v1655 = vpop.permute.xlu0 %1654
  %v1657 = vadd.f32 %v1647, %v1655
  %v1658 = vtanh.pop %v1657
  %1660 = vrot.lane.b32.xlu0 %v1658, 64
  %v1661 = vpop.permute.xlu0 %1660
  %v1663 = vmul.f32 %v1645, %v1661
  %v1665 = vsel %vm404, %v1663, 0
  %1667 = vmatprep.subr.mxu0 0.0
  %1668 = vmatpush1.msra.mxu0 0.0
  %1669 = vmatprep.subr.mxu0 0.0
  %1670 = vmatpush1.msra.mxu0 0.0
  %1671 = vmatprep.subr.mxu0 0.0
  %1672 = vmatpush1.msra.mxu0 0.0
  %1673 = vmatprep.subr.mxu0 0.0
  %1674 = vmatpush1.msra.mxu0 0.0
  %1675 = vmatprep.subr.mxu0 0.0
  %1676 = vmatpush1.msra.mxu0 0.0
  %1677 = vmatprep.subr.mxu0 0.0
  %1678 = vmatpush1.msra.mxu0 0.0
  %1679 = vmatprep.subr.mxu0 0.0
  %1680 = vmatpush1.msra.mxu0 0.0
  %1681 = vmatprep.subr.mxu0 0.0
  %1682 = vmatpush1.msra.mxu0 0.0
  %1683 = vmatprep.subr.mxu0 %v1458
  %1684 = vmatpush1.msra.mxu0 %v1457
  %1685 = vmatprep.subr.mxu0 %v1456
  %1686 = vmatpush1.msra.mxu0 %v1455
  %1687 = vmatprep.subr.mxu0 %v1454
  %1688 = vmatpush1.msra.mxu0 %v1453
  %1689 = vmatprep.subr.mxu0 %v1452
  %1690 = vmatpush1.msra.mxu0 %v1451
  %1691 = vmatprep.subr.mxu0 %v1450
  %1692 = vmatpush1.msra.mxu0 %v1449
  %1693 = vmatprep.subr.mxu0 %v1448
  %1694 = vmatpush1.msra.mxu0 %v1447
  %1695 = vmatprep.subr.mxu0 %v1446
  %1696 = vmatpush1.msra.mxu0 %v1445
  %1697 = vmatprep.subr.mxu0 %v1444
  %1698 = vmatpush1.msra.mxu0 %v1443
  %1699 = vmatprep.subr.mxu0 0.0
  %1700 = vmatpush2.msra.mxu0 0.0
  %1701 = vmatprep.subr.mxu0 0.0
  %1702 = vmatpush2.msra.mxu0 0.0
  %1703 = vmatprep.subr.mxu0 0.0
  %1704 = vmatpush2.msra.mxu0 0.0
  %1705 = vmatprep.subr.mxu0 0.0
  %1706 = vmatpush2.msra.mxu0 0.0
  %1707 = vmatprep.subr.mxu0 0.0
  %1708 = vmatpush2.msra.mxu0 0.0
  %1709 = vmatprep.subr.mxu0 0.0
  %1710 = vmatpush2.msra.mxu0 0.0
  %1711 = vmatprep.subr.mxu0 0.0
  %1712 = vmatpush2.msra.mxu0 0.0
  %1713 = vmatprep.subr.mxu0 0.0
  %1714 = vmatpush2.msra.mxu0 0.0
  %1715 = vmatprep.subr.mxu0 0.0
  %1716 = vmatpush2.msra.mxu0 0.0
  %1717 = vmatprep.subr.mxu0 0.0
  %1718 = vmatpush2.msra.mxu0 0.0
  %1719 = vmatprep.subr.mxu0 0.0
  %1720 = vmatpush2.msra.mxu0 0.0
  %1721 = vmatprep.subr.mxu0 0.0
  %1722 = vmatpush2.msra.mxu0 0.0
  %1723 = vmatprep.subr.mxu0 0.0
  %1724 = vmatpush2.msra.mxu0 0.0
  %1725 = vmatprep.subr.mxu0 0.0
  %1726 = vmatpush2.msra.mxu0 0.0
  %1727 = vmatprep.subr.mxu0 0.0
  %1728 = vmatpush2.msra.mxu0 0.0
  %1729 = vmatprep.subr.mxu0 0.0
  %1730 = vmatpush2.msra.mxu0 0.0
  %1731 = vmatprep.mubr.f32.mxu0 0.0
  %1732 = vmatmul.mubr.f32.gmra.mxu0 %v1665
  %v1733 = vpop.f32.mrf.mxu0
  %v1734 = vadd.f32 %v1431, %v1733
  %v1735 = vpop.f32.mrf.mxu0
  %v1736 = vadd.f32 %v1432, %v1735
  %1737 = vdwg.mxu0
  %v1738 = vxor.u32 %v1734, 2147483648
  %v1739 = vxor.u32 %v1736, 2147483648
  %v1740 = vmul.f32 %v1738, 1.442695
  %v1741 = vpow.pop %v1740
  %v1742 = vmul.f32 %v1739, 1.442695
  %v1743 = vpow.pop %v1742
  %v1744 = vadd.f32 %v1741, 1.0
  %v1745 = vadd.f32 %v1743, 1.0
  %v1746 = vrcp.pop %v1744
  %v1747 = vmul.f32 1.0, %v1746
  %v1748 = vrcp.pop %v1745
  %v1749 = vmul.f32 1.0, %v1748
  %v1750 = vtanh.pop %v1736
  %v1751 = vmul.f32 %v1747, %v1657
  %1753 = vrot.lane.b32.xlu0 %v1750, 64
  %v1754 = vpop.permute.xlu0 %1753
  %v1756 = vmul.f32 %v1747, %v1754
  %1758 = vrot.lane.b32.xlu0 %v1756, 64
  %v1759 = vpop.permute.xlu0 %1758
  %v1761 = vadd.f32 %v1751, %v1759
  %v1762 = vtanh.pop %v1761
  %1764 = vrot.lane.b32.xlu0 %v1762, 64
  %v1765 = vpop.permute.xlu0 %1764
  %v1767 = vmul.f32 %v1749, %v1765
  %v1769 = vsel %vm404, %v1767, 0
  %1771 = vmatprep.subr.mxu0 0.0
  %1772 = vmatpush1.msra.mxu0 0.0
  %1773 = vmatprep.subr.mxu0 0.0
  %1774 = vmatpush1.msra.mxu0 0.0
  %1775 = vmatprep.subr.mxu0 0.0
  %1776 = vmatpush1.msra.mxu0 0.0
  %1777 = vmatprep.subr.mxu0 0.0
  %1778 = vmatpush1.msra.mxu0 0.0
  %1779 = vmatprep.subr.mxu0 0.0
  %1780 = vmatpush1.msra.mxu0 0.0
  %1781 = vmatprep.subr.mxu0 0.0
  %1782 = vmatpush1.msra.mxu0 0.0
  %1783 = vmatprep.subr.mxu0 0.0
  %1784 = vmatpush1.msra.mxu0 0.0
  %1785 = vmatprep.subr.mxu0 0.0
  %1786 = vmatpush1.msra.mxu0 0.0
  %1787 = vmatprep.subr.mxu0 %v1458
  %1788 = vmatpush1.msra.mxu0 %v1457
  %1789 = vmatprep.subr.mxu0 %v1456
  %1790 = vmatpush1.msra.mxu0 %v1455
  %1791 = vmatprep.subr.mxu0 %v1454
  %1792 = vmatpush1.msra.mxu0 %v1453
  %1793 = vmatprep.subr.mxu0 %v1452
  %1794 = vmatpush1.msra.mxu0 %v1451
  %1795 = vmatprep.subr.mxu0 %v1450
  %1796 = vmatpush1.msra.mxu0 %v1449
  %1797 = vmatprep.subr.mxu0 %v1448
  %1798 = vmatpush1.msra.mxu0 %v1447
  %1799 = vmatprep.subr.mxu0 %v1446
  %1800 = vmatpush1.msra.mxu0 %v1445
  %1801 = vmatprep.subr.mxu0 %v1444
  %1802 = vmatpush1.msra.mxu0 %v1443
  %1803 = vmatprep.subr.mxu0 0.0
  %1804 = vmatpush2.msra.mxu0 0.0
  %1805 = vmatprep.subr.mxu0 0.0
  %1806 = vmatpush2.msra.mxu0 0.0
  %1807 = vmatprep.subr.mxu0 0.0
  %1808 = vmatpush2.msra.mxu0 0.0
  %1809 = vmatprep.subr.mxu0 0.0
  %1810 = vmatpush2.msra.mxu0 0.0
  %1811 = vmatprep.subr.mxu0 0.0
  %1812 = vmatpush2.msra.mxu0 0.0
  %1813 = vmatprep.subr.mxu0 0.0
  %1814 = vmatpush2.msra.mxu0 0.0
  %1815 = vmatprep.subr.mxu0 0.0
  %1816 = vmatpush2.msra.mxu0 0.0
  %1817 = vmatprep.subr.mxu0 0.0
  %1818 = vmatpush2.msra.mxu0 0.0
  %1819 = vmatprep.subr.mxu0 0.0
  %1820 = vmatpush2.msra.mxu0 0.0
  %1821 = vmatprep.subr.mxu0 0.0
  %1822 = vmatpush2.msra.mxu0 0.0
  %1823 = vmatprep.subr.mxu0 0.0
  %1824 = vmatpush2.msra.mxu0 0.0
  %1825 = vmatprep.subr.mxu0 0.0
  %1826 = vmatpush2.msra.mxu0 0.0
  %1827 = vmatprep.subr.mxu0 0.0
  %1828 = vmatpush2.msra.mxu0 0.0
  %1829 = vmatprep.subr.mxu0 0.0
  %1830 = vmatpush2.msra.mxu0 0.0
  %1831 = vmatprep.subr.mxu0 0.0
  %1832 = vmatpush2.msra.mxu0 0.0
  %1833 = vmatprep.subr.mxu0 0.0
  %1834 = vmatpush2.msra.mxu0 0.0
  %1835 = vmatprep.mubr.f32.mxu0 0.0
  %1836 = vmatmul.mubr.f32.gmra.mxu0 %v1769
  %v1837 = vpop.f32.mrf.mxu0
  %v1838 = vadd.f32 %v1433, %v1837
  %v1839 = vpop.f32.mrf.mxu0
  %v1840 = vadd.f32 %v1434, %v1839
  %1841 = vdwg.mxu0
  %v1842 = vxor.u32 %v1838, 2147483648
  %v1843 = vxor.u32 %v1840, 2147483648
  %v1844 = vmul.f32 %v1842, 1.442695
  %v1845 = vpow.pop %v1844
  %v1846 = vmul.f32 %v1843, 1.442695
  %v1847 = vpow.pop %v1846
  %v1848 = vadd.f32 %v1845, 1.0
  %v1849 = vadd.f32 %v1847, 1.0
  %v1850 = vrcp.pop %v1848
  %v1851 = vmul.f32 1.0, %v1850
  %v1852 = vrcp.pop %v1849
  %v1853 = vmul.f32 1.0, %v1852
  %v1854 = vtanh.pop %v1840
  %v1855 = vmul.f32 %v1851, %v1761
  %1857 = vrot.lane.b32.xlu0 %v1854, 64
  %v1858 = vpop.permute.xlu0 %1857
  %v1860 = vmul.f32 %v1851, %v1858
  %1862 = vrot.lane.b32.xlu0 %v1860, 64
  %v1863 = vpop.permute.xlu0 %1862
  %v1865 = vadd.f32 %v1855, %v1863
  %v1866 = vtanh.pop %v1865
  %1868 = vrot.lane.b32.xlu0 %v1866, 64
  %v1869 = vpop.permute.xlu0 %1868
  %v1871 = vmul.f32 %v1853, %v1869
  %v1873 = vsel %vm404, %v1871, 0
  %1875 = vmatprep.subr.mxu0 0.0
  %1876 = vmatpush1.msra.mxu0 0.0
  %1877 = vmatprep.subr.mxu0 0.0
  %1878 = vmatpush1.msra.mxu0 0.0
  %1879 = vmatprep.subr.mxu0 0.0
  %1880 = vmatpush1.msra.mxu0 0.0
  %1881 = vmatprep.subr.mxu0 0.0
  %1882 = vmatpush1.msra.mxu0 0.0
  %1883 = vmatprep.subr.mxu0 0.0
  %1884 = vmatpush1.msra.mxu0 0.0
  %1885 = vmatprep.subr.mxu0 0.0
  %1886 = vmatpush1.msra.mxu0 0.0
  %1887 = vmatprep.subr.mxu0 0.0
  %1888 = vmatpush1.msra.mxu0 0.0
  %1889 = vmatprep.subr.mxu0 0.0
  %1890 = vmatpush1.msra.mxu0 0.0
  %1891 = vmatprep.subr.mxu0 %v1458
  %1892 = vmatpush1.msra.mxu0 %v1457
  %1893 = vmatprep.subr.mxu0 %v1456
  %1894 = vmatpush1.msra.mxu0 %v1455
  %1895 = vmatprep.subr.mxu0 %v1454
  %1896 = vmatpush1.msra.mxu0 %v1453
  %1897 = vmatprep.subr.mxu0 %v1452
  %1898 = vmatpush1.msra.mxu0 %v1451
  %1899 = vmatprep.subr.mxu0 %v1450
  %1900 = vmatpush1.msra.mxu0 %v1449
  %1901 = vmatprep.subr.mxu0 %v1448
  %1902 = vmatpush1.msra.mxu0 %v1447
  %1903 = vmatprep.subr.mxu0 %v1446
  %1904 = vmatpush1.msra.mxu0 %v1445
  %1905 = vmatprep.subr.mxu0 %v1444
  %1906 = vmatpush1.msra.mxu0 %v1443
  %1907 = vmatprep.subr.mxu0 0.0
  %1908 = vmatpush2.msra.mxu0 0.0
  %1909 = vmatprep.subr.mxu0 0.0
  %1910 = vmatpush2.msra.mxu0 0.0
  %1911 = vmatprep.subr.mxu0 0.0
  %1912 = vmatpush2.msra.mxu0 0.0
  %1913 = vmatprep.subr.mxu0 0.0
  %1914 = vmatpush2.msra.mxu0 0.0
  %1915 = vmatprep.subr.mxu0 0.0
  %1916 = vmatpush2.msra.mxu0 0.0
  %1917 = vmatprep.subr.mxu0 0.0
  %1918 = vmatpush2.msra.mxu0 0.0
  %1919 = vmatprep.subr.mxu0 0.0
  %1920 = vmatpush2.msra.mxu0 0.0
  %1921 = vmatprep.subr.mxu0 0.0
  %1922 = vmatpush2.msra.mxu0 0.0
  %1923 = vmatprep.subr.mxu0 0.0
  %1924 = vmatpush2.msra.mxu0 0.0
  %1925 = vmatprep.subr.mxu0 0.0
  %1926 = vmatpush2.msra.mxu0 0.0
  %1927 = vmatprep.subr.mxu0 0.0
  %1928 = vmatpush2.msra.mxu0 0.0
  %1929 = vmatprep.subr.mxu0 0.0
  %1930 = vmatpush2.msra.mxu0 0.0
  %1931 = vmatprep.subr.mxu0 0.0
  %1932 = vmatpush2.msra.mxu0 0.0
  %1933 = vmatprep.subr.mxu0 0.0
  %1934 = vmatpush2.msra.mxu0 0.0
  %1935 = vmatprep.subr.mxu0 0.0
  %1936 = vmatpush2.msra.mxu0 0.0
  %1937 = vmatprep.subr.mxu0 0.0
  %1938 = vmatpush2.msra.mxu0 0.0
  %1939 = vmatprep.mubr.f32.mxu0 0.0
  %1940 = vmatmul.mubr.f32.gmra.mxu0 %v1873
  %v1941 = vpop.f32.mrf.mxu0
  %v1942 = vadd.f32 %v1435, %v1941
  %v1943 = vpop.f32.mrf.mxu0
  %v1944 = vadd.f32 %v1436, %v1943
  %1945 = vdwg.mxu0
  %v1946 = vxor.u32 %v1942, 2147483648
  %v1947 = vxor.u32 %v1944, 2147483648
  %v1948 = vmul.f32 %v1946, 1.442695
  %v1949 = vpow.pop %v1948
  %v1950 = vmul.f32 %v1947, 1.442695
  %v1951 = vpow.pop %v1950
  %v1952 = vadd.f32 %v1949, 1.0
  %v1953 = vadd.f32 %v1951, 1.0
  %v1954 = vrcp.pop %v1952
  %v1955 = vmul.f32 1.0, %v1954
  %v1956 = vrcp.pop %v1953
  %v1957 = vmul.f32 1.0, %v1956
  %v1958 = vtanh.pop %v1944
  %v1959 = vmul.f32 %v1955, %v1865
  %1961 = vrot.lane.b32.xlu0 %v1958, 64
  %v1962 = vpop.permute.xlu0 %1961
  %v1964 = vmul.f32 %v1955, %v1962
  %1966 = vrot.lane.b32.xlu0 %v1964, 64
  %v1967 = vpop.permute.xlu0 %1966
  %v1969 = vadd.f32 %v1959, %v1967
  %v1970 = vtanh.pop %v1969
  %1972 = vrot.lane.b32.xlu0 %v1970, 64
  %v1973 = vpop.permute.xlu0 %1972
  %v1975 = vmul.f32 %v1957, %v1973
  %v1977 = vsel %vm404, %v1975, 0
  %1979 = vmatprep.subr.mxu0 0.0
  %1980 = vmatpush1.msra.mxu0 0.0
  %1981 = vmatprep.subr.mxu0 0.0
  %1982 = vmatpush1.msra.mxu0 0.0
  %1983 = vmatprep.subr.mxu0 0.0
  %1984 = vmatpush1.msra.mxu0 0.0
  %1985 = vmatprep.subr.mxu0 0.0
  %1986 = vmatpush1.msra.mxu0 0.0
  %1987 = vmatprep.subr.mxu0 0.0
  %1988 = vmatpush1.msra.mxu0 0.0
  %1989 = vmatprep.subr.mxu0 0.0
  %1990 = vmatpush1.msra.mxu0 0.0
  %1991 = vmatprep.subr.mxu0 0.0
  %1992 = vmatpush1.msra.mxu0 0.0
  %1993 = vmatprep.subr.mxu0 0.0
  %1994 = vmatpush1.msra.mxu0 0.0
  %1995 = vmatprep.subr.mxu0 %v1458
  %1996 = vmatpush1.msra.mxu0 %v1457
  %1997 = vmatprep.subr.mxu0 %v1456
  %1998 = vmatpush1.msra.mxu0 %v1455
  %1999 = vmatprep.subr.mxu0 %v1454
  %2000 = vmatpush1.msra.mxu0 %v1453
  %2001 = vmatprep.subr.mxu0 %v1452
  %2002 = vmatpush1.msra.mxu0 %v1451
  %2003 = vmatprep.subr.mxu0 %v1450
  %2004 = vmatpush1.msra.mxu0 %v1449
  %2005 = vmatprep.subr.mxu0 %v1448
  %2006 = vmatpush1.msra.mxu0 %v1447
  %2007 = vmatprep.subr.mxu0 %v1446
  %2008 = vmatpush1.msra.mxu0 %v1445
  %2009 = vmatprep.subr.mxu0 %v1444
  %2010 = vmatpush1.msra.mxu0 %v1443
  %2011 = vmatprep.subr.mxu0 0.0
  %2012 = vmatpush2.msra.mxu0 0.0
  %2013 = vmatprep.subr.mxu0 0.0
  %2014 = vmatpush2.msra.mxu0 0.0
  %2015 = vmatprep.subr.mxu0 0.0
  %2016 = vmatpush2.msra.mxu0 0.0
  %2017 = vmatprep.subr.mxu0 0.0
  %2018 = vmatpush2.msra.mxu0 0.0
  %2019 = vmatprep.subr.mxu0 0.0
  %2020 = vmatpush2.msra.mxu0 0.0
  %2021 = vmatprep.subr.mxu0 0.0
  %2022 = vmatpush2.msra.mxu0 0.0
  %2023 = vmatprep.subr.mxu0 0.0
  %2024 = vmatpush2.msra.mxu0 0.0
  %2025 = vmatprep.subr.mxu0 0.0
  %2026 = vmatpush2.msra.mxu0 0.0
  %2027 = vmatprep.subr.mxu0 0.0
  %2028 = vmatpush2.msra.mxu0 0.0
  %2029 = vmatprep.subr.mxu0 0.0
  %2030 = vmatpush2.msra.mxu0 0.0
  %2031 = vmatprep.subr.mxu0 0.0
  %2032 = vmatpush2.msra.mxu0 0.0
  %2033 = vmatprep.subr.mxu0 0.0
  %2034 = vmatpush2.msra.mxu0 0.0
  %2035 = vmatprep.subr.mxu0 0.0
  %2036 = vmatpush2.msra.mxu0 0.0
  %2037 = vmatprep.subr.mxu0 0.0
  %2038 = vmatpush2.msra.mxu0 0.0
  %2039 = vmatprep.subr.mxu0 0.0
  %2040 = vmatpush2.msra.mxu0 0.0
  %2041 = vmatprep.subr.mxu0 0.0
  %2042 = vmatpush2.msra.mxu0 0.0
  %2043 = vmatprep.mubr.f32.mxu0 0.0
  %2044 = vmatmul.mubr.f32.gmra.mxu0 %v1977
  %v2045 = vpop.f32.mrf.mxu0
  %v2046 = vadd.f32 %v1437, %v2045
  %v2047 = vpop.f32.mrf.mxu0
  %v2048 = vadd.f32 %v1438, %v2047
  %2049 = vdwg.mxu0
  %v2050 = vxor.u32 %v2046, 2147483648
  %v2051 = vxor.u32 %v2048, 2147483648
  %v2052 = vmul.f32 %v2050, 1.442695
  %v2053 = vpow.pop %v2052
  %v2054 = vmul.f32 %v2051, 1.442695
  %v2055 = vpow.pop %v2054
  %v2056 = vadd.f32 %v2053, 1.0
  %v2057 = vadd.f32 %v2055, 1.0
  %v2058 = vrcp.pop %v2056
  %v2059 = vmul.f32 1.0, %v2058
  %v2060 = vrcp.pop %v2057
  %v2061 = vmul.f32 1.0, %v2060
  %v2062 = vtanh.pop %v2048
  %v2063 = vmul.f32 %v2059, %v1969
  %2065 = vrot.lane.b32.xlu0 %v2062, 64
  %v2066 = vpop.permute.xlu0 %2065
  %v2068 = vmul.f32 %v2059, %v2066
  %2070 = vrot.lane.b32.xlu0 %v2068, 64
  %v2071 = vpop.permute.xlu0 %2070
  %v2073 = vadd.f32 %v2063, %v2071
  %v2074 = vtanh.pop %v2073
  %2076 = vrot.lane.b32.xlu0 %v2074, 64
  %v2077 = vpop.permute.xlu0 %2076
  %v2079 = vmul.f32 %v2061, %v2077
  %v2081 = vsel %vm404, %v2079, 0
  %2083 = vmatprep.subr.mxu0 0.0
  %2084 = vmatpush1.msra.mxu0 0.0
  %2085 = vmatprep.subr.mxu0 0.0
  %2086 = vmatpush1.msra.mxu0 0.0
  %2087 = vmatprep.subr.mxu0 0.0
  %2088 = vmatpush1.msra.mxu0 0.0
  %2089 = vmatprep.subr.mxu0 0.0
  %2090 = vmatpush1.msra.mxu0 0.0
  %2091 = vmatprep.subr.mxu0 0.0
  %2092 = vmatpush1.msra.mxu0 0.0
  %2093 = vmatprep.subr.mxu0 0.0
  %2094 = vmatpush1.msra.mxu0 0.0
  %2095 = vmatprep.subr.mxu0 0.0
  %2096 = vmatpush1.msra.mxu0 0.0
  %2097 = vmatprep.subr.mxu0 0.0
  %2098 = vmatpush1.msra.mxu0 0.0
  %2099 = vmatprep.subr.mxu0 %v1458
  %2100 = vmatpush1.msra.mxu0 %v1457
  %2101 = vmatprep.subr.mxu0 %v1456
  %2102 = vmatpush1.msra.mxu0 %v1455
  %2103 = vmatprep.subr.mxu0 %v1454
  %2104 = vmatpush1.msra.mxu0 %v1453
  %2105 = vmatprep.subr.mxu0 %v1452
  %2106 = vmatpush1.msra.mxu0 %v1451
  %2107 = vmatprep.subr.mxu0 %v1450
  %2108 = vmatpush1.msra.mxu0 %v1449
  %2109 = vmatprep.subr.mxu0 %v1448
  %2110 = vmatpush1.msra.mxu0 %v1447
  %2111 = vmatprep.subr.mxu0 %v1446
  %2112 = vmatpush1.msra.mxu0 %v1445
  %2113 = vmatprep.subr.mxu0 %v1444
  %2114 = vmatpush1.msra.mxu0 %v1443
  %2115 = vmatprep.subr.mxu0 0.0
  %2116 = vmatpush2.msra.mxu0 0.0
  %2117 = vmatprep.subr.mxu0 0.0
  %2118 = vmatpush2.msra.mxu0 0.0
  %2119 = vmatprep.subr.mxu0 0.0
  %2120 = vmatpush2.msra.mxu0 0.0
  %2121 = vmatprep.subr.mxu0 0.0
  %2122 = vmatpush2.msra.mxu0 0.0
  %2123 = vmatprep.subr.mxu0 0.0
  %2124 = vmatpush2.msra.mxu0 0.0
  %2125 = vmatprep.subr.mxu0 0.0
  %2126 = vmatpush2.msra.mxu0 0.0
  %2127 = vmatprep.subr.mxu0 0.0
  %2128 = vmatpush2.msra.mxu0 0.0
  %2129 = vmatprep.subr.mxu0 0.0
  %2130 = vmatpush2.msra.mxu0 0.0
  %2131 = vmatprep.subr.mxu0 0.0
  %2132 = vmatpush2.msra.mxu0 0.0
  %2133 = vmatprep.subr.mxu0 0.0
  %2134 = vmatpush2.msra.mxu0 0.0
  %2135 = vmatprep.subr.mxu0 0.0
  %2136 = vmatpush2.msra.mxu0 0.0
  %2137 = vmatprep.subr.mxu0 0.0
  %2138 = vmatpush2.msra.mxu0 0.0
  %2139 = vmatprep.subr.mxu0 0.0
  %2140 = vmatpush2.msra.mxu0 0.0
  %2141 = vmatprep.subr.mxu0 0.0
  %2142 = vmatpush2.msra.mxu0 0.0
  %2143 = vmatprep.subr.mxu0 0.0
  %2144 = vmatpush2.msra.mxu0 0.0
  %2145 = vmatprep.subr.mxu0 0.0
  %2146 = vmatpush2.msra.mxu0 0.0
  %2147 = vmatprep.mubr.f32.mxu0 0.0
  %2148 = vmatmul.mubr.f32.gmra.mxu0 %v2081
  %v2149 = vpop.f32.mrf.mxu0
  %v2150 = vadd.f32 %v1439, %v2149
  %v2151 = vpop.f32.mrf.mxu0
  %v2152 = vadd.f32 %v1440, %v2151
  %2153 = vdwg.mxu0
  %v2154 = vxor.u32 %v2150, 2147483648
  %v2155 = vxor.u32 %v2152, 2147483648
  %v2156 = vmul.f32 %v2154, 1.442695
  %v2157 = vpow.pop %v2156
  %v2158 = vmul.f32 %v2155, 1.442695
  %v2159 = vpow.pop %v2158
  %v2160 = vadd.f32 %v2157, 1.0
  %v2161 = vadd.f32 %v2159, 1.0
  %v2162 = vrcp.pop %v2160
  %v2163 = vmul.f32 1.0, %v2162
  %v2164 = vrcp.pop %v2161
  %v2165 = vmul.f32 1.0, %v2164
  %v2166 = vtanh.pop %v2152
  %v2167 = vmul.f32 %v2163, %v2073
  %2169 = vrot.lane.b32.xlu0 %v2166, 64
  %v2170 = vpop.permute.xlu0 %2169
  %v2172 = vmul.f32 %v2163, %v2170
  %2174 = vrot.lane.b32.xlu0 %v2172, 64
  %v2175 = vpop.permute.xlu0 %2174
  %v2177 = vadd.f32 %v2167, %v2175
  %v2178 = vtanh.pop %v2177
  %2180 = vrot.lane.b32.xlu0 %v2178, 64
  %v2181 = vpop.permute.xlu0 %2180
  %v2183 = vmul.f32 %v2165, %v2181
  %v2185 = vsel %vm404, %v2183, 0
  %2187 = vmatprep.subr.mxu0 0.0
  %2188 = vmatpush1.msra.mxu0 0.0
  %2189 = vmatprep.subr.mxu0 0.0
  %2190 = vmatpush1.msra.mxu0 0.0
  %2191 = vmatprep.subr.mxu0 0.0
  %2192 = vmatpush1.msra.mxu0 0.0
  %2193 = vmatprep.subr.mxu0 0.0
  %2194 = vmatpush1.msra.mxu0 0.0
  %2195 = vmatprep.subr.mxu0 0.0
  %2196 = vmatpush1.msra.mxu0 0.0
  %2197 = vmatprep.subr.mxu0 0.0
  %2198 = vmatpush1.msra.mxu0 0.0
  %2199 = vmatprep.subr.mxu0 0.0
  %2200 = vmatpush1.msra.mxu0 0.0
  %2201 = vmatprep.subr.mxu0 0.0
  %2202 = vmatpush1.msra.mxu0 0.0
  %2203 = vmatprep.subr.mxu0 %v1458
  %2204 = vmatpush1.msra.mxu0 %v1457
  %2205 = vmatprep.subr.mxu0 %v1456
  %2206 = vmatpush1.msra.mxu0 %v1455
  %2207 = vmatprep.subr.mxu0 %v1454
  %2208 = vmatpush1.msra.mxu0 %v1453
  %2209 = vmatprep.subr.mxu0 %v1452
  %2210 = vmatpush1.msra.mxu0 %v1451
  %2211 = vmatprep.subr.mxu0 %v1450
  %2212 = vmatpush1.msra.mxu0 %v1449
  %2213 = vmatprep.subr.mxu0 %v1448
  %2214 = vmatpush1.msra.mxu0 %v1447
  %2215 = vmatprep.subr.mxu0 %v1446
  %2216 = vmatpush1.msra.mxu0 %v1445
  %2217 = vmatprep.subr.mxu0 %v1444
  %2218 = vmatpush1.msra.mxu0 %v1443
  %2219 = vmatprep.subr.mxu0 0.0
  %2220 = vmatpush2.msra.mxu0 0.0
  %2221 = vmatprep.subr.mxu0 0.0
  %2222 = vmatpush2.msra.mxu0 0.0
  %2223 = vmatprep.subr.mxu0 0.0
  %2224 = vmatpush2.msra.mxu0 0.0
  %2225 = vmatprep.subr.mxu0 0.0
  %2226 = vmatpush2.msra.mxu0 0.0
  %2227 = vmatprep.subr.mxu0 0.0
  %2228 = vmatpush2.msra.mxu0 0.0
  %2229 = vmatprep.subr.mxu0 0.0
  %2230 = vmatpush2.msra.mxu0 0.0
  %2231 = vmatprep.subr.mxu0 0.0
  %2232 = vmatpush2.msra.mxu0 0.0
  %2233 = vmatprep.subr.mxu0 0.0
  %2234 = vmatpush2.msra.mxu0 0.0
  %2235 = vmatprep.subr.mxu0 0.0
  %2236 = vmatpush2.msra.mxu0 0.0
  %2237 = vmatprep.subr.mxu0 0.0
  %2238 = vmatpush2.msra.mxu0 0.0
  %2239 = vmatprep.subr.mxu0 0.0
  %2240 = vmatpush2.msra.mxu0 0.0
  %2241 = vmatprep.subr.mxu0 0.0
  %2242 = vmatpush2.msra.mxu0 0.0
  %2243 = vmatprep.subr.mxu0 0.0
  %2244 = vmatpush2.msra.mxu0 0.0
  %2245 = vmatprep.subr.mxu0 0.0
  %2246 = vmatpush2.msra.mxu0 0.0
  %2247 = vmatprep.subr.mxu0 0.0
  %2248 = vmatpush2.msra.mxu0 0.0
  %2249 = vmatprep.subr.mxu0 0.0
  %2250 = vmatpush2.msra.mxu0 0.0
  %2251 = vmatprep.mubr.f32.mxu0 0.0
  %2252 = vmatmul.mubr.f32.gmra.mxu0 %v2185
  %v2253 = vpop.f32.mrf.mxu0
  %v2254 = vadd.f32 %v1441, %v2253
  %v2255 = vpop.f32.mrf.mxu0
  %v2256 = vadd.f32 %v1442, %v2255
  %2257 = vdwg.mxu0
  %v2258 = vxor.u32 %v2254, 2147483648
  %v2259 = vxor.u32 %v2256, 2147483648
  %v2260 = vmul.f32 %v2258, 1.442695
  %v2261 = vpow.pop %v2260
  %v2262 = vmul.f32 %v2259, 1.442695
  %v2263 = vpow.pop %v2262
  %v2264 = vadd.f32 %v2261, 1.0
  %v2265 = vadd.f32 %v2263, 1.0
  %v2266 = vrcp.pop %v2264
  %v2267 = vmul.f32 1.0, %v2266
  %v2268 = vrcp.pop %v2265
  %v2269 = vmul.f32 1.0, %v2268
  %v2270 = vtanh.pop %v2256
  %v2271 = vmul.f32 %v2267, %v2177
  %2273 = vrot.lane.b32.xlu0 %v2270, 64
  %v2274 = vpop.permute.xlu0 %2273
  %v2276 = vmul.f32 %v2267, %v2274
  %2278 = vrot.lane.b32.xlu0 %v2276, 64
  %v2279 = vpop.permute.xlu0 %2278
  %v2281 = vadd.f32 %v2271, %v2279
  %v2282 = vtanh.pop %v2281
  %2284 = vrot.lane.b32.xlu0 %v2282, 64
  %v2285 = vpop.permute.xlu0 %2284
  %v2287 = vmul.f32 %v2269, %v2285
  %v2288 = vld [vmem:[%s9] sm:$0xff]
  %v2289 = vld [vmem:[%s9 + $0x8] sm:$0xff]
  %v2290 = vld [vmem:[%s9 + $0x10] sm:$0xff]
  %v2291 = vld [vmem:[%s9 + $0x18] sm:$0xff]
  %v2292 = vld [vmem:[%s9 + $0x20] sm:$0xff]
  %v2293 = vld [vmem:[%s9 + $0x28] sm:$0xff]
  %v2294 = vld [vmem:[%s9 + $0x30] sm:$0xff]
  %v2295 = vld [vmem:[%s9 + $0x38] sm:$0xff]
  %v2296 = vld [vmem:[%s10] sm:$0x1]
  %v2298 = vlaneseq
  %v2299 = vshrl.u32 %v2298, 7
  %v2300 = vsub.s32 0, %v2299
  %v2301 = vrot.slane %v2296, %v2300
  %v2304 = vsel %vm404, %v2287, 0
  %2306 = vmatprep.subr.mxu0 0.0
  %2307 = vmatpush1.msra.mxu0 0.0
  %2308 = vmatprep.subr.mxu0 0.0
  %2309 = vmatpush1.msra.mxu0 0.0
  %2310 = vmatprep.subr.mxu0 0.0
  %2311 = vmatpush1.msra.mxu0 0.0
  %2312 = vmatprep.subr.mxu0 0.0
  %2313 = vmatpush1.msra.mxu0 0.0
  %2314 = vmatprep.subr.mxu0 0.0
  %2315 = vmatpush1.msra.mxu0 0.0
  %2316 = vmatprep.subr.mxu0 0.0
  %2317 = vmatpush1.msra.mxu0 0.0
  %2318 = vmatprep.subr.mxu0 0.0
  %2319 = vmatpush1.msra.mxu0 0.0
  %2320 = vmatprep.subr.mxu0 0.0
  %2321 = vmatpush1.msra.mxu0 0.0
  %2322 = vmatprep.subr.mxu0 0.0
  %2323 = vmatpush1.msra.mxu0 %v2295
  %2324 = vmatprep.subr.mxu0 0.0
  %2325 = vmatpush1.msra.mxu0 %v2294
  %2326 = vmatprep.subr.mxu0 0.0
  %2327 = vmatpush1.msra.mxu0 %v2293
  %2328 = vmatprep.subr.mxu0 0.0
  %2329 = vmatpush1.msra.mxu0 %v2292
  %2330 = vmatprep.subr.mxu0 0.0
  %2331 = vmatpush1.msra.mxu0 %v2291
  %2332 = vmatprep.subr.mxu0 0.0
  %2333 = vmatpush1.msra.mxu0 %v2290
  %2334 = vmatprep.subr.mxu0 0.0
  %2335 = vmatpush1.msra.mxu0 %v2289
  %2336 = vmatprep.subr.mxu0 0.0
  %2337 = vmatpush1.msra.mxu0 %v2288
  %2338 = vmatprep.subr.mxu0 0.0
  %2339 = vmatpush2.msra.mxu0 0.0
  %2340 = vmatprep.subr.mxu0 0.0
  %2341 = vmatpush2.msra.mxu0 0.0
  %2342 = vmatprep.subr.mxu0 0.0
  %2343 = vmatpush2.msra.mxu0 0.0
  %2344 = vmatprep.subr.mxu0 0.0
  %2345 = vmatpush2.msra.mxu0 0.0
  %2346 = vmatprep.subr.mxu0 0.0
  %2347 = vmatpush2.msra.mxu0 0.0
  %2348 = vmatprep.subr.mxu0 0.0
  %2349 = vmatpush2.msra.mxu0 0.0
  %2350 = vmatprep.subr.mxu0 0.0
  %2351 = vmatpush2.msra.mxu0 0.0
  %2352 = vmatprep.subr.mxu0 0.0
  %2353 = vmatpush2.msra.mxu0 0.0
  %2354 = vmatprep.subr.mxu0 0.0
  %2355 = vmatpush2.msra.mxu0 0.0
  %2356 = vmatprep.subr.mxu0 0.0
  %2357 = vmatpush2.msra.mxu0 0.0
  %2358 = vmatprep.subr.mxu0 0.0
  %2359 = vmatpush2.msra.mxu0 0.0
  %2360 = vmatprep.subr.mxu0 0.0
  %2361 = vmatpush2.msra.mxu0 0.0
  %2362 = vmatprep.subr.mxu0 0.0
  %2363 = vmatpush2.msra.mxu0 0.0
  %2364 = vmatprep.subr.mxu0 0.0
  %2365 = vmatpush2.msra.mxu0 0.0
  %2366 = vmatprep.subr.mxu0 0.0
  %2367 = vmatpush2.msra.mxu0 0.0
  %2368 = vmatprep.subr.mxu0 0.0
  %2369 = vmatpush2.msra.mxu0 0.0
  %2370 = vmatprep.mubr.f32.mxu0 0.0
  %2371 = vmatmul.mubr.f32.gmra.mxu0 %v2304
  %v2372 = vpop.f32.mrf.mxu0
  %v2373 = vadd.f32 %v2301, %v2372
  %v2374 = vpop.f32.mrf.mxu0
  %2375 = vdwg.mxu0
  %vm2376 = vcmask 64512
  %v2377 = vsel %vm2376, %v2373, -inf
  %2378 = vmax.xlane.f32.xlu0 %v2377
  %v2379 = vpop.xlane.xlu0 %2378
  %v2380 = vsub.f32 %v2373, %v2379
  %v2381 = vmul.f32 %v2380, 1.442695
  %v2382 = vpow.pop %v2381
  %v2383 = vsel %vm2376, %v2382, 0.0
  %2384 = vadd.xlane.f32.xlu0 %v2383
  %v2385 = vpop.xlane.xlu0 %2384
  %v2386 = vrcp.pop %v2385
  %v2387 = vmul.f32 %v2382, %v2386
  %2388 = vst.msk [vmem:[%s11] sm:$0xff] %vm2376, %v2387
  // Predicated region
  $region46: #{rnn_baseline_forward.1} parent=0 // pred_check
    _
  $region47: #{rnn_baseline_forward.1} parent=0 // pred_check_branch
    %2390 = sbr.rel (0) target = $region49
  $region48: #{rnn_baseline_forward.1} parent=0 // pred_region
    _
  $region49: #{rnn_baseline_forward.1} parent=0 // pred_fallthru
    _
  // Predicated region
  $region50: #{rnn_baseline_forward.1} parent=0 // pred_check
    _
  $region51: #{rnn_baseline_forward.1} parent=0 // pred_check_branch
    %2392 = sbr.rel (0) target = $region53
  $region52: #{rnn_baseline_forward.1} parent=0 // pred_region
    _
  $region53: #{rnn_baseline_forward.1} parent=0 // pred_fallthru
    _

</llo_original>
